<compile_context>
chip_gen: v7x
topology: tpu7x:2x2x1
jax: 0.10.0
libtpu: 0.0.40
codegen_flags: <defaults>
</compile_context>

<pallas_src>
import functools
import math

import jax
import jax.numpy as jnp
from jax.experimental import pallas as pl
from jax.experimental.pallas import tpu as pltpu

# Safe scoped-VMEM budget on v5e / v6e / v7x (v7x only has 64 MiB physical per TC).
VMEM_LIMIT_BYTES = 32 * 1024 * 1024


def _round_up(x, m):
    return ((x + m - 1) // m) * m


# ----------------------------------------------------------------------------
# Kernel 1: tiled matmul  C = act(scale * (A @ B) + bias)
#   bf16 MXU operands, f32 accumulation in VMEM scratch, K-axis reduction grid.
# ----------------------------------------------------------------------------
def _mm_bias_act_kernel(a_ref, b_ref, bias_ref, o_ref, acc_ref, *, act, scale):
    @pl.when(pl.program_id(2) == 0)
    def _init():
        acc_ref[...] = jnp.zeros_like(acc_ref)

    acc_ref[...] += jnp.dot(a_ref[...], b_ref[...], preferred_element_type=jnp.float32)

    @pl.when(pl.program_id(2) == pl.num_programs(2) - 1)
    def _finalize():
        out = acc_ref[...] * scale + bias_ref[...]
        if act == "relu":
            out = jnp.maximum(out, 0.0)
        elif act == "tanh":
            out = jnp.tanh(out)
        elif act == "sigmoid":
            out = jax.nn.sigmoid(out)
        o_ref[...] = out


def matmul_bias_act(a, b, bias=None, act="none", scale=1.0, tm=256, tn=256, tk=256):
    """act(scale * (A @ B) + bias), tiled + pipelined; pads to (8,128)-legal tiles."""
    M, K = a.shape
    K2, N = b.shape
    assert K == K2
    # Tile sizes capped at 256 so double-buffered bf16 inputs + f32 accumulator stay
    # comfortably inside the 32 MiB scoped VMEM budget on every generation (incl. v7x).
    tm = min(tm, _round_up(M, 8))
    tn = min(tn, _round_up(N, 128))
    tk = min(tk, _round_up(K, 128))
    Mp, Np, Kp = _round_up(M, tm), _round_up(N, tn), _round_up(K, tk)

    a_p = jnp.zeros((Mp, Kp), jnp.bfloat16).at[:M, :K].set(a.astype(jnp.bfloat16))
    b_p = jnp.zeros((Kp, Np), jnp.bfloat16).at[:K, :N].set(b.astype(jnp.bfloat16))
    if bias is None:
        bias_p = jnp.zeros((1, Np), jnp.float32)
    else:
        bias_p = jnp.zeros((1, Np), jnp.float32).at[0, :N].set(
            bias.astype(jnp.float32).reshape(N))

    out = pl.pallas_call(
        functools.partial(_mm_bias_act_kernel, act=act, scale=scale),
        out_shape=jax.ShapeDtypeStruct((Mp, Np), jnp.float32),
        grid=(Mp // tm, Np // tn, Kp // tk),
        in_specs=[
            pl.BlockSpec((tm, tk), lambda i, j, k: (i, k)),
            pl.BlockSpec((tk, tn), lambda i, j, k: (k, j)),
            pl.BlockSpec((1, tn), lambda i, j, k: (0, j)),
        ],
        out_specs=pl.BlockSpec((tm, tn), lambda i, j, k: (i, j)),
        scratch_shapes=[pltpu.VMEM((tm, tn), jnp.float32)],
        compiler_params=pltpu.CompilerParams(
            dimension_semantics=("parallel", "parallel", "arbitrary"),
            vmem_limit_bytes=VMEM_LIMIT_BYTES,
        ),
    )(a_p, b_p, bias_p)
    return out[:M, :N]


# ----------------------------------------------------------------------------
# Kernel 2: fully fused update block (motion encoder -> ConvGRU -> flow/mask heads)
#   All intermediates stay in VMEM; weights are pre-packed block-diagonal and padded
#   to 128-lane multiples so every matmul output is lane-dense.
# ----------------------------------------------------------------------------
def _update_block_kernel(net_ref, inp_ref, cf_ref,
                         wme_ref, bme_ref, wmm_ref, bmm_ref, pflow_ref,
                         wzr_ref, bzr_ref, wq_ref, bq_ref,
                         wh1_ref, bh1_ref, whd_ref, bhd_ref,
                         net_out_ref, head_out_ref):
    f32 = jnp.float32
    bf16 = jnp.bfloat16
    h = net_ref[...]          # (tm, 128)
    inp = inp_ref[...]        # (tm, 128)
    cf = cf_ref[...]          # (tm, 128)  = [corr(81) | flow(2) | 0-pad]
    cf_b = cf.astype(bf16)

    # motion encoder: fused block-diagonal [Wc1 | Wf1] -> relu, then Wm padded to 128.
    me = jnp.maximum(
        jnp.dot(cf_b, wme_ref[...], preferred_element_type=f32) + bme_ref[...], 0.0)
    m = jnp.maximum(
        jnp.dot(me.astype(bf16), wmm_ref[...], preferred_element_type=f32)
        + bmm_ref[...], 0.0)
    # place the raw flow into the two zeroed trailing lanes of the motion feature.
    motion = m + jnp.dot(cf_b, pflow_ref[...], preferred_element_type=f32)

    # ConvGRU with fused z/r gate matmul (single lane-dense 256-wide output).
    hx = jnp.concatenate([h, inp, motion], axis=1)                     # (tm, 384)
    zr = jax.nn.sigmoid(
        jnp.dot(hx.astype(bf16), wzr_ref[...], preferred_element_type=f32)
        + bzr_ref[...])
    z = zr[:, :128]
    r = zr[:, 128:]
    rhx = jnp.concatenate([r * h, inp, motion], axis=1)
    q = jnp.tanh(
        jnp.dot(rhx.astype(bf16), wq_ref[...], preferred_element_type=f32)
        + bq_ref[...])
    h_new = (1.0 - z) * h + z * q
    net_out_ref[...] = h_new

    # fused flow + mask heads: [Wfh1 | Wmh1] -> relu -> block-diag [Wfh2 | 0.25*Wmh2].
    h12 = jnp.maximum(
        jnp.dot(h_new.astype(bf16), wh1_ref[...], preferred_element_type=f32)
        + bh1_ref[...], 0.0)                                           # (tm, 512)
    head_out_ref[...] = (
        jnp.dot(h12.astype(bf16), whd_ref[...], preferred_element_type=f32)
        + bhd_ref[...])                                                # (tm, 768)


def pack_update_params(p):
    """Pack the small update-block weights block-diagonally into lane-dense bf16 mats."""
    f32, bf16 = jnp.float32, jnp.bfloat16
    W_me = jnp.zeros((128, 256), f32)
    W_me = W_me.at[:81, :192].set(p["Wc1"])
    W_me = W_me.at[81:83, 192:256].set(p["Wf1"])
    b_me = jnp.concatenate([p["bc1"], p["bf1"]]).reshape(1, 256)

    W_mm = jnp.zeros((256, 128), f32).at[:, :126].set(p["Wm"])
    b_mm = jnp.zeros((1, 128), f32).at[0, :126].set(p["bm"])

    # selector that forwards the raw flow (cols 81:83 of cf) into motion cols 126:128
    P_flow = jnp.zeros((128, 128), f32).at[81, 126].set(1.0).at[82, 127].set(1.0)

    W_zr = jnp.concatenate([p["Wz"], p["Wr"]], axis=1)                 # (384, 256)
    b_zr = jnp.concatenate([p["bz"], p["br"]]).reshape(1, 256)
    W_q = p["Wq"]
    b_q = p["bq"].reshape(1, 128)

    W_h1 = jnp.concatenate([p["Wfh1"], p["Wmh1"]], axis=1)             # (128, 512)
    b_h1 = jnp.concatenate([p["bfh1"], p["bmh1"]]).reshape(1, 512)

    W_hd = jnp.zeros((512, 768), f32)
    W_hd = W_hd.at[:256, :2].set(p["Wfh2"])
    W_hd = W_hd.at[256:, 128:704].set(0.25 * p["Wmh2"])
    b_hd = jnp.zeros((1, 768), f32)
    b_hd = b_hd.at[0, :2].set(p["bfh2"])
    b_hd = b_hd.at[0, 128:704].set(0.25 * p["bmh2"])

    cast = lambda w: w.astype(bf16)
    return {
        "W_me": cast(W_me), "b_me": b_me,
        "W_mm": cast(W_mm), "b_mm": b_mm,
        "P_flow": cast(P_flow),
        "W_zr": cast(W_zr), "b_zr": b_zr,
        "W_q": cast(W_q), "b_q": b_q,
        "W_h1": cast(W_h1), "b_h1": b_h1,
        "W_hd": cast(W_hd), "b_hd": b_hd,
    }


def update_block_fused(packed, net_r, inp_r, corr_feat, flow_r):
    """One pallas_call per refinement step: returns (new_net, delta_flow, up_mask)."""
    M = net_r.shape[0]
    tm = min(256, _round_up(M, 8))
    Mp = _round_up(M, tm)

    def pad_rows(x, width):
        return jnp.zeros((Mp, width), jnp.float32).at[:M, : x.shape[1]].set(
            x.astype(jnp.float32))

    net_p = pad_rows(net_r, 128)
    inp_p = pad_rows(inp_r, 128)
    cf = jnp.zeros((Mp, 128), jnp.float32)
    cf = cf.at[:M, :81].set(corr_feat.astype(jnp.float32))
    cf = cf.at[:M, 81:83].set(flow_r.astype(jnp.float32))

    full = lambda shape: pl.BlockSpec(shape, lambda i: (0, 0))
    row = lambda width: pl.BlockSpec((tm, width), lambda i: (i, 0))

    net_out, head_out = pl.pallas_call(
        _update_block_kernel,
        out_shape=(
            jax.ShapeDtypeStruct((Mp, 128), jnp.float32),
            jax.ShapeDtypeStruct((Mp, 768), jnp.float32),
        ),
        grid=(Mp // tm,),
        in_specs=[
            row(128), row(128), row(128),
            full((128, 256)), full((1, 256)),
            full((256, 128)), full((1, 128)),
            full((128, 128)),
            full((384, 256)), full((1, 256)),
            full((384, 128)), full((1, 128)),
            full((128, 512)), full((1, 512)),
            full((512, 768)), full((1, 768)),
        ],
        out_specs=(row(128), row(768)),
        input_output_aliases={0: 0},   # GRU hidden state updated in place
        compiler_params=pltpu.CompilerParams(
            dimension_semantics=("parallel",),
            vmem_limit_bytes=VMEM_LIMIT_BYTES,
        ),
    )(
        net_p, inp_p, cf,
        packed["W_me"], packed["b_me"], packed["W_mm"], packed["b_mm"], packed["P_flow"],
        packed["W_zr"], packed["b_zr"], packed["W_q"], packed["b_q"],
        packed["W_h1"], packed["b_h1"], packed["W_hd"], packed["b_hd"],
    )
    net_new = net_out[:M]
    delta_flow = head_out[:M, :2]
    up_mask = head_out[:M, 128:704]
    return net_new, delta_flow, up_mask


# ----------------------------------------------------------------------------
# Kernel 3: convex-upsampling softmax + weighted sum (batched over N via the grid)
# ----------------------------------------------------------------------------
def _convex_upsample_kernel(m_ref, u_ref, o_ref):
    m = m_ref[0]                                   # (9, 64, HW) raw mask logits
    m = m - jnp.max(m, axis=0, keepdims=True)
    e = jnp.exp(m)
    inv = pl.reciprocal(jnp.sum(e, axis=0, keepdims=True), approx=True)  # EUP slot
    p = e * inv                                    # softmax over the 9 taps
    u = u_ref[0]                                   # (2, 9, HW) unfolded 8*flow
    o_ref[0, 0] = jnp.sum(p * u[0][:, None, :], axis=0)
    o_ref[0, 1] = jnp.sum(p * u[1][:, None, :], axis=0)


def convex_upsample(m, uf):
    # TODO(synk): at production resolutions flatten so the last dim is a 128-multiple.
    N, _, A, HW = m.shape
    return pl.pallas_call(
        _convex_upsample_kernel,
        out_shape=jax.ShapeDtypeStruct((N, 2, A, HW), jnp.float32),
        grid=(N,),
        in_specs=[
            pl.BlockSpec((1, 9, A, HW), lambda n: (n, 0, 0, 0)),
            pl.BlockSpec((1, 2, 9, HW), lambda n: (n, 0, 0, 0)),
        ],
        out_specs=pl.BlockSpec((1, 2, A, HW), lambda n: (n, 0, 0, 0)),
        compiler_params=pltpu.CompilerParams(
            dimension_semantics=("parallel",),
            vmem_limit_bytes=VMEM_LIMIT_BYTES,
        ),
    )(m.astype(jnp.float32), uf.astype(jnp.float32))


# ----------------------------------------------------------------------------
# Plain-JAX glue (reshapes, gathers, positional table) — faithful to PyTorch
# ----------------------------------------------------------------------------
def get_pos_encoding_table(n_position, d_hid):
    # Reproduces the reference exactly: the loop overwrites the whole table every
    # iteration, so only i = n_position - 1 survives (same row broadcast everywhere).
    j = jnp.arange(d_hid)
    index = (2 * (j // 2)).astype(jnp.float32) / float(d_hid)
    t = float(n_position - 1) / jnp.power(10000.0, index)
    table = jnp.zeros((n_position, d_hid), jnp.float32)
    table = table.at[:, 0::2].set(jnp.sin(t[0::2]))
    table = table.at[:, 1::2].set(jnp.cos(t[1::2]))
    return table[None]  # (1, n_position, d_hid)


def coords_grid(batch, ht, wd):
    ys, xs = jnp.meshgrid(jnp.arange(ht), jnp.arange(wd), indexing="ij")
    coords = jnp.stack([xs, ys], axis=0).astype(jnp.float32)  # ch0 = x, ch1 = y
    return jnp.tile(coords[None], (batch, 1, 1, 1))


def bilinear_sample(img, x, y):
    """img: (C, H, W); x, y: float coords (any shape); zero padding outside."""
    C, H, W = img.shape
    x0 = jnp.floor(x)
    y0 = jnp.floor(y)
    x1 = x0 + 1.0
    y1 = y0 + 1.0
    wx1 = x - x0
    wx0 = 1.0 - wx1
    wy1 = y - y0
    wy0 = 1.0 - wy1

    def gather(xi, yi):
        valid = (xi >= 0) & (xi <= W - 1) & (yi >= 0) & (yi <= H - 1)
        xi_c = jnp.clip(xi, 0, W - 1).astype(jnp.int32)
        yi_c = jnp.clip(yi, 0, H - 1).astype(jnp.int32)
        v = img[:, yi_c, xi_c]
        return v * valid[None].astype(img.dtype)

    return (
        gather(x0, y0) * (wx0 * wy0)[None]
        + gather(x1, y0) * (wx1 * wy0)[None]
        + gather(x0, y1) * (wx0 * wy1)[None]
        + gather(x1, y1) * (wx1 * wy1)[None]
    )


def apply_warp_by_field(image, flow):
    # TODO(synk): apply_warp_by_field source not provided; standard backward bilinear
    # warp (grid_sample-style, zero padding), batched with vmap (no per-image loop).
    N, C, H, W = image.shape
    ys, xs = jnp.meshgrid(
        jnp.arange(H, dtype=jnp.float32), jnp.arange(W, dtype=jnp.float32), indexing="ij"
    )

    def warp_one(img, fl):
        return bilinear_sample(img, xs + fl[0], ys + fl[1])

    return jax.vmap(warp_one)(image, flow)


def patchify(x, p=8):
    N, C, H, W = x.shape
    x = x.reshape(N, C, H // p, p, W // p, p)
    x = x.transpose(0, 2, 4, 1, 3, 5)
    return x.reshape(N, (H // p) * (W // p), C * p * p)


def unfold3x3(x):
    # F.unfold(x, [3,3], padding=1) reshaped to (N, C, 9, H, W), k = ki*3 + kj
    N, C, H, W = x.shape
    xp = jnp.pad(x, ((0, 0), (0, 0), (1, 1), (1, 1)))
    patches = [xp[:, :, ki : ki + H, kj : kj + W] for ki in range(3) for kj in range(3)]
    return jnp.stack(patches, axis=2)


def fnet(x, Wf, bf_):
    # TODO(synk): BasicEncoder (residual conv stack + instance norm) source not
    # provided; approximated by an 8x-downsampling 8x8-patch linear projection + relu.
    # Batch is folded into M so ALL images go through ONE tiled Pallas matmul.
    N, C, H, W = x.shape
    Hs, Ws = H // 8, W // 8
    patches = patchify(x).reshape(N * Hs * Ws, C * 64)
    feats = matmul_bias_act(patches, Wf, bf_, act="relu")   # (N*HW, 256)
    return feats.reshape(N, Hs * Ws, -1)                    # channels-last, no transpose


def corr_volume(f1_pc, f2_pc, Hs, Ws):
    # all-pairs correlation, scaled by 1/sqrt(C)  (tiled Pallas matmul)
    HW, Cc = f1_pc.shape
    corr = matmul_bias_act(f1_pc, f2_pc.T, None, act="none",
                           scale=1.0 / math.sqrt(float(Cc)))
    return corr.reshape(HW, Hs, Ws)


def corr_lookup(corr_vol, coords, radius):
    # TODO(synk): CorrBlock source not provided; single-level (2r+1)^2 bilinear lookup
    # kept in plain JAX (data-dependent gather).
    HW1, H2, W2 = corr_vol.shape
    r = radius
    d = jnp.arange(-r, r + 1, dtype=jnp.float32)
    dy, dx = jnp.meshgrid(d, d, indexing="ij")
    cx = coords[0].reshape(HW1, 1, 1) + dx[None]
    cy = coords[1].reshape(HW1, 1, 1) + dy[None]

    def sample_one(vol_p, cx_p, cy_p):
        return bilinear_sample(vol_p[None], cx_p, cy_p)[0]

    out = jax.vmap(sample_one)(corr_vol, cx, cy)  # (HW1, 2r+1, 2r+1)
    return out.reshape(HW1, (2 * r + 1) ** 2)


def upsample_flow(flow, up_mask_pc, Hs, Ws):
    """Convex-combination upsample [H/8,W/8,2] -> [H,W,2] (softmax+sum in Pallas)."""
    N = flow.shape[0]
    HW = Hs * Ws
    uf = unfold3x3(8.0 * flow).reshape(N, 2, 9, HW)                  # (N,2,9,HW)
    m = up_mask_pc.reshape(N, HW, 9, 64).transpose(0, 2, 3, 1)       # (N,9,64,HW)
    out = convex_upsample(m, uf)                                     # (N,2,64,HW)
    out = out.reshape(N, 2, 8, 8, Hs, Ws)                            # (N,2,a,b,H,W)
    out = out.transpose(0, 1, 4, 2, 5, 3)                            # (N,2,H,a,W,b)
    return out.reshape(N, 2, 8 * Hs, 8 * Ws)


# ----------------------------------------------------------------------------
# Full forward
# ----------------------------------------------------------------------------
def mask_raft_forward(params, source_image, source_mask, target_mask, refine_time=2):
    N, C, H, W = source_mask.shape
    Hs, Ws = H // 8, W // 8
    HW = Hs * Ws
    hidden_dim = 128

    packed = pack_update_params(params)

    # Feature encoder: both inputs in one tiled matmul (batch folded into M).
    both = jnp.concatenate([source_mask, target_mask], axis=0)       # (2N, C, H, W)
    fmaps = fnet(both, params["Wfnet"], params["bfnet"])             # (2N, HW, 256)
    pos = get_pos_encoding_table(HW, fmaps.shape[-1])[0]             # (HW, 256)
    fmaps = fmaps + pos[None]
    fmap1 = fmaps[:N]
    fmap2 = fmaps[N:]

    # hidden / context state, kept channels-last (no transposes)
    net_r = jnp.tanh(fmap2[0, :, :hidden_dim])                       # (HW, 128)
    inp_r = jax.nn.relu(fmap2[0, :, hidden_dim:])                    # (HW, 128)

    coords0 = coords_grid(N, Hs, Ws)
    coords1 = coords_grid(N, Hs, Ws)

    # N == 1 for the per-batch refine path below
    corr_vol = corr_volume(fmap1[0], fmap2[0], Hs, Ws)               # (HW, Hs, Ws)

    flow_predictions = []
    for _ in range(refine_time):
        corr_feat = corr_lookup(corr_vol, coords1[0], radius=4)      # (HW, 81)
        flow = coords1 - coords0
        flow_r = flow[0].reshape(2, HW).T                            # (HW, 2)
        net_r, delta_flow, up_mask = update_block_fused(
            packed, net_r, inp_r, corr_feat, flow_r)
        coords1 = coords1 + delta_flow.T.reshape(1, 2, Hs, Ws)
        flow_up = upsample_flow(coords1 - coords0, up_mask[None], Hs, Ws)  # (N,2,H,W)
        flow_predictions.append(flow_up)

    warped = []
    for flow_up in flow_predictions:
        warped.append(apply_warp_by_field(source_image, flow_up))
    for flow_up in flow_predictions:
        warped.append(apply_warp_by_field(source_mask, flow_up))
    warped_source_images = warped[:refine_time]
    warped_source_masks = warped[refine_time:]

    return jnp.concatenate(
        [source_mask, target_mask]
        + warped_source_masks
        + [source_image, target_mask]
        + warped_source_images,
        axis=0,
    )


# ----------------------------------------------------------------------------
# Deterministic parameter construction
# ----------------------------------------------------------------------------
def make_params(key, in_ch=3):
    dims = {
        "Wfnet": (in_ch * 64, 256),
        "Wc1": (81, 192),
        "Wf1": (2, 64),
        "Wm": (256, 126),
        "Wz": (384, 128),
        "Wr": (384, 128),
        "Wq": (384, 128),
        "Wfh1": (128, 256),
        "Wfh2": (256, 2),
        "Wmh1": (128, 256),
        "Wmh2": (256, 576),
    }
    params = {}
    keys = jax.random.split(key, len(dims))
    for (name, shape), k in zip(dims.items(), keys):
        fan_in = shape[0]
        params[name] = (jax.random.normal(k, shape, jnp.float32) / math.sqrt(fan_in)) * 0.5
        params["b" + name[1:]] = jnp.zeros((shape[1],), jnp.float32)
    return params


# ----------------------------------------------------------------------------
if __name__ == "__main__":
    key = jax.random.PRNGKey(0)
    k1, k2, k3 = jax.random.split(key, 3)
    # small shapes: N=1, C=3, H=W=32  -> 1/8 resolution feature grid is 4x4
    source_image = jax.random.uniform(k1, (1, 3, 32, 32), jnp.float32)
    source_mask = jax.random.uniform(k2, (1, 3, 32, 32), jnp.float32)
    target_mask = jax.random.uniform(k3, (1, 3, 32, 32), jnp.float32)

    params = make_params(jax.random.PRNGKey(42), in_ch=3)

    fwd = jax.jit(functools.partial(mask_raft_forward, refine_time=2))
    out = fwd(params, source_image, source_mask, target_mask)
    out = jax.block_until_ready(out)

    assert out.shape == (2 * 2 + 4, 3, 32, 32), out.shape
    assert bool(jnp.all(jnp.isfinite(out)))
    print("KERNEL_OK")
</pallas_src>

<mosaic_0001>
module attributes {stable_mosaic.version = 11 : i64} {
  func.func @_mm_bias_act_kernel(%arg0: i32, %arg1: i32, %arg2: i32, %arg3: memref<32x256xbf16, #tpu.memory_space<vmem>>, %arg4: memref<256x256xbf16, #tpu.memory_space<vmem>>, %arg5: memref<1x256xf32, #tpu.memory_space<vmem>>, %arg6: memref<32x256xf32, #tpu.memory_space<vmem>>, %arg7: memref<32x256xf32, #tpu.memory_space<vmem>>) attributes {dimension_semantics = [#tpu.dimension_semantics<parallel>, #tpu.dimension_semantics<parallel>, #tpu.dimension_semantics<arbitrary>], iteration_bounds = array<i64: 1, 1, 1>, scalar_prefetch = 0 : i64, scratch_operands = 1 : i64, tpu.core_type = #tpu.core_type<tc>, window_params = [{transform_indices = @transform_0, window_bounds = array<i64: 32, 256>}, {transform_indices = @transform_1, window_bounds = array<i64: 256, 256>}, {transform_indices = @transform_2, window_bounds = array<i64: 1, 256>}, {transform_indices = @transform_3, window_bounds = array<i64: 32, 256>}]} {
    %c0_i32 = arith.constant 0 : i32
    %0 = arith.cmpi eq, %arg2, %c0_i32 : i32
    %1 = arith.extui %0 : i1 to i32
    %c0_i32_0 = arith.constant 0 : i32
    %2 = arith.cmpi ne, %1, %c0_i32_0 : i32
    scf.if %2 {
      %cst_10 = arith.constant 0.000000e+00 : f32
      %12 = vector.broadcast %cst_10 : f32 to vector<32x256xf32>
      %c0_11 = arith.constant 0 : index
      %c0_12 = arith.constant 0 : index
      %13 = vector.load %arg7[%c0_11, %c0_12] : memref<32x256xf32, #tpu.memory_space<vmem>>, vector<32x256xf32>
      tpu.vector_store %arg7[%c0_11, %c0_12], %12 {strides = array<i32>} : memref<32x256xf32, #tpu.memory_space<vmem>>, vector<32x256xf32>,
    } else {
    }
    %c0 = arith.constant 0 : index
    %c0_1 = arith.constant 0 : index
    %3 = vector.load %arg7[%c0, %c0_1] : memref<32x256xf32, #tpu.memory_space<vmem>>, vector<32x256xf32>
    %c0_2 = arith.constant 0 : index
    %c0_3 = arith.constant 0 : index
    %4 = vector.load %arg3[%c0_2, %c0_3] : memref<32x256xbf16, #tpu.memory_space<vmem>>, vector<32x256xbf16>
    %c0_4 = arith.constant 0 : index
    %c0_5 = arith.constant 0 : index
    %5 = vector.load %arg4[%c0_4, %c0_5] : memref<256x256xbf16, #tpu.memory_space<vmem>>, vector<256x256xbf16>
    %cst = arith.constant dense<0.000000e+00> : vector<32x256xf32>
    %6 = tpu.matmul %4, %5, %cst {dimension_numbers = #tpu.dot_dimension_numbers<[1], [0], [0], [1], [0, 0, 1, 1], [], []>} : vector<32x256xbf16>, vector<256x256xbf16>, vector<32x256xf32> -> vector<32x256xf32>
    %7 = arith.addf %3, %6 : vector<32x256xf32>
    %c0_6 = arith.constant 0 : index
    %c0_7 = arith.constant 0 : index
    %8 = vector.load %arg7[%c0_6, %c0_7] : memref<32x256xf32, #tpu.memory_space<vmem>>, vector<32x256xf32>
    tpu.vector_store %arg7[%c0_6, %c0_7], %7 {strides = array<i32>} : memref<32x256xf32, #tpu.memory_space<vmem>>, vector<32x256xf32>,
    %c0_i32_8 = arith.constant 0 : i32
    %9 = arith.cmpi eq, %arg2, %c0_i32_8 : i32
    %10 = arith.extui %9 : i1 to i32
    %c0_i32_9 = arith.constant 0 : i32
    %11 = arith.cmpi ne, %10, %c0_i32_9 : i32
    scf.if %11 {
      %c0_10 = arith.constant 0 : index
      %c0_11 = arith.constant 0 : index
      %12 = vector.load %arg7[%c0_10, %c0_11] : memref<32x256xf32, #tpu.memory_space<vmem>>, vector<32x256xf32>
      %cst_12 = arith.constant 1.000000e+00 : f32
      %13 = vector.broadcast %cst_12 : f32 to vector<32x256xf32>
      %14 = arith.mulf %12, %13 : vector<32x256xf32>
      %c0_13 = arith.constant 0 : index
      %c0_14 = arith.constant 0 : index
      %15 = vector.load %arg5[%c0_13, %c0_14] : memref<1x256xf32, #tpu.memory_space<vmem>>, vector<1x256xf32>
      %16 = vector.broadcast %15 : vector<1x256xf32> to vector<32x256xf32>
      %17 = arith.addf %14, %16 : vector<32x256xf32>
      %cst_15 = arith.constant 0.000000e+00 : f32
      %18 = vector.broadcast %cst_15 : f32 to vector<32x256xf32>
      %19 = arith.maximumf %17, %18 : vector<32x256xf32>
      %c0_16 = arith.constant 0 : index
      %c0_17 = arith.constant 0 : index
      %20 = vector.load %arg6[%c0_16, %c0_17] : memref<32x256xf32, #tpu.memory_space<vmem>>, vector<32x256xf32>
      tpu.vector_store %arg6[%c0_16, %c0_17], %19 {strides = array<i32>} : memref<32x256xf32, #tpu.memory_space<vmem>>, vector<32x256xf32>,
    } else {
    }
    return
  }
  func.func @transform_0(%arg0: i32, %arg1: i32, %arg2: i32) -> (i32, i32) {
    %c0_i32 = arith.constant 0 : i32
    return %arg0, %arg2 : i32, i32
  }
  func.func @transform_1(%arg0: i32, %arg1: i32, %arg2: i32) -> (i32, i32) {
    %c0_i32 = arith.constant 0 : i32
    return %arg2, %arg1 : i32, i32
  }
  func.func @transform_2(%arg0: i32, %arg1: i32, %arg2: i32) -> (i32, i32) {
    %c0_i32 = arith.constant 0 : i32
    %c0_i32_0 = arith.constant 0 : i32
    return %c0_i32, %arg1 : i32, i32
  }
  func.func @transform_3(%arg0: i32, %arg1: i32, %arg2: i32) -> (i32, i32) {
    %c0_i32 = arith.constant 0 : i32
    return %arg0, %arg1 : i32, i32
  }
}

module attributes {stable_mosaic.version = 11 : i64} {
  func.func @_mm_bias_act_kernel(%arg0: i32, %arg1: i32, %arg2: i32, %arg3: memref<16x256xbf16, #tpu.memory_space<vmem>>, %arg4: memref<256x128xbf16, #tpu.memory_space<vmem>>, %arg5: memref<1x128xf32, #tpu.memory_space<vmem>>, %arg6: memref<16x128xf32, #tpu.memory_space<vmem>>, %arg7: memref<16x128xf32, #tpu.memory_space<vmem>>) attributes {dimension_semantics = [#tpu.dimension_semantics<parallel>, #tpu.dimension_semantics<parallel>, #tpu.dimension_semantics<arbitrary>], iteration_bounds = array<i64: 1, 1, 1>, scalar_prefetch = 0 : i64, scratch_operands = 1 : i64, tpu.core_type = #tpu.core_type<tc>, window_params = [{transform_indices = @transform_0, window_bounds = array<i64: 16, 256>}, {transform_indices = @transform_1, window_bounds = array<i64: 256, 128>}, {transform_indices = @transform_2, window_bounds = array<i64: 1, 128>}, {transform_indices = @transform_3, window_bounds = array<i64: 16, 128>}]} {
    %c0_i32 = arith.constant 0 : i32
    %0 = arith.cmpi eq, %arg2, %c0_i32 : i32
    %1 = arith.extui %0 : i1 to i32
    %c0_i32_0 = arith.constant 0 : i32
    %2 = arith.cmpi ne, %1, %c0_i32_0 : i32
    scf.if %2 {
      %cst_10 = arith.constant 0.000000e+00 : f32
      %12 = vector.broadcast %cst_10 : f32 to vector<16x128xf32>
      %c0_11 = arith.constant 0 : index
      %c0_12 = arith.constant 0 : index
      %13 = vector.load %arg7[%c0_11, %c0_12] : memref<16x128xf32, #tpu.memory_space<vmem>>, vector<16x128xf32>
      tpu.vector_store %arg7[%c0_11, %c0_12], %12 {strides = array<i32>} : memref<16x128xf32, #tpu.memory_space<vmem>>, vector<16x128xf32>,
    } else {
    }
    %c0 = arith.constant 0 : index
    %c0_1 = arith.constant 0 : index
    %3 = vector.load %arg7[%c0, %c0_1] : memref<16x128xf32, #tpu.memory_space<vmem>>, vector<16x128xf32>
    %c0_2 = arith.constant 0 : index
    %c0_3 = arith.constant 0 : index
    %4 = vector.load %arg3[%c0_2, %c0_3] : memref<16x256xbf16, #tpu.memory_space<vmem>>, vector<16x256xbf16>
    %c0_4 = arith.constant 0 : index
    %c0_5 = arith.constant 0 : index
    %5 = vector.load %arg4[%c0_4, %c0_5] : memref<256x128xbf16, #tpu.memory_space<vmem>>, vector<256x128xbf16>
    %cst = arith.constant dense<0.000000e+00> : vector<16x128xf32>
    %6 = tpu.matmul %4, %5, %cst {dimension_numbers = #tpu.dot_dimension_numbers<[1], [0], [0], [1], [0, 0, 1, 1], [], []>} : vector<16x256xbf16>, vector<256x128xbf16>, vector<16x128xf32> -> vector<16x128xf32>
    %7 = arith.addf %3, %6 : vector<16x128xf32>
    %c0_6 = arith.constant 0 : index
    %c0_7 = arith.constant 0 : index
    %8 = vector.load %arg7[%c0_6, %c0_7] : memref<16x128xf32, #tpu.memory_space<vmem>>, vector<16x128xf32>
    tpu.vector_store %arg7[%c0_6, %c0_7], %7 {strides = array<i32>} : memref<16x128xf32, #tpu.memory_space<vmem>>, vector<16x128xf32>,
    %c0_i32_8 = arith.constant 0 : i32
    %9 = arith.cmpi eq, %arg2, %c0_i32_8 : i32
    %10 = arith.extui %9 : i1 to i32
    %c0_i32_9 = arith.constant 0 : i32
    %11 = arith.cmpi ne, %10, %c0_i32_9 : i32
    scf.if %11 {
      %c0_10 = arith.constant 0 : index
      %c0_11 = arith.constant 0 : index
      %12 = vector.load %arg7[%c0_10, %c0_11] : memref<16x128xf32, #tpu.memory_space<vmem>>, vector<16x128xf32>
      %cst_12 = arith.constant 6.250000e-02 : f32
      %13 = vector.broadcast %cst_12 : f32 to vector<16x128xf32>
      %14 = arith.mulf %12, %13 : vector<16x128xf32>
      %c0_13 = arith.constant 0 : index
      %c0_14 = arith.constant 0 : index
      %15 = vector.load %arg5[%c0_13, %c0_14] : memref<1x128xf32, #tpu.memory_space<vmem>>, vector<1x128xf32>
      %16 = vector.broadcast %15 : vector<1x128xf32> to vector<16x128xf32>
      %17 = arith.addf %14, %16 : vector<16x128xf32>
      %c0_15 = arith.constant 0 : index
      %c0_16 = arith.constant 0 : index
      %18 = vector.load %arg6[%c0_15, %c0_16] : memref<16x128xf32, #tpu.memory_space<vmem>>, vector<16x128xf32>
      tpu.vector_store %arg6[%c0_15, %c0_16], %17 {strides = array<i32>} : memref<16x128xf32, #tpu.memory_space<vmem>>, vector<16x128xf32>,
    } else {
    }
    return
  }
  func.func @transform_0(%arg0: i32, %arg1: i32, %arg2: i32) -> (i32, i32) {
    %c0_i32 = arith.constant 0 : i32
    return %arg0, %arg2 : i32, i32
  }
  func.func @transform_1(%arg0: i32, %arg1: i32, %arg2: i32) -> (i32, i32) {
    %c0_i32 = arith.constant 0 : i32
    return %arg2, %arg1 : i32, i32
  }
  func.func @transform_2(%arg0: i32, %arg1: i32, %arg2: i32) -> (i32, i32) {
    %c0_i32 = arith.constant 0 : i32
    %c0_i32_0 = arith.constant 0 : i32
    return %c0_i32, %arg1 : i32, i32
  }
  func.func @transform_3(%arg0: i32, %arg1: i32, %arg2: i32) -> (i32, i32) {
    %c0_i32 = arith.constant 0 : i32
    return %arg0, %arg1 : i32, i32
  }
}

module attributes {stable_mosaic.version = 11 : i64} {
  func.func @_update_block_kernel(%arg0: i32, %arg1: memref<16x128xf32, #tpu.memory_space<vmem>>, %arg2: memref<16x128xf32, #tpu.memory_space<vmem>>, %arg3: memref<16x128xf32, #tpu.memory_space<vmem>>, %arg4: memref<128x256xbf16, #tpu.memory_space<vmem>>, %arg5: memref<1x256xf32, #tpu.memory_space<vmem>>, %arg6: memref<256x128xbf16, #tpu.memory_space<vmem>>, %arg7: memref<1x128xf32, #tpu.memory_space<vmem>>, %arg8: memref<128x128xbf16, #tpu.memory_space<vmem>>, %arg9: memref<384x256xbf16, #tpu.memory_space<vmem>>, %arg10: memref<1x256xf32, #tpu.memory_space<vmem>>, %arg11: memref<384x128xbf16, #tpu.memory_space<vmem>>, %arg12: memref<1x128xf32, #tpu.memory_space<vmem>>, %arg13: memref<128x512xbf16, #tpu.memory_space<vmem>>, %arg14: memref<1x512xf32, #tpu.memory_space<vmem>>, %arg15: memref<512x768xbf16, #tpu.memory_space<vmem>>, %arg16: memref<1x768xf32, #tpu.memory_space<vmem>>, %arg17: memref<16x128xf32, #tpu.memory_space<vmem>>, %arg18: memref<16x768xf32, #tpu.memory_space<vmem>>) attributes {dimension_semantics = [#tpu.dimension_semantics<parallel>], iteration_bounds = array<i64: 1>, scalar_prefetch = 0 : i64, scratch_operands = 0 : i64, tpu.core_type = #tpu.core_type<tc>, window_params = [{transform_indices = @transform_0, window_bounds = array<i64: 16, 128>}, {transform_indices = @transform_1, window_bounds = array<i64: 16, 128>}, {transform_indices = @transform_2, window_bounds = array<i64: 16, 128>}, {pipeline_mode = #tpu.pipeline_mode<synchronous>, transform_indices = @transform_3, window_bounds = array<i64: 128, 256>}, {pipeline_mode = #tpu.pipeline_mode<synchronous>, transform_indices = @transform_4, window_bounds = array<i64: 1, 256>}, {pipeline_mode = #tpu.pipeline_mode<synchronous>, transform_indices = @transform_5, window_bounds = array<i64: 256, 128>}, {pipeline_mode = #tpu.pipeline_mode<synchronous>, transform_indices = @transform_6, window_bounds = array<i64: 1, 128>}, {pipeline_mode = #tpu.pipeline_mode<synchronous>, transform_indices = @transform_7, window_bounds = array<i64: 128, 128>}, {pipeline_mode = #tpu.pipeline_mode<synchronous>, transform_indices = @transform_8, window_bounds = array<i64: 384, 256>}, {pipeline_mode = #tpu.pipeline_mode<synchronous>, transform_indices = @transform_9, window_bounds = array<i64: 1, 256>}, {pipeline_mode = #tpu.pipeline_mode<synchronous>, transform_indices = @transform_10, window_bounds = array<i64: 384, 128>}, {pipeline_mode = #tpu.pipeline_mode<synchronous>, transform_indices = @transform_11, window_bounds = array<i64: 1, 128>}, {pipeline_mode = #tpu.pipeline_mode<synchronous>, transform_indices = @transform_12, window_bounds = array<i64: 128, 512>}, {pipeline_mode = #tpu.pipeline_mode<synchronous>, transform_indices = @transform_13, window_bounds = array<i64: 1, 512>}, {pipeline_mode = #tpu.pipeline_mode<synchronous>, transform_indices = @transform_14, window_bounds = array<i64: 512, 768>}, {pipeline_mode = #tpu.pipeline_mode<synchronous>, transform_indices = @transform_15, window_bounds = array<i64: 1, 768>}, {transform_indices = @transform_16, window_bounds = array<i64: 16, 128>}, {transform_indices = @transform_17, window_bounds = array<i64: 16, 768>}]} {
    %c0 = arith.constant 0 : index
    %c0_0 = arith.constant 0 : index
    %0 = vector.load %arg1[%c0, %c0_0] : memref<16x128xf32, #tpu.memory_space<vmem>>, vector<16x128xf32>
    %c0_1 = arith.constant 0 : index
    %c0_2 = arith.constant 0 : index
    %1 = vector.load %arg2[%c0_1, %c0_2] : memref<16x128xf32, #tpu.memory_space<vmem>>, vector<16x128xf32>
    %c0_3 = arith.constant 0 : index
    %c0_4 = arith.constant 0 : index
    %2 = vector.load %arg3[%c0_3, %c0_4] : memref<16x128xf32, #tpu.memory_space<vmem>>, vector<16x128xf32>
    %3 = arith.truncf %2 : vector<16x128xf32> to vector<16x128xbf16>
    %c0_5 = arith.constant 0 : index
    %c0_6 = arith.constant 0 : index
    %4 = vector.load %arg4[%c0_5, %c0_6] : memref<128x256xbf16, #tpu.memory_space<vmem>>, vector<128x256xbf16>
    %cst = arith.constant dense<0.000000e+00> : vector<16x256xf32>
    %5 = tpu.matmul %3, %4, %cst {dimension_numbers = #tpu.dot_dimension_numbers<[1], [0], [0], [1], [0, 0, 1, 1], [], []>} : vector<16x128xbf16>, vector<128x256xbf16>, vector<16x256xf32> -> vector<16x256xf32>
    %c0_7 = arith.constant 0 : index
    %c0_8 = arith.constant 0 : index
    %6 = vector.load %arg5[%c0_7, %c0_8] : memref<1x256xf32, #tpu.memory_space<vmem>>, vector<1x256xf32>
    %7 = vector.broadcast %6 : vector<1x256xf32> to vector<16x256xf32>
    %8 = arith.addf %5, %7 : vector<16x256xf32>
    %cst_9 = arith.constant 0.000000e+00 : f32
    %9 = vector.broadcast %cst_9 : f32 to vector<16x256xf32>
    %10 = arith.maximumf %8, %9 : vector<16x256xf32>
    %11 = arith.truncf %10 : vector<16x256xf32> to vector<16x256xbf16>
    %c0_10 = arith.constant 0 : index
    %c0_11 = arith.constant 0 : index
    %12 = vector.load %arg6[%c0_10, %c0_11] : memref<256x128xbf16, #tpu.memory_space<vmem>>, vector<256x128xbf16>
    %cst_12 = arith.constant dense<0.000000e+00> : vector<16x128xf32>
    %13 = tpu.matmul %11, %12, %cst_12 {dimension_numbers = #tpu.dot_dimension_numbers<[1], [0], [0], [1], [0, 0, 1, 1], [], []>} : vector<16x256xbf16>, vector<256x128xbf16>, vector<16x128xf32> -> vector<16x128xf32>
    %c0_13 = arith.constant 0 : index
    %c0_14 = arith.constant 0 : index
    %14 = vector.load %arg7[%c0_13, %c0_14] : memref<1x128xf32, #tpu.memory_space<vmem>>, vector<1x128xf32>
    %15 = vector.broadcast %14 : vector<1x128xf32> to vector<16x128xf32>
    %16 = arith.addf %13, %15 : vector<16x128xf32>
    %cst_15 = arith.constant 0.000000e+00 : f32
    %17 = vector.broadcast %cst_15 : f32 to vector<16x128xf32>
    %18 = arith.maximumf %16, %17 : vector<16x128xf32>
    %c0_16 = arith.constant 0 : index
    %c0_17 = arith.constant 0 : index
    %19 = vector.load %arg8[%c0_16, %c0_17] : memref<128x128xbf16, #tpu.memory_space<vmem>>, vector<128x128xbf16>
    %cst_18 = arith.constant dense<0.000000e+00> : vector<16x128xf32>
    %20 = tpu.matmul %3, %19, %cst_18 {dimension_numbers = #tpu.dot_dimension_numbers<[1], [0], [0], [1], [0, 0, 1, 1], [], []>} : vector<16x128xbf16>, vector<128x128xbf16>, vector<16x128xf32> -> vector<16x128xf32>
    %21 = arith.addf %18, %20 : vector<16x128xf32>
    %22 = tpu.concatenate %0, %1, %21 in 1 : vector<16x128xf32>, vector<16x128xf32>, vector<16x128xf32> -> vector<16x384xf32>
    %23 = arith.truncf %22 : vector<16x384xf32> to vector<16x384xbf16>
    %c0_19 = arith.constant 0 : index
    %c0_20 = arith.constant 0 : index
    %24 = vector.load %arg9[%c0_19, %c0_20] : memref<384x256xbf16, #tpu.memory_space<vmem>>, vector<384x256xbf16>
    %cst_21 = arith.constant dense<0.000000e+00> : vector<16x256xf32>
    %25 = tpu.matmul %23, %24, %cst_21 {dimension_numbers = #tpu.dot_dimension_numbers<[1], [0], [0], [1], [0, 0, 1, 1], [], []>} : vector<16x384xbf16>, vector<384x256xbf16>, vector<16x256xf32> -> vector<16x256xf32>
    %c0_22 = arith.constant 0 : index
    %c0_23 = arith.constant 0 : index
    %26 = vector.load %arg10[%c0_22, %c0_23] : memref<1x256xf32, #tpu.memory_space<vmem>>, vector<1x256xf32>
    %27 = vector.broadcast %26 : vector<1x256xf32> to vector<16x256xf32>
    %28 = arith.addf %25, %27 : vector<16x256xf32>
    %29 = arith.negf %28 : vector<16x256xf32>
    %30 = math.exp %29 : vector<16x256xf32>
    %cst_24 = arith.constant 1.000000e+00 : f32
    %31 = vector.broadcast %cst_24 : f32 to vector<16x256xf32>
    %32 = arith.addf %31, %30 : vector<16x256xf32>
    %33 = arith.divf %31, %32 : vector<16x256xf32>
    %34 = vector.extract_strided_slice %33 {offsets = [0, 0], sizes = [16, 128], strides = [1, 1]} : vector<16x256xf32> to vector<16x128xf32>
    %35 = vector.extract_strided_slice %33 {offsets = [0, 128], sizes = [16, 128], strides = [1, 1]} : vector<16x256xf32> to vector<16x128xf32>
    %36 = arith.mulf %35, %0 : vector<16x128xf32>
    %37 = tpu.concatenate %36, %1, %21 in 1 : vector<16x128xf32>, vector<16x128xf32>, vector<16x128xf32> -> vector<16x384xf32>
    %38 = arith.truncf %37 : vector<16x384xf32> to vector<16x384xbf16>
    %c0_25 = arith.constant 0 : index
    %c0_26 = arith.constant 0 : index
    %39 = vector.load %arg11[%c0_25, %c0_26] : memref<384x128xbf16, #tpu.memory_space<vmem>>, vector<384x128xbf16>
    %cst_27 = arith.constant dense<0.000000e+00> : vector<16x128xf32>
    %40 = tpu.matmul %38, %39, %cst_27 {dimension_numbers = #tpu.dot_dimension_numbers<[1], [0], [0], [1], [0, 0, 1, 1], [], []>} : vector<16x384xbf16>, vector<384x128xbf16>, vector<16x128xf32> -> vector<16x128xf32>
    %c0_28 = arith.constant 0 : index
    %c0_29 = arith.constant 0 : index
    %41 = vector.load %arg12[%c0_28, %c0_29] : memref<1x128xf32, #tpu.memory_space<vmem>>, vector<1x128xf32>
    %42 = vector.broadcast %41 : vector<1x128xf32> to vector<16x128xf32>
    %43 = arith.addf %40, %42 : vector<16x128xf32>
    %44 = math.tanh %43 : vector<16x128xf32>
    %cst_30 = arith.constant 1.000000e+00 : f32
    %45 = vector.broadcast %cst_30 : f32 to vector<16x128xf32>
    %46 = arith.subf %45, %34 : vector<16x128xf32>
    %47 = arith.mulf %46, %0 : vector<16x128xf32>
    %48 = arith.mulf %34, %44 : vector<16x128xf32>
    %49 = arith.addf %47, %48 : vector<16x128xf32>
    %c0_31 = arith.constant 0 : index
    %c0_32 = arith.constant 0 : index
    %50 = vector.load %arg17[%c0_31, %c0_32] : memref<16x128xf32, #tpu.memory_space<vmem>>, vector<16x128xf32>
    tpu.vector_store %arg17[%c0_31, %c0_32], %49 {strides = array<i32>} : memref<16x128xf32, #tpu.memory_space<vmem>>, vector<16x128xf32>,
    %51 = arith.truncf %49 : vector<16x128xf32> to vector<16x128xbf16>
    %c0_33 = arith.constant 0 : index
    %c0_34 = arith.constant 0 : index
    %52 = vector.load %arg13[%c0_33, %c0_34] : memref<128x512xbf16, #tpu.memory_space<vmem>>, vector<128x512xbf16>
    %cst_35 = arith.constant dense<0.000000e+00> : vector<16x512xf32>
    %53 = tpu.matmul %51, %52, %cst_35 {dimension_numbers = #tpu.dot_dimension_numbers<[1], [0], [0], [1], [0, 0, 1, 1], [], []>} : vector<16x128xbf16>, vector<128x512xbf16>, vector<16x512xf32> -> vector<16x512xf32>
    %c0_36 = arith.constant 0 : index
    %c0_37 = arith.constant 0 : index
    %54 = vector.load %arg14[%c0_36, %c0_37] : memref<1x512xf32, #tpu.memory_space<vmem>>, vector<1x512xf32>
    %55 = vector.broadcast %54 : vector<1x512xf32> to vector<16x512xf32>
    %56 = arith.addf %53, %55 : vector<16x512xf32>
    %cst_38 = arith.constant 0.000000e+00 : f32
    %57 = vector.broadcast %cst_38 : f32 to vector<16x512xf32>
    %58 = arith.maximumf %56, %57 : vector<16x512xf32>
    %59 = arith.truncf %58 : vector<16x512xf32> to vector<16x512xbf16>
    %c0_39 = arith.constant 0 : index
    %c0_40 = arith.constant 0 : index
    %60 = vector.load %arg15[%c0_39, %c0_40] : memref<512x768xbf16, #tpu.memory_space<vmem>>, vector<512x768xbf16>
    %cst_41 = arith.constant dense<0.000000e+00> : vector<16x768xf32>
    %61 = tpu.matmul %59, %60, %cst_41 {dimension_numbers = #tpu.dot_dimension_numbers<[1], [0], [0], [1], [0, 0, 1, 1], [], []>} : vector<16x512xbf16>, vector<512x768xbf16>, vector<16x768xf32> -> vector<16x768xf32>
    %c0_42 = arith.constant 0 : index
    %c0_43 = arith.constant 0 : index
    %62 = vector.load %arg16[%c0_42, %c0_43] : memref<1x768xf32, #tpu.memory_space<vmem>>, vector<1x768xf32>
    %63 = vector.broadcast %62 : vector<1x768xf32> to vector<16x768xf32>
    %64 = arith.addf %61, %63 : vector<16x768xf32>
    %c0_44 = arith.constant 0 : index
    %c0_45 = arith.constant 0 : index
    %65 = vector.load %arg18[%c0_44, %c0_45] : memref<16x768xf32, #tpu.memory_space<vmem>>, vector<16x768xf32>
    tpu.vector_store %arg18[%c0_44, %c0_45], %64 {strides = array<i32>} : memref<16x768xf32, #tpu.memory_space<vmem>>, vector<16x768xf32>,
    return
  }
  func.func @transform_0(%arg0: i32) -> (i32, i32) {
    %c0_i32 = arith.constant 0 : i32
    %c0_i32_0 = arith.constant 0 : i32
    return %arg0, %c0_i32 : i32, i32
  }
  func.func @transform_1(%arg0: i32) -> (i32, i32) {
    %c0_i32 = arith.constant 0 : i32
    %c0_i32_0 = arith.constant 0 : i32
    return %arg0, %c0_i32 : i32, i32
  }
  func.func @transform_2(%arg0: i32) -> (i32, i32) {
    %c0_i32 = arith.constant 0 : i32
    %c0_i32_0 = arith.constant 0 : i32
    return %arg0, %c0_i32 : i32, i32
  }
  func.func @transform_3(%arg0: i32) -> (i32, i32) {
    %c0_i32 = arith.constant 0 : i32
    %c0_i32_0 = arith.constant 0 : i32
    %c0_i32_1 = arith.constant 0 : i32
    return %c0_i32, %c0_i32_0 : i32, i32
  }
  func.func @transform_4(%arg0: i32) -> (i32, i32) {
    %c0_i32 = arith.constant 0 : i32
    %c0_i32_0 = arith.constant 0 : i32
    %c0_i32_1 = arith.constant 0 : i32
    return %c0_i32, %c0_i32_0 : i32, i32
  }
  func.func @transform_5(%arg0: i32) -> (i32, i32) {
    %c0_i32 = arith.constant 0 : i32
    %c0_i32_0 = arith.constant 0 : i32
    %c0_i32_1 = arith.constant 0 : i32
    return %c0_i32, %c0_i32_0 : i32, i32
  }
  func.func @transform_6(%arg0: i32) -> (i32, i32) {
    %c0_i32 = arith.constant 0 : i32
    %c0_i32_0 = arith.constant 0 : i32
    %c0_i32_1 = arith.constant 0 : i32
    return %c0_i32, %c0_i32_0 : i32, i32
  }
  func.func @transform_7(%arg0: i32) -> (i32, i32) {
    %c0_i32 = arith.constant 0 : i32
    %c0_i32_0 = arith.constant 0 : i32
    %c0_i32_1 = arith.constant 0 : i32
    return %c0_i32, %c0_i32_0 : i32, i32
  }
  func.func @transform_8(%arg0: i32) -> (i32, i32) {
    %c0_i32 = arith.constant 0 : i32
    %c0_i32_0 = arith.constant 0 : i32
    %c0_i32_1 = arith.constant 0 : i32
    return %c0_i32, %c0_i32_0 : i32, i32
  }
  func.func @transform_9(%arg0: i32) -> (i32, i32) {
    %c0_i32 = arith.constant 0 : i32
    %c0_i32_0 = arith.constant 0 : i32
    %c0_i32_1 = arith.constant 0 : i32
    return %c0_i32, %c0_i32_0 : i32, i32
  }
  func.func @transform_10(%arg0: i32) -> (i32, i32) {
    %c0_i32 = arith.constant 0 : i32
    %c0_i32_0 = arith.constant 0 : i32
    %c0_i32_1 = arith.constant 0 : i32
    return %c0_i32, %c0_i32_0 : i32, i32
  }
  func.func @transform_11(%arg0: i32) -> (i32, i32) {
    %c0_i32 = arith.constant 0 : i32
    %c0_i32_0 = arith.constant 0 : i32
    %c0_i32_1 = arith.constant 0 : i32
    return %c0_i32, %c0_i32_0 : i32, i32
  }
  func.func @transform_12(%arg0: i32) -> (i32, i32) {
    %c0_i32 = arith.constant 0 : i32
    %c0_i32_0 = arith.constant 0 : i32
    %c0_i32_1 = arith.constant 0 : i32
    return %c0_i32, %c0_i32_0 : i32, i32
  }
  func.func @transform_13(%arg0: i32) -> (i32, i32) {
    %c0_i32 = arith.constant 0 : i32
    %c0_i32_0 = arith.constant 0 : i32
    %c0_i32_1 = arith.constant 0 : i32
    return %c0_i32, %c0_i32_0 : i32, i32
  }
  func.func @transform_14(%arg0: i32) -> (i32, i32) {
    %c0_i32 = arith.constant 0 : i32
    %c0_i32_0 = arith.constant 0 : i32
    %c0_i32_1 = arith.constant 0 : i32
    return %c0_i32, %c0_i32_0 : i32, i32
  }
  func.func @transform_15(%arg0: i32) -> (i32, i32) {
    %c0_i32 = arith.constant 0 : i32
    %c0_i32_0 = arith.constant 0 : i32
    %c0_i32_1 = arith.constant 0 : i32
    return %c0_i32, %c0_i32_0 : i32, i32
  }
  func.func @transform_16(%arg0: i32) -> (i32, i32) {
    %c0_i32 = arith.constant 0 : i32
    %c0_i32_0 = arith.constant 0 : i32
    return %arg0, %c0_i32 : i32, i32
  }
  func.func @transform_17(%arg0: i32) -> (i32, i32) {
    %c0_i32 = arith.constant 0 : i32
    %c0_i32_0 = arith.constant 0 : i32
    return %arg0, %c0_i32 : i32, i32
  }
}

module attributes {stable_mosaic.version = 11 : i64} {
  func.func @_convex_upsample_kernel(%arg0: i32, %arg1: memref<1x9x64x16xf32, #tpu.memory_space<vmem>>, %arg2: memref<1x2x9x16xf32, #tpu.memory_space<vmem>>, %arg3: memref<1x2x64x16xf32, #tpu.memory_space<vmem>>) attributes {dimension_semantics = [#tpu.dimension_semantics<parallel>], iteration_bounds = array<i64: 1>, scalar_prefetch = 0 : i64, scratch_operands = 0 : i64, tpu.core_type = #tpu.core_type<tc>, window_params = [{transform_indices = @transform_0, window_bounds = array<i64: 1, 9, 64, 16>}, {transform_indices = @transform_1, window_bounds = array<i64: 1, 2, 9, 16>}, {transform_indices = @transform_2, window_bounds = array<i64: 1, 2, 64, 16>}]} {
    %c0 = arith.constant 0 : index
    %c0_0 = arith.constant 0 : index
    %c0_1 = arith.constant 0 : index
    %c0_2 = arith.constant 0 : index
    %0 = vector.load %arg1[%c0, %c0_0, %c0_1, %c0_2] : memref<1x9x64x16xf32, #tpu.memory_space<vmem>>, vector<1x9x64x16xf32>
    %1 = vector.shape_cast %0 : vector<1x9x64x16xf32> to vector<9x64x16xf32>
    %cst = arith.constant dense<0xFF800000> : vector<64x16xf32>
    %2 = vector.multi_reduction <maximumf>, %1, %cst [0] : vector<9x64x16xf32> to vector<64x16xf32>
    %3 = vector.shape_cast %2 : vector<64x16xf32> to vector<1x64x16xf32>
    %4 = vector.broadcast %3 : vector<1x64x16xf32> to vector<9x64x16xf32>
    %5 = arith.subf %1, %4 : vector<9x64x16xf32>
    %6 = math.exp %5 : vector<9x64x16xf32>
    %cst_3 = arith.constant dense<0.000000e+00> : vector<64x16xf32>
    %7 = vector.multi_reduction <add>, %6, %cst_3 [0] : vector<9x64x16xf32> to vector<64x16xf32>
    %8 = vector.shape_cast %7 : vector<64x16xf32> to vector<1x64x16xf32>
    %9 = tpu.reciprocal %8 {approx = true} : vector<1x64x16xf32> -> vector<1x64x16xf32>
    %10 = vector.broadcast %9 : vector<1x64x16xf32> to vector<9x64x16xf32>
    %11 = arith.mulf %6, %10 : vector<9x64x16xf32>
    %c0_4 = arith.constant 0 : index
    %c0_5 = arith.constant 0 : index
    %c0_6 = arith.constant 0 : index
    %c0_7 = arith.constant 0 : index
    %12 = vector.load %arg2[%c0_4, %c0_5, %c0_6, %c0_7] : memref<1x2x9x16xf32, #tpu.memory_space<vmem>>, vector<1x2x9x16xf32>
    %13 = vector.shape_cast %12 : vector<1x2x9x16xf32> to vector<2x9x16xf32>
    %14 = vector.extract_strided_slice %13 {offsets = [0, 0, 0], sizes = [1, 9, 16], strides = [1, 1, 1]} : vector<2x9x16xf32> to vector<1x9x16xf32>
    %15 = vector.shape_cast %14 : vector<1x9x16xf32> to vector<9x16xf32>
    %16 = vector.shape_cast %15 : vector<9x16xf32> to vector<9x1x16xf32>
    %17 = vector.broadcast %16 : vector<9x1x16xf32> to vector<9x64x16xf32>
    %18 = arith.mulf %11, %17 : vector<9x64x16xf32>
    %cst_8 = arith.constant dense<0.000000e+00> : vector<64x16xf32>
    %19 = vector.multi_reduction <add>, %18, %cst_8 [0] : vector<9x64x16xf32> to vector<64x16xf32>
    %c0_9 = arith.constant 0 : index
    %c0_10 = arith.constant 0 : index
    %c0_11 = arith.constant 0 : index
    %c0_12 = arith.constant 0 : index
    %20 = vector.load %arg3[%c0_9, %c0_10, %c0_11, %c0_12] : memref<1x2x64x16xf32, #tpu.memory_space<vmem>>, vector<1x1x64x16xf32>
    %21 = vector.shape_cast %20 : vector<1x1x64x16xf32> to vector<64x16xf32>
    %22 = vector.shape_cast %19 : vector<64x16xf32> to vector<1x1x64x16xf32>
    tpu.vector_store %arg3[%c0_9, %c0_10, %c0_11, %c0_12], %22 {strides = array<i32>} : memref<1x2x64x16xf32, #tpu.memory_space<vmem>>, vector<1x1x64x16xf32>,
    %23 = vector.extract_strided_slice %13 {offsets = [1, 0, 0], sizes = [1, 9, 16], strides = [1, 1, 1]} : vector<2x9x16xf32> to vector<1x9x16xf32>
    %24 = vector.shape_cast %23 : vector<1x9x16xf32> to vector<9x16xf32>
    %25 = vector.shape_cast %24 : vector<9x16xf32> to vector<9x1x16xf32>
    %26 = vector.broadcast %25 : vector<9x1x16xf32> to vector<9x64x16xf32>
    %27 = arith.mulf %11, %26 : vector<9x64x16xf32>
    %cst_13 = arith.constant dense<0.000000e+00> : vector<64x16xf32>
    %28 = vector.multi_reduction <add>, %27, %cst_13 [0] : vector<9x64x16xf32> to vector<64x16xf32>
    %c0_14 = arith.constant 0 : index
    %c1 = arith.constant 1 : index
    %c0_15 = arith.constant 0 : index
    %c0_16 = arith.constant 0 : index
    %29 = vector.load %arg3[%c0_14, %c1, %c0_15, %c0_16] : memref<1x2x64x16xf32, #tpu.memory_space<vmem>>, vector<1x1x64x16xf32>
    %30 = vector.shape_cast %29 : vector<1x1x64x16xf32> to vector<64x16xf32>
    %31 = vector.shape_cast %28 : vector<64x16xf32> to vector<1x1x64x16xf32>
    tpu.vector_store %arg3[%c0_14, %c1, %c0_15, %c0_16], %31 {strides = array<i32>} : memref<1x2x64x16xf32, #tpu.memory_space<vmem>>, vector<1x1x64x16xf32>,
    return
  }
  func.func @transform_0(%arg0: i32) -> (i32, i32, i32, i32) {
    %c0_i32 = arith.constant 0 : i32
    %c0_i32_0 = arith.constant 0 : i32
    %c0_i32_1 = arith.constant 0 : i32
    %c0_i32_2 = arith.constant 0 : i32
    return %arg0, %c0_i32, %c0_i32_0, %c0_i32_1 : i32, i32, i32, i32
  }
  func.func @transform_1(%arg0: i32) -> (i32, i32, i32, i32) {
    %c0_i32 = arith.constant 0 : i32
    %c0_i32_0 = arith.constant 0 : i32
    %c0_i32_1 = arith.constant 0 : i32
    %c0_i32_2 = arith.constant 0 : i32
    return %arg0, %c0_i32, %c0_i32_0, %c0_i32_1 : i32, i32, i32, i32
  }
  func.func @transform_2(%arg0: i32) -> (i32, i32, i32, i32) {
    %c0_i32 = arith.constant 0 : i32
    %c0_i32_0 = arith.constant 0 : i32
    %c0_i32_1 = arith.constant 0 : i32
    %c0_i32_2 = arith.constant 0 : i32
    return %arg0, %c0_i32, %c0_i32_0, %c0_i32_1 : i32, i32, i32, i32
  }
}

</mosaic_0001>

<llo_original>
// kernel: sin.1
$region0: #{sin.1}
  #allocation0 [shape = 's32[1]{0}', space=sflag, size = 0x4, scoped, tag = 'scoped memory for sin.1']
  %s0 = inlined_call_operand.vmem [shape: f32[128], index: 0, kind: input, shape index: {}]
  %s1 = inlined_call_operand.vmem [shape: f32[128], index: 1, kind: output, shape index: {}]
  %v2 = vld [vmem:[%s0] sm:$0x1]
  %v3 = vand.u32 2147483647, %v2
  %vm4 = vcmp.le.f32.partialorder %v3, 0.7853982
  %vm5 = vcmp.lt.s32.totalorder %v2, 0
  %v6 = vand.u32 %v2, 2139095040
  %v7 = vshrl.u32 %v6, 23
  %v8 = vsub.s32 %v7, 127
  %v9 = vand.u32 2147483647, %v2
  %v10 = vand.u32 %v9, 8388607
  %v11 = vor.u32 %v10, 8388608
  %v12 = vsub.s32 0, %v11
  %v13 = vadd.s32 %v8, 1
  %vm14 = vcmp.gt.s32.totalorder %v13, 0
  %v15 = vsel %vm14, %v13, 0
  %v16 = vshrl.u32 %v15, 5
  %v17 = vand.u32 %v15, 31
  %v18 = vsub.s32 32, %v17
  %v19 = vshrl.u32 683565275, %v18
  %v20 = vshll.u32 683565275, %v17
  %v21 = vshrl.u32 2475754826, %v18
  %v22 = vor.u32 %v20, %v21
  %v23 = vshll.u32 2475754826, %v17
  %v24 = vshrl.u32 2131351028, %v18
  %v25 = vor.u32 %v23, %v24
  %v26 = vshll.u32 2131351028, %v17
  %v27 = vshrl.u32 2102212464, %v18
  %v28 = vor.u32 %v26, %v27
  %v29 = vshll.u32 2102212464, %v17
  %v30 = vshrl.u32 920167782, %v18
  %v31 = vor.u32 %v29, %v30
  %v32 = vshll.u32 920167782, %v17
  %v33 = vshrl.u32 1326507024, %v18
  %v34 = vor.u32 %v32, %v33
  %vm35 = vcmp.lt.s32.totalorder %v16, 1
  %vm36 = vcmp.lt.s32.totalorder %v16, 2
  %vm37 = vcmp.lt.s32.totalorder %v16, 3
  %vm38 = vcmp.lt.s32.totalorder %v16, 4
  %v39 = vsel %vm35, %v19, %v22
  %v40 = vsel %vm38, %v28, 2102212464
  %v41 = vsel %vm37, %v25, %v40
  %v42 = vsel %vm36, %v39, %v41
  %v43 = vsel %vm35, %v22, %v25
  %v44 = vsel %vm38, %v31, 920167782
  %v45 = vsel %vm37, %v28, %v44
  %v46 = vsel %vm36, %v43, %v45
  %v47 = vsel %vm35, %v25, %v28
  %v48 = vsel %vm38, %v34, 1326507024
  %v49 = vsel %vm37, %v31, %v48
  %v50 = vsel %vm36, %v47, %v49
  %v51 = vshll.u32 %v11, 8
  %v52 = vmul.u32.u64.compose %v51, %v50
  %v53 = vextract.low.u32 %v52
  %v54 = vextract.high.u32 %v52
  %v55 = vmul.u32.u64.compose %v51, %v46
  %v56 = vextract.low.u32 %v55
  %v57 = vextract.high.u32 %v55
  %v58 = vmul.u32 %v51, %v42
  %v59 = vadd.s32 %v54, %v56
  %vm60 = vc.u32 %v54, %v56
  %v61 = vadd.s32 %v57, 1
  %v62 = vsel %vm60, %v61, %v57
  %v63 = vadd.s32 %v58, %v62
  %v64 = vadd.s32 %v63, 536870912
  %v65 = vshrl.u32 %v64, 30
  %v66 = vshll.u32 %v65, 30
  %v67 = vsub.s32 %v63, %v66
  %vm68 = vcmp.lt.s32.totalorder %v67, 0
  %v69 = vsub.s32 0, %v67
  %v70 = vsel %vm68, %v69, %v67
  %v71 = vclz %v70
  %v72 = vsub.s32 %v71, 2
  %vm73 = vcmp.gt.s32.totalorder 0, %v72
  %v74 = vsel %vm73, 0, %v72
  %v75 = vsub.s32 32, %v74
  %v76 = vshll.u32 %v67, %v74
  %v77 = vshrl.u32 %v59, %v75
  %v78 = vor.u32 %v76, %v77
  %v79 = vsub.s32 4294967266, %v74
  %v80 = vadd.s32 %v79, 127
  %v81 = vshll.u32 %v80, 23
  %v82 = vor.u32 4788187, %v81
  %v83 = vand.u32 2147483647, %v82
  %v85 = vcvt.s32.f32 %v78
  %v86 = vmul.f32 %v85, %v83
  %v87 = vxor.u32 %v86, 2147483648
  %v88 = vsel %vm5, %v87, %v86
  %v89 = vsub.s32 4, %v65
  %v90 = vsel %vm5, %v89, %v65
  %v91 = vsel %vm4, %v2, %v88
  %v92 = vsel %vm4, 0, %v90
  %v93 = vcosq.f32.pop %v91
  %v94 = vsinq.f32.pop %v91
  %vm95 = vweird.f32 %v2
  %v96 = vadd.s32 %v92, 3
  %v97 = vand.u32 %v96, 3
  %vm98 = vcmp.lt.s32.totalorder %v97, 2
  %vm99 = vcmp.eq.s32.totalorder %v97, 0
  %v100 = vxor.u32 %v94, 2147483648
  %v101 = vsel %vm99, %v93, %v100
  %vm102 = vcmp.eq.s32.totalorder %v97, 2
  %v103 = vxor.u32 %v93, 2147483648
  %v104 = vsel %vm102, %v103, %v94
  %v105 = vsel %vm98, %v101, %v104
  %v106 = vsel %vm95, nan, %v105
  %107 = vst [vmem:[%s1] sm:$0x1] %v106

// kernel: cos.1
$region0: #{cos.1}
  #allocation0 [shape = 's32[1]{0}', space=sflag, size = 0x4, scoped, tag = 'scoped memory for cos.1']
  %s0 = inlined_call_operand.vmem [shape: f32[128], index: 0, kind: input, shape index: {}]
  %s1 = inlined_call_operand.vmem [shape: f32[128], index: 1, kind: output, shape index: {}]
  %v2 = vld [vmem:[%s0] sm:$0x1]
  %v3 = vand.u32 2147483647, %v2
  %vm4 = vcmp.le.f32.partialorder %v3, 0.7853982
  %vm5 = vcmp.lt.s32.totalorder %v2, 0
  %v6 = vand.u32 %v2, 2139095040
  %v7 = vshrl.u32 %v6, 23
  %v8 = vsub.s32 %v7, 127
  %v9 = vand.u32 2147483647, %v2
  %v10 = vand.u32 %v9, 8388607
  %v11 = vor.u32 %v10, 8388608
  %v12 = vsub.s32 0, %v11
  %v13 = vadd.s32 %v8, 1
  %vm14 = vcmp.gt.s32.totalorder %v13, 0
  %v15 = vsel %vm14, %v13, 0
  %v16 = vshrl.u32 %v15, 5
  %v17 = vand.u32 %v15, 31
  %v18 = vsub.s32 32, %v17
  %v19 = vshrl.u32 683565275, %v18
  %v20 = vshll.u32 683565275, %v17
  %v21 = vshrl.u32 2475754826, %v18
  %v22 = vor.u32 %v20, %v21
  %v23 = vshll.u32 2475754826, %v17
  %v24 = vshrl.u32 2131351028, %v18
  %v25 = vor.u32 %v23, %v24
  %v26 = vshll.u32 2131351028, %v17
  %v27 = vshrl.u32 2102212464, %v18
  %v28 = vor.u32 %v26, %v27
  %v29 = vshll.u32 2102212464, %v17
  %v30 = vshrl.u32 920167782, %v18
  %v31 = vor.u32 %v29, %v30
  %v32 = vshll.u32 920167782, %v17
  %v33 = vshrl.u32 1326507024, %v18
  %v34 = vor.u32 %v32, %v33
  %vm35 = vcmp.lt.s32.totalorder %v16, 1
  %vm36 = vcmp.lt.s32.totalorder %v16, 2
  %vm37 = vcmp.lt.s32.totalorder %v16, 3
  %vm38 = vcmp.lt.s32.totalorder %v16, 4
  %v39 = vsel %vm35, %v19, %v22
  %v40 = vsel %vm38, %v28, 2102212464
  %v41 = vsel %vm37, %v25, %v40
  %v42 = vsel %vm36, %v39, %v41
  %v43 = vsel %vm35, %v22, %v25
  %v44 = vsel %vm38, %v31, 920167782
  %v45 = vsel %vm37, %v28, %v44
  %v46 = vsel %vm36, %v43, %v45
  %v47 = vsel %vm35, %v25, %v28
  %v48 = vsel %vm38, %v34, 1326507024
  %v49 = vsel %vm37, %v31, %v48
  %v50 = vsel %vm36, %v47, %v49
  %v51 = vshll.u32 %v11, 8
  %v52 = vmul.u32.u64.compose %v51, %v50
  %v53 = vextract.low.u32 %v52
  %v54 = vextract.high.u32 %v52
  %v55 = vmul.u32.u64.compose %v51, %v46
  %v56 = vextract.low.u32 %v55
  %v57 = vextract.high.u32 %v55
  %v58 = vmul.u32 %v51, %v42
  %v59 = vadd.s32 %v54, %v56
  %vm60 = vc.u32 %v54, %v56
  %v61 = vadd.s32 %v57, 1
  %v62 = vsel %vm60, %v61, %v57
  %v63 = vadd.s32 %v58, %v62
  %v64 = vadd.s32 %v63, 536870912
  %v65 = vshrl.u32 %v64, 30
  %v66 = vshll.u32 %v65, 30
  %v67 = vsub.s32 %v63, %v66
  %vm68 = vcmp.lt.s32.totalorder %v67, 0
  %v69 = vsub.s32 0, %v67
  %v70 = vsel %vm68, %v69, %v67
  %v71 = vclz %v70
  %v72 = vsub.s32 %v71, 2
  %vm73 = vcmp.gt.s32.totalorder 0, %v72
  %v74 = vsel %vm73, 0, %v72
  %v75 = vsub.s32 32, %v74
  %v76 = vshll.u32 %v67, %v74
  %v77 = vshrl.u32 %v59, %v75
  %v78 = vor.u32 %v76, %v77
  %v79 = vsub.s32 4294967266, %v74
  %v80 = vadd.s32 %v79, 127
  %v81 = vshll.u32 %v80, 23
  %v82 = vor.u32 4788187, %v81
  %v83 = vand.u32 2147483647, %v82
  %v85 = vcvt.s32.f32 %v78
  %v86 = vmul.f32 %v85, %v83
  %v87 = vxor.u32 %v86, 2147483648
  %v88 = vsel %vm5, %v87, %v86
  %v89 = vsub.s32 4, %v65
  %v90 = vsel %vm5, %v89, %v65
  %v91 = vsel %vm4, %v2, %v88
  %v92 = vsel %vm4, 0, %v90
  %v93 = vcosq.f32.pop %v91
  %v94 = vsinq.f32.pop %v91
  %vm95 = vweird.f32 %v2
  %v96 = vand.u32 %v92, 3
  %vm97 = vcmp.lt.s32.totalorder %v96, 2
  %vm98 = vcmp.eq.s32.totalorder %v96, 0
  %v99 = vxor.u32 %v94, 2147483648
  %v100 = vsel %vm98, %v93, %v99
  %vm101 = vcmp.eq.s32.totalorder %v96, 2
  %v102 = vxor.u32 %v93, 2147483648
  %v103 = vsel %vm101, %v102, %v94
  %v104 = vsel %vm97, %v100, %v103
  %v105 = vsel %vm95, nan, %v104
  %106 = vst [vmem:[%s1] sm:$0x1] %v105

// kernel: mask_raft_forward.6
$region0: #{mask_raft_forward.6}
  #allocation0 [shape = 'u32[]', space=smem, size = 0x4, offset = 0x4, fixed_abs, tag = 'smem constant byte address 0x4 - core index']
  #allocation1 [shape = 'u32[144,128]{1,0:T(1,128)}', space=vmem, size = 0x12000, scoped, tag = 'internal scratch']
  #allocation2 [shape = 'f32[32,256]{1,0:T(8,128)}', space=vmem, size = 0x8000, scoped, tag = 'scratch operand']
  %s0 = inlined_call_operand.vmem [shape: bf16[32,256], index: 0, kind: input, shape index: {}]
  %s1 = inlined_call_operand.vmem [shape: bf16[256,256], index: 1, kind: input, shape index: {}]
  %s2 = inlined_call_operand.vmem [shape: f32[1,256], index: 2, kind: input, shape index: {}]
  %s3 = inlined_call_operand.vmem [shape: f32[32,256], index: 3, kind: output, shape index: {}]
  %s4 = sld [smem:[#allocation0]]
  $region30: #{mask_raft_forward.6} parent=0
    _
  %s6 = ssub.s32 1, %s4
  %s7 = scalar_select 0, %s6, %s4
  // Predicated region
  $region2: #{mask_raft_forward.6} parent=0 // pred_check
    _
  $region3: #{mask_raft_forward.6} parent=0 // pred_check_branch
    %9 = sbr.rel (0) target = $region5
  $region4: #{mask_raft_forward.6} parent=0 // pred_region
    _
  $region5: #{mask_raft_forward.6} parent=0 // pred_fallthru
    _
  // Predicated region
  $region6: #{mask_raft_forward.6} parent=0 // pred_check
    _
  $region7: #{mask_raft_forward.6} parent=0 // pred_check_branch
    %11 = sbr.rel (0) target = $region9
  $region8: #{mask_raft_forward.6} parent=0 // pred_region
    _
  $region9: #{mask_raft_forward.6} parent=0 // pred_fallthru
    _
  // Predicated region
  $region10: #{mask_raft_forward.6} parent=0 // pred_check
    _
  $region11: #{mask_raft_forward.6} parent=0 // pred_check_branch
    %13 = sbr.rel (0) target = $region13
  $region12: #{mask_raft_forward.6} parent=0 // pred_region
    _
  $region13: #{mask_raft_forward.6} parent=0 // pred_fallthru
    _
  %p14 = scmp.eq.s32.totalorder 0, 0
  // Predicated region
  $region14: #{mask_raft_forward.6} parent=0 // pred_check
    %p15 = pneg %p14
  $region15: #{mask_raft_forward.6} parent=0 // pred_check_branch
    %17 = sbr.rel (%p15) target = $region17
  $region16: #{mask_raft_forward.6} parent=0 // pred_region
    %18 = vst [vmem:[#allocation2] sm:$0xff] 0.0
    %19 = vst [vmem:[#allocation2 + $0x8] sm:$0xff] 0.0
    %20 = vst [vmem:[#allocation2 + $0x10] sm:$0xff] 0.0
    %21 = vst [vmem:[#allocation2 + $0x18] sm:$0xff] 0.0
    %22 = vst [vmem:[#allocation2 + $0x20] sm:$0xff] 0.0
    %23 = vst [vmem:[#allocation2 + $0x28] sm:$0xff] 0.0
    %24 = vst [vmem:[#allocation2 + $0x30] sm:$0xff] 0.0
    %25 = vst [vmem:[#allocation2 + $0x38] sm:$0xff] 0.0
  $region17: #{mask_raft_forward.6} parent=0 // pred_fallthru
    _
  %v26 = vld [vmem:[#allocation2] sm:$0xff]
  %v27 = vld [vmem:[#allocation2 + $0x8] sm:$0xff]
  %v28 = vld [vmem:[#allocation2 + $0x10] sm:$0xff]
  %v29 = vld [vmem:[#allocation2 + $0x18] sm:$0xff]
  %v30 = vld [vmem:[#allocation2 + $0x20] sm:$0xff]
  %v31 = vld [vmem:[#allocation2 + $0x28] sm:$0xff]
  %v32 = vld [vmem:[#allocation2 + $0x30] sm:$0xff]
  %v33 = vld [vmem:[#allocation2 + $0x38] sm:$0xff]
  %v34 = vld [vmem:[%s0] sm:$0xff]
  %v35 = vld [vmem:[%s0 + $0x8] sm:$0xff]
  %v36 = vld [vmem:[%s0 + $0x10] sm:$0xff]
  %v37 = vld [vmem:[%s0 + $0x18] sm:$0xff]
  %v38 = vld [vmem:[%s1] sm:$0xff]
  %v39 = vld [vmem:[%s1 + $0x8] sm:$0xff]
  %v40 = vld [vmem:[%s1 + $0x10] sm:$0xff]
  %v41 = vld [vmem:[%s1 + $0x18] sm:$0xff]
  %v42 = vld [vmem:[%s1 + $0x20] sm:$0xff]
  %v43 = vld [vmem:[%s1 + $0x28] sm:$0xff]
  %v44 = vld [vmem:[%s1 + $0x30] sm:$0xff]
  %v45 = vld [vmem:[%s1 + $0x38] sm:$0xff]
  %v46 = vld [vmem:[%s1 + $0x40] sm:$0xff]
  %v47 = vld [vmem:[%s1 + $0x48] sm:$0xff]
  %v48 = vld [vmem:[%s1 + $0x50] sm:$0xff]
  %v49 = vld [vmem:[%s1 + $0x58] sm:$0xff]
  %v50 = vld [vmem:[%s1 + $0x60] sm:$0xff]
  %v51 = vld [vmem:[%s1 + $0x68] sm:$0xff]
  %v52 = vld [vmem:[%s1 + $0x70] sm:$0xff]
  %v53 = vld [vmem:[%s1 + $0x78] sm:$0xff]
  %v54 = vld [vmem:[%s1 + $0x80] sm:$0xff]
  %v55 = vld [vmem:[%s1 + $0x88] sm:$0xff]
  %v56 = vld [vmem:[%s1 + $0x90] sm:$0xff]
  %v57 = vld [vmem:[%s1 + $0x98] sm:$0xff]
  %v58 = vld [vmem:[%s1 + $0xa0] sm:$0xff]
  %v59 = vld [vmem:[%s1 + $0xa8] sm:$0xff]
  %v60 = vld [vmem:[%s1 + $0xb0] sm:$0xff]
  %v61 = vld [vmem:[%s1 + $0xb8] sm:$0xff]
  %v62 = vld [vmem:[%s1 + $0xc0] sm:$0xff]
  %v63 = vld [vmem:[%s1 + $0xc8] sm:$0xff]
  %v64 = vld [vmem:[%s1 + $0xd0] sm:$0xff]
  %v65 = vld [vmem:[%s1 + $0xd8] sm:$0xff]
  %v66 = vld [vmem:[%s1 + $0xe0] sm:$0xff]
  %v67 = vld [vmem:[%s1 + $0xe8] sm:$0xff]
  %v68 = vld [vmem:[%s1 + $0xf0] sm:$0xff]
  %v69 = vld [vmem:[%s1 + $0xf8] sm:$0xff]
  %v74 = vunpack.c.l.b16 %v34
  %v75 = vunpack.c.h.b16 %v34
  %v76 = vunpack.c.l.b16 %v35
  %v77 = vunpack.c.h.b16 %v35
  %v78 = vunpack.c.l.b16 %v36
  %v79 = vunpack.c.h.b16 %v36
  %v80 = vunpack.c.l.b16 %v37
  %v81 = vunpack.c.h.b16 %v37
  %v82 = vpack.c.b16 %v76, %v74
  %v83 = vpack.c.b16 %v77, %v75
  %v84 = vpack.c.b16 %v80, %v78
  %v85 = vpack.c.b16 %v81, %v79
  %v122 = vunpack.c.l.b16 %v38
  %v123 = vunpack.c.h.b16 %v38
  %v124 = vunpack.c.l.b16 %v39
  %v125 = vunpack.c.h.b16 %v39
  %v126 = vunpack.c.l.b16 %v40
  %v127 = vunpack.c.h.b16 %v40
  %v128 = vunpack.c.l.b16 %v41
  %v129 = vunpack.c.h.b16 %v41
  %v130 = vunpack.c.l.b16 %v42
  %v131 = vunpack.c.h.b16 %v42
  %v132 = vunpack.c.l.b16 %v43
  %v133 = vunpack.c.h.b16 %v43
  %v134 = vunpack.c.l.b16 %v44
  %v135 = vunpack.c.h.b16 %v44
  %v136 = vunpack.c.l.b16 %v45
  %v137 = vunpack.c.h.b16 %v45
  %v138 = vunpack.c.l.b16 %v46
  %v139 = vunpack.c.h.b16 %v46
  %v140 = vunpack.c.l.b16 %v47
  %v141 = vunpack.c.h.b16 %v47
  %v142 = vunpack.c.l.b16 %v48
  %v143 = vunpack.c.h.b16 %v48
  %v144 = vunpack.c.l.b16 %v49
  %v145 = vunpack.c.h.b16 %v49
  %v146 = vunpack.c.l.b16 %v50
  %v147 = vunpack.c.h.b16 %v50
  %v148 = vunpack.c.l.b16 %v51
  %v149 = vunpack.c.h.b16 %v51
  %v150 = vunpack.c.l.b16 %v52
  %v151 = vunpack.c.h.b16 %v52
  %v152 = vunpack.c.l.b16 %v53
  %v153 = vunpack.c.h.b16 %v53
  %v154 = vunpack.c.l.b16 %v54
  %v155 = vunpack.c.h.b16 %v54
  %v156 = vunpack.c.l.b16 %v55
  %v157 = vunpack.c.h.b16 %v55
  %v158 = vunpack.c.l.b16 %v56
  %v159 = vunpack.c.h.b16 %v56
  %v160 = vunpack.c.l.b16 %v57
  %v161 = vunpack.c.h.b16 %v57
  %v162 = vunpack.c.l.b16 %v58
  %v163 = vunpack.c.h.b16 %v58
  %v164 = vunpack.c.l.b16 %v59
  %v165 = vunpack.c.h.b16 %v59
  %v166 = vunpack.c.l.b16 %v60
  %v167 = vunpack.c.h.b16 %v60
  %v168 = vunpack.c.l.b16 %v61
  %v169 = vunpack.c.h.b16 %v61
  %v170 = vunpack.c.l.b16 %v62
  %v171 = vunpack.c.h.b16 %v62
  %v172 = vunpack.c.l.b16 %v63
  %v173 = vunpack.c.h.b16 %v63
  %v174 = vunpack.c.l.b16 %v64
  %v175 = vunpack.c.h.b16 %v64
  %v176 = vunpack.c.l.b16 %v65
  %v177 = vunpack.c.h.b16 %v65
  %v178 = vunpack.c.l.b16 %v66
  %v179 = vunpack.c.h.b16 %v66
  %v180 = vunpack.c.l.b16 %v67
  %v181 = vunpack.c.h.b16 %v67
  %v182 = vunpack.c.l.b16 %v68
  %v183 = vunpack.c.h.b16 %v68
  %v184 = vunpack.c.l.b16 %v69
  %v185 = vunpack.c.h.b16 %v69
  %v186 = vpack.c.b16 %v124, %v122
  %v187 = vpack.c.b16 %v125, %v123
  %v188 = vpack.c.b16 %v128, %v126
  %v189 = vpack.c.b16 %v129, %v127
  %v190 = vpack.c.b16 %v132, %v130
  %v191 = vpack.c.b16 %v133, %v131
  %v192 = vpack.c.b16 %v136, %v134
  %v193 = vpack.c.b16 %v137, %v135
  %v194 = vpack.c.b16 %v140, %v138
  %v195 = vpack.c.b16 %v141, %v139
  %v196 = vpack.c.b16 %v144, %v142
  %v197 = vpack.c.b16 %v145, %v143
  %v198 = vpack.c.b16 %v148, %v146
  %v199 = vpack.c.b16 %v149, %v147
  %v200 = vpack.c.b16 %v152, %v150
  %v201 = vpack.c.b16 %v153, %v151
  %v202 = vpack.c.b16 %v156, %v154
  %v203 = vpack.c.b16 %v157, %v155
  %v204 = vpack.c.b16 %v160, %v158
  %v205 = vpack.c.b16 %v161, %v159
  %v206 = vpack.c.b16 %v164, %v162
  %v207 = vpack.c.b16 %v165, %v163
  %v208 = vpack.c.b16 %v168, %v166
  %v209 = vpack.c.b16 %v169, %v167
  %v210 = vpack.c.b16 %v172, %v170
  %v211 = vpack.c.b16 %v173, %v171
  %v212 = vpack.c.b16 %v176, %v174
  %v213 = vpack.c.b16 %v177, %v175
  %v214 = vpack.c.b16 %v180, %v178
  %v215 = vpack.c.b16 %v181, %v179
  %v216 = vpack.c.b16 %v184, %v182
  %v217 = vpack.c.b16 %v185, %v183
  %250 = vmatprep.subr.bf16.mxu0 %v187
  %251 = vmatpush1.bf16.msra.mxu0 %v186
  %252 = vmatprep.subr.bf16.mxu0 %v189
  %253 = vmatpush1.bf16.msra.mxu0 %v188
  %254 = vmatprep.subr.bf16.mxu0 %v191
  %255 = vmatpush1.bf16.msra.mxu0 %v190
  %256 = vmatprep.subr.bf16.mxu0 %v193
  %257 = vmatpush1.bf16.msra.mxu0 %v192
  %258 = vmatprep.subr.bf16.mxu0 %v195
  %259 = vmatpush1.bf16.msra.mxu0 %v194
  %260 = vmatprep.subr.bf16.mxu0 %v197
  %261 = vmatpush1.bf16.msra.mxu0 %v196
  %262 = vmatprep.subr.bf16.mxu0 %v199
  %263 = vmatpush1.bf16.msra.mxu0 %v198
  %264 = vmatprep.subr.bf16.mxu0 %v201
  %265 = vmatpush1.bf16.msra.mxu0 %v200
  %266 = vmatprep.subr.bf16.mxu0 %v203
  %267 = vmatpush1.bf16.msra.mxu0 %v202
  %268 = vmatprep.subr.bf16.mxu0 %v205
  %269 = vmatpush1.bf16.msra.mxu0 %v204
  %270 = vmatprep.subr.bf16.mxu0 %v207
  %271 = vmatpush1.bf16.msra.mxu0 %v206
  %272 = vmatprep.subr.bf16.mxu0 %v209
  %273 = vmatpush1.bf16.msra.mxu0 %v208
  %274 = vmatprep.subr.bf16.mxu0 %v211
  %275 = vmatpush1.bf16.msra.mxu0 %v210
  %276 = vmatprep.subr.bf16.mxu0 %v213
  %277 = vmatpush1.bf16.msra.mxu0 %v212
  %278 = vmatprep.subr.bf16.mxu0 %v215
  %279 = vmatpush1.bf16.msra.mxu0 %v214
  %280 = vmatprep.subr.bf16.mxu0 %v217
  %281 = vmatpush1.bf16.msra.mxu0 %v216
  %282 = vmatprep.mubr.bf16.mxu0 %v83
  %283 = vmatmul.mubr.bf16.gmra.mrb[0].mxu0 %v82
  %v284 = vpop.f32.mrb[0].mxu0
  %v285 = vadd.f32 0.0, %v284
  %v286 = vpop.f32.mrb[0].mxu0
  %v287 = vadd.f32 0.0, %v286
  %v288 = vpop.f32.mrb[0].mxu0
  %v289 = vadd.f32 0.0, %v288
  %v290 = vpop.f32.mrb[0].mxu0
  %v291 = vadd.f32 0.0, %v290
  %292 = vmatprep.mubr.bf16.mxu0 %v85
  %293 = vmatmul.mubr.bf16.gmra.mrb[0].mxu0 %v84
  %v294 = vpop.f32.mrb[0].mxu0
  %v295 = vadd.f32 0.0, %v294
  %v296 = vpop.f32.mrb[0].mxu0
  %v297 = vadd.f32 0.0, %v296
  %v298 = vpop.f32.mrb[0].mxu0
  %v299 = vadd.f32 0.0, %v298
  %v300 = vpop.f32.mrb[0].mxu0
  %v301 = vadd.f32 0.0, %v300
  %302 = vdwg.mxu0
  %v303 = vadd.f32 %v26, %v285
  %v304 = vadd.f32 %v27, %v287
  %v305 = vadd.f32 %v28, %v289
  %v306 = vadd.f32 %v29, %v291
  %v307 = vadd.f32 %v30, %v295
  %v308 = vadd.f32 %v31, %v297
  %v309 = vadd.f32 %v32, %v299
  %v310 = vadd.f32 %v33, %v301
  %311 = vst [vmem:[#allocation2] sm:$0xff] %v303
  %312 = vst [vmem:[#allocation2 + $0x8] sm:$0xff] %v304
  %313 = vst [vmem:[#allocation2 + $0x10] sm:$0xff] %v305
  %314 = vst [vmem:[#allocation2 + $0x18] sm:$0xff] %v306
  %315 = vst [vmem:[#allocation2 + $0x20] sm:$0xff] %v307
  %316 = vst [vmem:[#allocation2 + $0x28] sm:$0xff] %v308
  %317 = vst [vmem:[#allocation2 + $0x30] sm:$0xff] %v309
  %318 = vst [vmem:[#allocation2 + $0x38] sm:$0xff] %v310
  // Predicated region
  $region18: #{mask_raft_forward.6} parent=0 // pred_check
    %p319 = pneg %p14
  $region19: #{mask_raft_forward.6} parent=0 // pred_check_branch
    %321 = sbr.rel (%p319) target = $region21
  $region20: #{mask_raft_forward.6} parent=0 // pred_region
    %v322 = vld [vmem:[#allocation2] sm:$0xff]
    %v323 = vld [vmem:[#allocation2 + $0x8] sm:$0xff]
    %v324 = vld [vmem:[#allocation2 + $0x10] sm:$0xff]
    %v325 = vld [vmem:[#allocation2 + $0x18] sm:$0xff]
    %v326 = vld [vmem:[#allocation2 + $0x20] sm:$0xff]
    %v327 = vld [vmem:[#allocation2 + $0x28] sm:$0xff]
    %v328 = vld [vmem:[#allocation2 + $0x30] sm:$0xff]
    %v329 = vld [vmem:[#allocation2 + $0x38] sm:$0xff]
    %v330 = vld [vmem:[%s2] sm:$0x3]
    %v332 = vlaneseq
    %v333 = vshrl.u32 %v332, 7
    %v334 = vsub.s32 0, %v333
    %v335 = vrot.slane %v330, %v334
    %v336 = vlaneseq
    %v337 = vshrl.u32 %v336, 7
    %v338 = vsub.s32 1, %v337
    %v339 = vrot.slane %v330, %v338
    %v342 = vadd.f32 %v322, %v335
    %v343 = vadd.f32 %v323, %v339
    %v344 = vadd.f32 %v324, %v335
    %v345 = vadd.f32 %v325, %v339
    %v346 = vadd.f32 %v326, %v335
    %v347 = vadd.f32 %v327, %v339
    %v348 = vadd.f32 %v328, %v335
    %v349 = vadd.f32 %v329, %v339
    %v350 = vmax.f32 %v342, 0.0
    %v351 = vmax.f32 %v343, 0.0
    %v352 = vmax.f32 %v344, 0.0
    %v353 = vmax.f32 %v345, 0.0
    %v354 = vmax.f32 %v346, 0.0
    %v355 = vmax.f32 %v347, 0.0
    %v356 = vmax.f32 %v348, 0.0
    %v357 = vmax.f32 %v349, 0.0
    %358 = vst [vmem:[%s3] sm:$0xff] %v350
    %359 = vst [vmem:[%s3 + $0x8] sm:$0xff] %v351
    %360 = vst [vmem:[%s3 + $0x10] sm:$0xff] %v352
    %361 = vst [vmem:[%s3 + $0x18] sm:$0xff] %v353
    %362 = vst [vmem:[%s3 + $0x20] sm:$0xff] %v354
    %363 = vst [vmem:[%s3 + $0x28] sm:$0xff] %v355
    %364 = vst [vmem:[%s3 + $0x30] sm:$0xff] %v356
    %365 = vst [vmem:[%s3 + $0x38] sm:$0xff] %v357
  $region21: #{mask_raft_forward.6} parent=0 // pred_fallthru
    _
  // Predicated region
  $region22: #{mask_raft_forward.6} parent=0 // pred_check
    _
  $region23: #{mask_raft_forward.6} parent=0 // pred_check_branch
    %367 = sbr.rel (0) target = $region25
  $region24: #{mask_raft_forward.6} parent=0 // pred_region
    _
  $region25: #{mask_raft_forward.6} parent=0 // pred_fallthru
    _
  // Predicated region
  $region26: #{mask_raft_forward.6} parent=0 // pred_check
    _
  $region27: #{mask_raft_forward.6} parent=0 // pred_check_branch
    %369 = sbr.rel (0) target = $region29
  $region28: #{mask_raft_forward.6} parent=0 // pred_region
    _
  $region29: #{mask_raft_forward.6} parent=0 // pred_fallthru
    _

// kernel: mask_raft_forward.7
$region0: #{mask_raft_forward.7}
  #allocation0 [shape = 'u32[]', space=smem, size = 0x4, offset = 0x4, fixed_abs, tag = 'smem constant byte address 0x4 - core index']
  #allocation1 [shape = 'u32[144,128]{1,0:T(1,128)}', space=vmem, size = 0x12000, scoped, tag = 'internal scratch']
  #allocation2 [shape = 'f32[16,128]{1,0:T(8,128)}', space=vmem, size = 0x2000, scoped, tag = 'scratch operand']
  %s0 = inlined_call_operand.vmem [shape: bf16[16,256], index: 0, kind: input, shape index: {}]
  %s1 = inlined_call_operand.vmem [shape: bf16[256,128], index: 1, kind: input, shape index: {}]
  %s2 = inlined_call_operand.vmem [shape: f32[1,128], index: 2, kind: input, shape index: {}]
  %s3 = inlined_call_operand.vmem [shape: f32[16,128], index: 3, kind: output, shape index: {}]
  %s4 = sld [smem:[#allocation0]]
  $region30: #{mask_raft_forward.7} parent=0
    _
  %s6 = ssub.s32 1, %s4
  %s7 = scalar_select 0, %s6, %s4
  // Predicated region
  $region2: #{mask_raft_forward.7} parent=0 // pred_check
    _
  $region3: #{mask_raft_forward.7} parent=0 // pred_check_branch
    %9 = sbr.rel (0) target = $region5
  $region4: #{mask_raft_forward.7} parent=0 // pred_region
    _
  $region5: #{mask_raft_forward.7} parent=0 // pred_fallthru
    _
  // Predicated region
  $region6: #{mask_raft_forward.7} parent=0 // pred_check
    _
  $region7: #{mask_raft_forward.7} parent=0 // pred_check_branch
    %11 = sbr.rel (0) target = $region9
  $region8: #{mask_raft_forward.7} parent=0 // pred_region
    _
  $region9: #{mask_raft_forward.7} parent=0 // pred_fallthru
    _
  // Predicated region
  $region10: #{mask_raft_forward.7} parent=0 // pred_check
    _
  $region11: #{mask_raft_forward.7} parent=0 // pred_check_branch
    %13 = sbr.rel (0) target = $region13
  $region12: #{mask_raft_forward.7} parent=0 // pred_region
    _
  $region13: #{mask_raft_forward.7} parent=0 // pred_fallthru
    _
  %p15 = scmp.eq.s32.totalorder 0, 0
  // Predicated region
  $region14: #{mask_raft_forward.7} parent=0 // pred_check
    %p16 = pneg %p15
  $region15: #{mask_raft_forward.7} parent=0 // pred_check_branch
    %18 = sbr.rel (%p16) target = $region17
  $region16: #{mask_raft_forward.7} parent=0 // pred_region
    %19 = vst [vmem:[#allocation2] sm:$0xff] 0.0
    %20 = vst [vmem:[#allocation2 + $0x8] sm:$0xff] 0.0
  $region17: #{mask_raft_forward.7} parent=0 // pred_fallthru
    _
  %v21 = vld [vmem:[#allocation2] sm:$0xff]
  %v22 = vld [vmem:[#allocation2 + $0x8] sm:$0xff]
  %v23 = vld [vmem:[%s0] sm:$0xff]
  %v24 = vld [vmem:[%s0 + $0x8] sm:$0xff]
  %v25 = vld [vmem:[%s1] sm:$0xf]
  %v26 = vld [vmem:[%s1 + $0x4] sm:$0xf]
  %v27 = vld [vmem:[%s1 + $0x8] sm:$0xf]
  %v28 = vld [vmem:[%s1 + $0xc] sm:$0xf]
  %v29 = vld [vmem:[%s1 + $0x10] sm:$0xf]
  %v30 = vld [vmem:[%s1 + $0x14] sm:$0xf]
  %v31 = vld [vmem:[%s1 + $0x18] sm:$0xf]
  %v32 = vld [vmem:[%s1 + $0x1c] sm:$0xf]
  %v33 = vld [vmem:[%s1 + $0x20] sm:$0xf]
  %v34 = vld [vmem:[%s1 + $0x24] sm:$0xf]
  %v35 = vld [vmem:[%s1 + $0x28] sm:$0xf]
  %v36 = vld [vmem:[%s1 + $0x2c] sm:$0xf]
  %v37 = vld [vmem:[%s1 + $0x30] sm:$0xf]
  %v38 = vld [vmem:[%s1 + $0x34] sm:$0xf]
  %v39 = vld [vmem:[%s1 + $0x38] sm:$0xf]
  %v40 = vld [vmem:[%s1 + $0x3c] sm:$0xf]
  %v41 = vld [vmem:[%s1 + $0x40] sm:$0xf]
  %v42 = vld [vmem:[%s1 + $0x44] sm:$0xf]
  %v43 = vld [vmem:[%s1 + $0x48] sm:$0xf]
  %v44 = vld [vmem:[%s1 + $0x4c] sm:$0xf]
  %v45 = vld [vmem:[%s1 + $0x50] sm:$0xf]
  %v46 = vld [vmem:[%s1 + $0x54] sm:$0xf]
  %v47 = vld [vmem:[%s1 + $0x58] sm:$0xf]
  %v48 = vld [vmem:[%s1 + $0x5c] sm:$0xf]
  %v49 = vld [vmem:[%s1 + $0x60] sm:$0xf]
  %v50 = vld [vmem:[%s1 + $0x64] sm:$0xf]
  %v51 = vld [vmem:[%s1 + $0x68] sm:$0xf]
  %v52 = vld [vmem:[%s1 + $0x6c] sm:$0xf]
  %v53 = vld [vmem:[%s1 + $0x70] sm:$0xf]
  %v54 = vld [vmem:[%s1 + $0x74] sm:$0xf]
  %v55 = vld [vmem:[%s1 + $0x78] sm:$0xf]
  %v56 = vld [vmem:[%s1 + $0x7c] sm:$0xf]
  %v59 = vunpack.c.l.b16 %v23
  %v60 = vunpack.c.h.b16 %v23
  %v61 = vunpack.c.l.b16 %v24
  %v62 = vunpack.c.h.b16 %v24
  %v63 = vpack.c.b16 %v61, %v59
  %v64 = vpack.c.b16 %v62, %v60
  %v99 = vunpack.c.l.b16 %v25
  %v100 = vunpack.c.l.b16 %v26
  %v101 = vunpack.c.l.b16 %v27
  %v102 = vunpack.c.l.b16 %v28
  %v103 = vunpack.c.l.b16 %v29
  %v104 = vunpack.c.l.b16 %v30
  %v105 = vunpack.c.l.b16 %v31
  %v106 = vunpack.c.l.b16 %v32
  %v107 = vunpack.c.l.b16 %v33
  %v108 = vunpack.c.l.b16 %v34
  %v109 = vunpack.c.l.b16 %v35
  %v110 = vunpack.c.l.b16 %v36
  %v111 = vunpack.c.l.b16 %v37
  %v112 = vunpack.c.l.b16 %v38
  %v113 = vunpack.c.l.b16 %v39
  %v114 = vunpack.c.l.b16 %v40
  %v115 = vunpack.c.l.b16 %v41
  %v116 = vunpack.c.l.b16 %v42
  %v117 = vunpack.c.l.b16 %v43
  %v118 = vunpack.c.l.b16 %v44
  %v119 = vunpack.c.l.b16 %v45
  %v120 = vunpack.c.l.b16 %v46
  %v121 = vunpack.c.l.b16 %v47
  %v122 = vunpack.c.l.b16 %v48
  %v123 = vunpack.c.l.b16 %v49
  %v124 = vunpack.c.l.b16 %v50
  %v125 = vunpack.c.l.b16 %v51
  %v126 = vunpack.c.l.b16 %v52
  %v127 = vunpack.c.l.b16 %v53
  %v128 = vunpack.c.l.b16 %v54
  %v129 = vunpack.c.l.b16 %v55
  %v130 = vunpack.c.l.b16 %v56
  %v131 = vpack.c.b16 %v100, %v99
  %v132 = vpack.c.b16 %v102, %v101
  %v133 = vpack.c.b16 %v104, %v103
  %v134 = vpack.c.b16 %v106, %v105
  %v135 = vpack.c.b16 %v108, %v107
  %v136 = vpack.c.b16 %v110, %v109
  %v137 = vpack.c.b16 %v112, %v111
  %v138 = vpack.c.b16 %v114, %v113
  %v139 = vpack.c.b16 %v116, %v115
  %v140 = vpack.c.b16 %v118, %v117
  %v141 = vpack.c.b16 %v120, %v119
  %v142 = vpack.c.b16 %v122, %v121
  %v143 = vpack.c.b16 %v124, %v123
  %v144 = vpack.c.b16 %v126, %v125
  %v145 = vpack.c.b16 %v128, %v127
  %v146 = vpack.c.b16 %v130, %v129
  %163 = vmatprep.subr.bf16.mxu0 0
  %164 = vmatpush1.bf16.msra.mxu0 %v131
  %165 = vmatprep.subr.bf16.mxu0 0
  %166 = vmatpush1.bf16.msra.mxu0 %v132
  %167 = vmatprep.subr.bf16.mxu0 0
  %168 = vmatpush1.bf16.msra.mxu0 %v133
  %169 = vmatprep.subr.bf16.mxu0 0
  %170 = vmatpush1.bf16.msra.mxu0 %v134
  %171 = vmatprep.subr.bf16.mxu0 0
  %172 = vmatpush1.bf16.msra.mxu0 %v135
  %173 = vmatprep.subr.bf16.mxu0 0
  %174 = vmatpush1.bf16.msra.mxu0 %v136
  %175 = vmatprep.subr.bf16.mxu0 0
  %176 = vmatpush1.bf16.msra.mxu0 %v137
  %177 = vmatprep.subr.bf16.mxu0 0
  %178 = vmatpush1.bf16.msra.mxu0 %v138
  %179 = vmatprep.subr.bf16.mxu0 0
  %180 = vmatpush1.bf16.msra.mxu0 %v139
  %181 = vmatprep.subr.bf16.mxu0 0
  %182 = vmatpush1.bf16.msra.mxu0 %v140
  %183 = vmatprep.subr.bf16.mxu0 0
  %184 = vmatpush1.bf16.msra.mxu0 %v141
  %185 = vmatprep.subr.bf16.mxu0 0
  %186 = vmatpush1.bf16.msra.mxu0 %v142
  %187 = vmatprep.subr.bf16.mxu0 0
  %188 = vmatpush1.bf16.msra.mxu0 %v143
  %189 = vmatprep.subr.bf16.mxu0 0
  %190 = vmatpush1.bf16.msra.mxu0 %v144
  %191 = vmatprep.subr.bf16.mxu0 0
  %192 = vmatpush1.bf16.msra.mxu0 %v145
  %193 = vmatprep.subr.bf16.mxu0 0
  %194 = vmatpush1.bf16.msra.mxu0 %v146
  %195 = vmatprep.mubr.bf16.mxu0 %v64
  %196 = vmatmul.mubr.bf16.gmra.mrb[0].mxu0 %v63
  %v197 = vpop.f32.mrb[0].mxu0
  %v198 = vadd.f32 0.0, %v197
  %v199 = vpop.f32.mrb[0].mxu0
  %v200 = vpop.f32.mrb[0].mxu0
  %v201 = vadd.f32 0.0, %v200
  %v202 = vpop.f32.mrb[0].mxu0
  %203 = vdwg.mxu0
  %v204 = vadd.f32 %v21, %v198
  %v205 = vadd.f32 %v22, %v201
  %206 = vst [vmem:[#allocation2] sm:$0xff] %v204
  %207 = vst [vmem:[#allocation2 + $0x8] sm:$0xff] %v205
  // Predicated region
  $region18: #{mask_raft_forward.7} parent=0 // pred_check
    %p208 = pneg %p15
  $region19: #{mask_raft_forward.7} parent=0 // pred_check_branch
    %210 = sbr.rel (%p208) target = $region21
  $region20: #{mask_raft_forward.7} parent=0 // pred_region
    %v211 = vld [vmem:[#allocation2] sm:$0xff]
    %v212 = vld [vmem:[#allocation2 + $0x8] sm:$0xff]
    %v213 = vmul.f32 %v211, 0.0625
    %v214 = vmul.f32 %v212, 0.0625
    %v215 = vld [vmem:[%s2] sm:$0x1]
    %v217 = vlaneseq
    %v218 = vshrl.u32 %v217, 7
    %v219 = vsub.s32 0, %v218
    %v220 = vrot.slane %v215, %v219
    %v222 = vadd.f32 %v213, %v220
    %v223 = vadd.f32 %v214, %v220
    %224 = vst [vmem:[%s3] sm:$0xff] %v222
    %225 = vst [vmem:[%s3 + $0x8] sm:$0xff] %v223
  $region21: #{mask_raft_forward.7} parent=0 // pred_fallthru
    _
  // Predicated region
  $region22: #{mask_raft_forward.7} parent=0 // pred_check
    _
  $region23: #{mask_raft_forward.7} parent=0 // pred_check_branch
    %227 = sbr.rel (0) target = $region25
  $region24: #{mask_raft_forward.7} parent=0 // pred_region
    _
  $region25: #{mask_raft_forward.7} parent=0 // pred_fallthru
    _
  // Predicated region
  $region26: #{mask_raft_forward.7} parent=0 // pred_check
    _
  $region27: #{mask_raft_forward.7} parent=0 // pred_check_branch
    %229 = sbr.rel (0) target = $region29
  $region28: #{mask_raft_forward.7} parent=0 // pred_region
    _
  $region29: #{mask_raft_forward.7} parent=0 // pred_fallthru
    _

// kernel: mask_raft_forward.8
$region0: #{mask_raft_forward.8}
  #allocation0 [shape = 'u32[]', space=smem, size = 0x4, offset = 0x4, fixed_abs, tag = 'smem constant byte address 0x4 - core index']
  #allocation1 [shape = 'u32[144,128]{1,0:T(1,128)}', space=vmem, size = 0x12000, scoped, tag = 'internal scratch']
  %s0 = inlined_call_operand.vmem [shape: f32[16,128], index: 0, kind: input, shape index: {}, may-alias: {0,16}]
  %s1 = inlined_call_operand.vmem [shape: f32[16,128], index: 1, kind: input, shape index: {}]
  %s2 = inlined_call_operand.vmem [shape: f32[16,128], index: 2, kind: input, shape index: {}]
  %s3 = inlined_call_operand.vmem [shape: bf16[128,256], index: 3, kind: input, shape index: {}]
  %s4 = inlined_call_operand.vmem [shape: f32[1,256], index: 4, kind: input, shape index: {}]
  %s5 = inlined_call_operand.vmem [shape: bf16[256,128], index: 5, kind: input, shape index: {}]
  %s6 = inlined_call_operand.vmem [shape: f32[1,128], index: 6, kind: input, shape index: {}]
  %s7 = inlined_call_operand.vmem [shape: bf16[128,128], index: 7, kind: input, shape index: {}]
  %s8 = inlined_call_operand.vmem [shape: bf16[384,256], index: 8, kind: input, shape index: {}]
  %s9 = inlined_call_operand.vmem [shape: f32[1,256], index: 9, kind: input, shape index: {}]
  %s10 = inlined_call_operand.vmem [shape: bf16[384,128], index: 10, kind: input, shape index: {}]
  %s11 = inlined_call_operand.vmem [shape: f32[1,128], index: 11, kind: input, shape index: {}]
  %s12 = inlined_call_operand.vmem [shape: bf16[128,512], index: 12, kind: input, shape index: {}]
  %s13 = inlined_call_operand.vmem [shape: f32[1,512], index: 13, kind: input, shape index: {}]
  %s14 = inlined_call_operand.vmem [shape: bf16[512,768], index: 14, kind: input, shape index: {}]
  %s15 = inlined_call_operand.vmem [shape: f32[1,768], index: 15, kind: input, shape index: {}]
  %s16 = inlined_call_operand.vmem [shape: f32[16,128], index: 16, kind: output, shape index: {0}, may-alias: {0,16}]
  %s17 = inlined_call_operand.vmem [shape: f32[16,768], index: 17, kind: output, shape index: {1}]
  %18 = xla_tuple %s16, %s17
  %s19 = sld [smem:[#allocation0]]
  $region82: #{mask_raft_forward.8} parent=0
    _
  %s21 = ssub.s32 1, %s19
  %s22 = scalar_select 0, %s21, %s19
  // Predicated region
  $region2: #{mask_raft_forward.8} parent=0 // pred_check
    _
  $region3: #{mask_raft_forward.8} parent=0 // pred_check_branch
    %24 = sbr.rel (0) target = $region5
  $region4: #{mask_raft_forward.8} parent=0 // pred_region
    _
  $region5: #{mask_raft_forward.8} parent=0 // pred_fallthru
    _
  // Predicated region
  $region6: #{mask_raft_forward.8} parent=0 // pred_check
    _
  $region7: #{mask_raft_forward.8} parent=0 // pred_check_branch
    %26 = sbr.rel (0) target = $region9
  $region8: #{mask_raft_forward.8} parent=0 // pred_region
    _
  $region9: #{mask_raft_forward.8} parent=0 // pred_fallthru
    _
  // Predicated region
  $region10: #{mask_raft_forward.8} parent=0 // pred_check
    _
  $region11: #{mask_raft_forward.8} parent=0 // pred_check_branch
    %28 = sbr.rel (0) target = $region13
  $region12: #{mask_raft_forward.8} parent=0 // pred_region
    _
  $region13: #{mask_raft_forward.8} parent=0 // pred_fallthru
    _
  // Predicated region
  $region14: #{mask_raft_forward.8} parent=0 // pred_check
    _
  $region15: #{mask_raft_forward.8} parent=0 // pred_check_branch
    %30 = sbr.rel (0) target = $region17
  $region16: #{mask_raft_forward.8} parent=0 // pred_region
    _
  $region17: #{mask_raft_forward.8} parent=0 // pred_fallthru
    _
  // Predicated region
  $region18: #{mask_raft_forward.8} parent=0 // pred_check
    _
  $region19: #{mask_raft_forward.8} parent=0 // pred_check_branch
    %32 = sbr.rel (0) target = $region21
  $region20: #{mask_raft_forward.8} parent=0 // pred_region
    _
  $region21: #{mask_raft_forward.8} parent=0 // pred_fallthru
    _
  // Predicated region
  $region22: #{mask_raft_forward.8} parent=0 // pred_check
    _
  $region23: #{mask_raft_forward.8} parent=0 // pred_check_branch
    %34 = sbr.rel (0) target = $region25
  $region24: #{mask_raft_forward.8} parent=0 // pred_region
    _
  $region25: #{mask_raft_forward.8} parent=0 // pred_fallthru
    _
  // Predicated region
  $region26: #{mask_raft_forward.8} parent=0 // pred_check
    _
  $region27: #{mask_raft_forward.8} parent=0 // pred_check_branch
    %36 = sbr.rel (0) target = $region29
  $region28: #{mask_raft_forward.8} parent=0 // pred_region
    _
  $region29: #{mask_raft_forward.8} parent=0 // pred_fallthru
    _
  // Predicated region
  $region30: #{mask_raft_forward.8} parent=0 // pred_check
    _
  $region31: #{mask_raft_forward.8} parent=0 // pred_check_branch
    %38 = sbr.rel (0) target = $region33
  $region32: #{mask_raft_forward.8} parent=0 // pred_region
    _
  $region33: #{mask_raft_forward.8} parent=0 // pred_fallthru
    _
  // Predicated region
  $region34: #{mask_raft_forward.8} parent=0 // pred_check
    _
  $region35: #{mask_raft_forward.8} parent=0 // pred_check_branch
    %40 = sbr.rel (0) target = $region37
  $region36: #{mask_raft_forward.8} parent=0 // pred_region
    _
  $region37: #{mask_raft_forward.8} parent=0 // pred_fallthru
    _
  // Predicated region
  $region38: #{mask_raft_forward.8} parent=0 // pred_check
    _
  $region39: #{mask_raft_forward.8} parent=0 // pred_check_branch
    %42 = sbr.rel (0) target = $region41
  $region40: #{mask_raft_forward.8} parent=0 // pred_region
    _
  $region41: #{mask_raft_forward.8} parent=0 // pred_fallthru
    _
  // Predicated region
  $region42: #{mask_raft_forward.8} parent=0 // pred_check
    _
  $region43: #{mask_raft_forward.8} parent=0 // pred_check_branch
    %44 = sbr.rel (0) target = $region45
  $region44: #{mask_raft_forward.8} parent=0 // pred_region
    _
  $region45: #{mask_raft_forward.8} parent=0 // pred_fallthru
    _
  // Predicated region
  $region46: #{mask_raft_forward.8} parent=0 // pred_check
    _
  $region47: #{mask_raft_forward.8} parent=0 // pred_check_branch
    %46 = sbr.rel (0) target = $region49
  $region48: #{mask_raft_forward.8} parent=0 // pred_region
    _
  $region49: #{mask_raft_forward.8} parent=0 // pred_fallthru
    _
  // Predicated region
  $region50: #{mask_raft_forward.8} parent=0 // pred_check
    _
  $region51: #{mask_raft_forward.8} parent=0 // pred_check_branch
    %48 = sbr.rel (0) target = $region53
  $region52: #{mask_raft_forward.8} parent=0 // pred_region
    _
  $region53: #{mask_raft_forward.8} parent=0 // pred_fallthru
    _
  // Predicated region
  $region54: #{mask_raft_forward.8} parent=0 // pred_check
    _
  $region55: #{mask_raft_forward.8} parent=0 // pred_check_branch
    %50 = sbr.rel (0) target = $region57
  $region56: #{mask_raft_forward.8} parent=0 // pred_region
    _
  $region57: #{mask_raft_forward.8} parent=0 // pred_fallthru
    _
  // Predicated region
  $region58: #{mask_raft_forward.8} parent=0 // pred_check
    _
  $region59: #{mask_raft_forward.8} parent=0 // pred_check_branch
    %52 = sbr.rel (0) target = $region61
  $region60: #{mask_raft_forward.8} parent=0 // pred_region
    _
  $region61: #{mask_raft_forward.8} parent=0 // pred_fallthru
    _
  // Predicated region
  $region62: #{mask_raft_forward.8} parent=0 // pred_check
    _
  $region63: #{mask_raft_forward.8} parent=0 // pred_check_branch
    %54 = sbr.rel (0) target = $region65
  $region64: #{mask_raft_forward.8} parent=0 // pred_region
    _
  $region65: #{mask_raft_forward.8} parent=0 // pred_fallthru
    _
  %v56 = vld [vmem:[%s0] sm:$0xff]
  %v57 = vld [vmem:[%s0 + $0x8] sm:$0xff]
  %v58 = vld [vmem:[%s1] sm:$0xff]
  %v59 = vld [vmem:[%s1 + $0x8] sm:$0xff]
  %v60 = vld [vmem:[%s2] sm:$0xff]
  %v61 = vld [vmem:[%s2 + $0x8] sm:$0xff]
  %v62 = vpack.c.bf16 %v61, %v60
  %v63 = vld [vmem:[%s3] sm:$0xff]
  %v64 = vld [vmem:[%s3 + $0x8] sm:$0xff]
  %v65 = vld [vmem:[%s3 + $0x10] sm:$0xff]
  %v66 = vld [vmem:[%s3 + $0x18] sm:$0xff]
  %v67 = vld [vmem:[%s3 + $0x20] sm:$0xff]
  %v68 = vld [vmem:[%s3 + $0x28] sm:$0xff]
  %v69 = vld [vmem:[%s3 + $0x30] sm:$0xff]
  %v70 = vld [vmem:[%s3 + $0x38] sm:$0xff]
  %v71 = vld [vmem:[%s3 + $0x40] sm:$0xff]
  %v72 = vld [vmem:[%s3 + $0x48] sm:$0xff]
  %v73 = vld [vmem:[%s3 + $0x50] sm:$0xff]
  %v74 = vld [vmem:[%s3 + $0x58] sm:$0xff]
  %v75 = vld [vmem:[%s3 + $0x60] sm:$0xff]
  %v76 = vld [vmem:[%s3 + $0x68] sm:$0xff]
  %v77 = vld [vmem:[%s3 + $0x70] sm:$0xff]
  %v78 = vld [vmem:[%s3 + $0x78] sm:$0xff]
  %v79 = vld [vmem:[%s4] sm:$0x3]
  %v81 = vlaneseq
  %v82 = vshrl.u32 %v81, 7
  %v83 = vsub.s32 0, %v82
  %v84 = vrot.slane %v79, %v83
  %v85 = vlaneseq
  %v86 = vshrl.u32 %v85, 7
  %v87 = vsub.s32 1, %v86
  %v88 = vrot.slane %v79, %v87
  %v107 = vunpack.c.l.b16 %v63
  %v108 = vunpack.c.h.b16 %v63
  %v109 = vunpack.c.l.b16 %v64
  %v110 = vunpack.c.h.b16 %v64
  %v111 = vunpack.c.l.b16 %v65
  %v112 = vunpack.c.h.b16 %v65
  %v113 = vunpack.c.l.b16 %v66
  %v114 = vunpack.c.h.b16 %v66
  %v115 = vunpack.c.l.b16 %v67
  %v116 = vunpack.c.h.b16 %v67
  %v117 = vunpack.c.l.b16 %v68
  %v118 = vunpack.c.h.b16 %v68
  %v119 = vunpack.c.l.b16 %v69
  %v120 = vunpack.c.h.b16 %v69
  %v121 = vunpack.c.l.b16 %v70
  %v122 = vunpack.c.h.b16 %v70
  %v123 = vunpack.c.l.b16 %v71
  %v124 = vunpack.c.h.b16 %v71
  %v125 = vunpack.c.l.b16 %v72
  %v126 = vunpack.c.h.b16 %v72
  %v127 = vunpack.c.l.b16 %v73
  %v128 = vunpack.c.h.b16 %v73
  %v129 = vunpack.c.l.b16 %v74
  %v130 = vunpack.c.h.b16 %v74
  %v131 = vunpack.c.l.b16 %v75
  %v132 = vunpack.c.h.b16 %v75
  %v133 = vunpack.c.l.b16 %v76
  %v134 = vunpack.c.h.b16 %v76
  %v135 = vunpack.c.l.b16 %v77
  %v136 = vunpack.c.h.b16 %v77
  %v137 = vunpack.c.l.b16 %v78
  %v138 = vunpack.c.h.b16 %v78
  %v139 = vpack.c.b16 %v109, %v107
  %v140 = vpack.c.b16 %v110, %v108
  %v141 = vpack.c.b16 %v113, %v111
  %v142 = vpack.c.b16 %v114, %v112
  %v143 = vpack.c.b16 %v117, %v115
  %v144 = vpack.c.b16 %v118, %v116
  %v145 = vpack.c.b16 %v121, %v119
  %v146 = vpack.c.b16 %v122, %v120
  %v147 = vpack.c.b16 %v125, %v123
  %v148 = vpack.c.b16 %v126, %v124
  %v149 = vpack.c.b16 %v129, %v127
  %v150 = vpack.c.b16 %v130, %v128
  %v151 = vpack.c.b16 %v133, %v131
  %v152 = vpack.c.b16 %v134, %v132
  %v153 = vpack.c.b16 %v137, %v135
  %v154 = vpack.c.b16 %v138, %v136
  %171 = vmatprep.subr.bf16.mxu0 %v140
  %172 = vmatpush1.bf16.msra.mxu0 %v139
  %173 = vmatprep.subr.bf16.mxu0 %v142
  %174 = vmatpush1.bf16.msra.mxu0 %v141
  %175 = vmatprep.subr.bf16.mxu0 %v144
  %176 = vmatpush1.bf16.msra.mxu0 %v143
  %177 = vmatprep.subr.bf16.mxu0 %v146
  %178 = vmatpush1.bf16.msra.mxu0 %v145
  %179 = vmatprep.subr.bf16.mxu0 %v148
  %180 = vmatpush1.bf16.msra.mxu0 %v147
  %181 = vmatprep.subr.bf16.mxu0 %v150
  %182 = vmatpush1.bf16.msra.mxu0 %v149
  %183 = vmatprep.subr.bf16.mxu0 %v152
  %184 = vmatpush1.bf16.msra.mxu0 %v151
  %185 = vmatprep.subr.bf16.mxu0 %v154
  %186 = vmatpush1.bf16.msra.mxu0 %v153
  %187 = vmatprep.subr.bf16.mxu0 0
  %188 = vmatpush1.bf16.msra.mxu0 0
  %189 = vmatprep.subr.bf16.mxu0 0
  %190 = vmatpush1.bf16.msra.mxu0 0
  %191 = vmatprep.subr.bf16.mxu0 0
  %192 = vmatpush1.bf16.msra.mxu0 0
  %193 = vmatprep.subr.bf16.mxu0 0
  %194 = vmatpush1.bf16.msra.mxu0 0
  %195 = vmatprep.subr.bf16.mxu0 0
  %196 = vmatpush1.bf16.msra.mxu0 0
  %197 = vmatprep.subr.bf16.mxu0 0
  %198 = vmatpush1.bf16.msra.mxu0 0
  %199 = vmatprep.subr.bf16.mxu0 0
  %200 = vmatpush1.bf16.msra.mxu0 0
  %201 = vmatprep.subr.bf16.mxu0 0
  %202 = vmatpush1.bf16.msra.mxu0 0
  %203 = vmatprep.mubr.bf16.mxu0 0
  %204 = vmatmul.mubr.bf16.gmra.mrb[0].mxu0 %v62
  %v205 = vpop.f32.mrb[0].mxu0
  %v206 = vadd.f32 %v84, %v205
  %v207 = vpop.f32.mrb[0].mxu0
  %v208 = vadd.f32 %v88, %v207
  %v209 = vpop.f32.mrb[0].mxu0
  %v210 = vadd.f32 %v84, %v209
  %v211 = vpop.f32.mrb[0].mxu0
  %v212 = vadd.f32 %v88, %v211
  %213 = vdwg.mxu0
  %v214 = vmax.f32 %v206, 0.0
  %v215 = vmax.f32 %v208, 0.0
  %v216 = vmax.f32 %v210, 0.0
  %v217 = vmax.f32 %v212, 0.0
  %v218 = vpack.c.bf16 %v216, %v214
  %v219 = vpack.c.bf16 %v217, %v215
  %v220 = vld [vmem:[%s5] sm:$0xf]
  %v221 = vld [vmem:[%s5 + $0x4] sm:$0xf]
  %v222 = vld [vmem:[%s5 + $0x8] sm:$0xf]
  %v223 = vld [vmem:[%s5 + $0xc] sm:$0xf]
  %v224 = vld [vmem:[%s5 + $0x10] sm:$0xf]
  %v225 = vld [vmem:[%s5 + $0x14] sm:$0xf]
  %v226 = vld [vmem:[%s5 + $0x18] sm:$0xf]
  %v227 = vld [vmem:[%s5 + $0x1c] sm:$0xf]
  %v228 = vld [vmem:[%s5 + $0x20] sm:$0xf]
  %v229 = vld [vmem:[%s5 + $0x24] sm:$0xf]
  %v230 = vld [vmem:[%s5 + $0x28] sm:$0xf]
  %v231 = vld [vmem:[%s5 + $0x2c] sm:$0xf]
  %v232 = vld [vmem:[%s5 + $0x30] sm:$0xf]
  %v233 = vld [vmem:[%s5 + $0x34] sm:$0xf]
  %v234 = vld [vmem:[%s5 + $0x38] sm:$0xf]
  %v235 = vld [vmem:[%s5 + $0x3c] sm:$0xf]
  %v236 = vld [vmem:[%s5 + $0x40] sm:$0xf]
  %v237 = vld [vmem:[%s5 + $0x44] sm:$0xf]
  %v238 = vld [vmem:[%s5 + $0x48] sm:$0xf]
  %v239 = vld [vmem:[%s5 + $0x4c] sm:$0xf]
  %v240 = vld [vmem:[%s5 + $0x50] sm:$0xf]
  %v241 = vld [vmem:[%s5 + $0x54] sm:$0xf]
  %v242 = vld [vmem:[%s5 + $0x58] sm:$0xf]
  %v243 = vld [vmem:[%s5 + $0x5c] sm:$0xf]
  %v244 = vld [vmem:[%s5 + $0x60] sm:$0xf]
  %v245 = vld [vmem:[%s5 + $0x64] sm:$0xf]
  %v246 = vld [vmem:[%s5 + $0x68] sm:$0xf]
  %v247 = vld [vmem:[%s5 + $0x6c] sm:$0xf]
  %v248 = vld [vmem:[%s5 + $0x70] sm:$0xf]
  %v249 = vld [vmem:[%s5 + $0x74] sm:$0xf]
  %v250 = vld [vmem:[%s5 + $0x78] sm:$0xf]
  %v251 = vld [vmem:[%s5 + $0x7c] sm:$0xf]
  %v252 = vld [vmem:[%s6] sm:$0x1]
  %v254 = vlaneseq
  %v255 = vshrl.u32 %v254, 7
  %v256 = vsub.s32 0, %v255
  %v257 = vrot.slane %v252, %v256
  %v291 = vunpack.c.l.b16 %v220
  %v292 = vunpack.c.l.b16 %v221
  %v293 = vunpack.c.l.b16 %v222
  %v294 = vunpack.c.l.b16 %v223
  %v295 = vunpack.c.l.b16 %v224
  %v296 = vunpack.c.l.b16 %v225
  %v297 = vunpack.c.l.b16 %v226
  %v298 = vunpack.c.l.b16 %v227
  %v299 = vunpack.c.l.b16 %v228
  %v300 = vunpack.c.l.b16 %v229
  %v301 = vunpack.c.l.b16 %v230
  %v302 = vunpack.c.l.b16 %v231
  %v303 = vunpack.c.l.b16 %v232
  %v304 = vunpack.c.l.b16 %v233
  %v305 = vunpack.c.l.b16 %v234
  %v306 = vunpack.c.l.b16 %v235
  %v307 = vunpack.c.l.b16 %v236
  %v308 = vunpack.c.l.b16 %v237
  %v309 = vunpack.c.l.b16 %v238
  %v310 = vunpack.c.l.b16 %v239
  %v311 = vunpack.c.l.b16 %v240
  %v312 = vunpack.c.l.b16 %v241
  %v313 = vunpack.c.l.b16 %v242
  %v314 = vunpack.c.l.b16 %v243
  %v315 = vunpack.c.l.b16 %v244
  %v316 = vunpack.c.l.b16 %v245
  %v317 = vunpack.c.l.b16 %v246
  %v318 = vunpack.c.l.b16 %v247
  %v319 = vunpack.c.l.b16 %v248
  %v320 = vunpack.c.l.b16 %v249
  %v321 = vunpack.c.l.b16 %v250
  %v322 = vunpack.c.l.b16 %v251
  %v323 = vpack.c.b16 %v292, %v291
  %v324 = vpack.c.b16 %v294, %v293
  %v325 = vpack.c.b16 %v296, %v295
  %v326 = vpack.c.b16 %v298, %v297
  %v327 = vpack.c.b16 %v300, %v299
  %v328 = vpack.c.b16 %v302, %v301
  %v329 = vpack.c.b16 %v304, %v303
  %v330 = vpack.c.b16 %v306, %v305
  %v331 = vpack.c.b16 %v308, %v307
  %v332 = vpack.c.b16 %v310, %v309
  %v333 = vpack.c.b16 %v312, %v311
  %v334 = vpack.c.b16 %v314, %v313
  %v335 = vpack.c.b16 %v316, %v315
  %v336 = vpack.c.b16 %v318, %v317
  %v337 = vpack.c.b16 %v320, %v319
  %v338 = vpack.c.b16 %v322, %v321
  %355 = vmatprep.subr.bf16.mxu0 0
  %356 = vmatpush1.bf16.msra.mxu0 %v323
  %357 = vmatprep.subr.bf16.mxu0 0
  %358 = vmatpush1.bf16.msra.mxu0 %v324
  %359 = vmatprep.subr.bf16.mxu0 0
  %360 = vmatpush1.bf16.msra.mxu0 %v325
  %361 = vmatprep.subr.bf16.mxu0 0
  %362 = vmatpush1.bf16.msra.mxu0 %v326
  %363 = vmatprep.subr.bf16.mxu0 0
  %364 = vmatpush1.bf16.msra.mxu0 %v327
  %365 = vmatprep.subr.bf16.mxu0 0
  %366 = vmatpush1.bf16.msra.mxu0 %v328
  %367 = vmatprep.subr.bf16.mxu0 0
  %368 = vmatpush1.bf16.msra.mxu0 %v329
  %369 = vmatprep.subr.bf16.mxu0 0
  %370 = vmatpush1.bf16.msra.mxu0 %v330
  %371 = vmatprep.subr.bf16.mxu0 0
  %372 = vmatpush1.bf16.msra.mxu0 %v331
  %373 = vmatprep.subr.bf16.mxu0 0
  %374 = vmatpush1.bf16.msra.mxu0 %v332
  %375 = vmatprep.subr.bf16.mxu0 0
  %376 = vmatpush1.bf16.msra.mxu0 %v333
  %377 = vmatprep.subr.bf16.mxu0 0
  %378 = vmatpush1.bf16.msra.mxu0 %v334
  %379 = vmatprep.subr.bf16.mxu0 0
  %380 = vmatpush1.bf16.msra.mxu0 %v335
  %381 = vmatprep.subr.bf16.mxu0 0
  %382 = vmatpush1.bf16.msra.mxu0 %v336
  %383 = vmatprep.subr.bf16.mxu0 0
  %384 = vmatpush1.bf16.msra.mxu0 %v337
  %385 = vmatprep.subr.bf16.mxu0 0
  %386 = vmatpush1.bf16.msra.mxu0 %v338
  %387 = vmatprep.mubr.bf16.mxu0 %v219
  %388 = vmatmul.mubr.bf16.gmra.mrb[0].mxu0 %v218
  %v389 = vpop.f32.mrb[0].mxu0
  %v390 = vadd.f32 %v257, %v389
  %v391 = vpop.f32.mrb[0].mxu0
  %v392 = vpop.f32.mrb[0].mxu0
  %v393 = vadd.f32 %v257, %v392
  %v394 = vpop.f32.mrb[0].mxu0
  %395 = vdwg.mxu0
  %v396 = vmax.f32 %v390, 0.0
  %v397 = vmax.f32 %v393, 0.0
  %v398 = vld [vmem:[%s7] sm:$0xf]
  %v399 = vld [vmem:[%s7 + $0x4] sm:$0xf]
  %v400 = vld [vmem:[%s7 + $0x8] sm:$0xf]
  %v401 = vld [vmem:[%s7 + $0xc] sm:$0xf]
  %v402 = vld [vmem:[%s7 + $0x10] sm:$0xf]
  %v403 = vld [vmem:[%s7 + $0x14] sm:$0xf]
  %v404 = vld [vmem:[%s7 + $0x18] sm:$0xf]
  %v405 = vld [vmem:[%s7 + $0x1c] sm:$0xf]
  %v406 = vld [vmem:[%s7 + $0x20] sm:$0xf]
  %v407 = vld [vmem:[%s7 + $0x24] sm:$0xf]
  %v408 = vld [vmem:[%s7 + $0x28] sm:$0xf]
  %v409 = vld [vmem:[%s7 + $0x2c] sm:$0xf]
  %v410 = vld [vmem:[%s7 + $0x30] sm:$0xf]
  %v411 = vld [vmem:[%s7 + $0x34] sm:$0xf]
  %v412 = vld [vmem:[%s7 + $0x38] sm:$0xf]
  %v413 = vld [vmem:[%s7 + $0x3c] sm:$0xf]
  %v430 = vunpack.c.l.b16 %v398
  %v431 = vunpack.c.l.b16 %v399
  %v432 = vunpack.c.l.b16 %v400
  %v433 = vunpack.c.l.b16 %v401
  %v434 = vunpack.c.l.b16 %v402
  %v435 = vunpack.c.l.b16 %v403
  %v436 = vunpack.c.l.b16 %v404
  %v437 = vunpack.c.l.b16 %v405
  %v438 = vunpack.c.l.b16 %v406
  %v439 = vunpack.c.l.b16 %v407
  %v440 = vunpack.c.l.b16 %v408
  %v441 = vunpack.c.l.b16 %v409
  %v442 = vunpack.c.l.b16 %v410
  %v443 = vunpack.c.l.b16 %v411
  %v444 = vunpack.c.l.b16 %v412
  %v445 = vunpack.c.l.b16 %v413
  %v446 = vpack.c.b16 %v431, %v430
  %v447 = vpack.c.b16 %v433, %v432
  %v448 = vpack.c.b16 %v435, %v434
  %v449 = vpack.c.b16 %v437, %v436
  %v450 = vpack.c.b16 %v439, %v438
  %v451 = vpack.c.b16 %v441, %v440
  %v452 = vpack.c.b16 %v443, %v442
  %v453 = vpack.c.b16 %v445, %v444
  %462 = vmatprep.subr.bf16.mxu0 0
  %463 = vmatpush1.bf16.msra.mxu0 %v446
  %464 = vmatprep.subr.bf16.mxu0 0
  %465 = vmatpush1.bf16.msra.mxu0 %v447
  %466 = vmatprep.subr.bf16.mxu0 0
  %467 = vmatpush1.bf16.msra.mxu0 %v448
  %468 = vmatprep.subr.bf16.mxu0 0
  %469 = vmatpush1.bf16.msra.mxu0 %v449
  %470 = vmatprep.subr.bf16.mxu0 0
  %471 = vmatpush1.bf16.msra.mxu0 %v450
  %472 = vmatprep.subr.bf16.mxu0 0
  %473 = vmatpush1.bf16.msra.mxu0 %v451
  %474 = vmatprep.subr.bf16.mxu0 0
  %475 = vmatpush1.bf16.msra.mxu0 %v452
  %476 = vmatprep.subr.bf16.mxu0 0
  %477 = vmatpush1.bf16.msra.mxu0 %v453
  %478 = vmatprep.subr.bf16.mxu0 0
  %479 = vmatpush1.bf16.msra.mxu0 0
  %480 = vmatprep.subr.bf16.mxu0 0
  %481 = vmatpush1.bf16.msra.mxu0 0
  %482 = vmatprep.subr.bf16.mxu0 0
  %483 = vmatpush1.bf16.msra.mxu0 0
  %484 = vmatprep.subr.bf16.mxu0 0
  %485 = vmatpush1.bf16.msra.mxu0 0
  %486 = vmatprep.subr.bf16.mxu0 0
  %487 = vmatpush1.bf16.msra.mxu0 0
  %488 = vmatprep.subr.bf16.mxu0 0
  %489 = vmatpush1.bf16.msra.mxu0 0
  %490 = vmatprep.subr.bf16.mxu0 0
  %491 = vmatpush1.bf16.msra.mxu0 0
  %492 = vmatprep.subr.bf16.mxu0 0
  %493 = vmatpush1.bf16.msra.mxu0 0
  %494 = vmatprep.mubr.bf16.mxu0 0
  %495 = vmatmul.mubr.bf16.gmra.mrb[0].mxu0 %v62
  %v496 = vpop.f32.mrb[0].mxu0
  %v497 = vadd.f32 0.0, %v496
  %v498 = vpop.f32.mrb[0].mxu0
  %v499 = vpop.f32.mrb[0].mxu0
  %v500 = vadd.f32 0.0, %v499
  %v501 = vpop.f32.mrb[0].mxu0
  %502 = vdwg.mxu0
  %v503 = vadd.f32 %v396, %v497
  %v504 = vadd.f32 %v397, %v500
  %v505 = vpack.c.bf16 %v57, %v56
  %v506 = vpack.c.bf16 %v59, %v58
  %v507 = vpack.c.bf16 %v504, %v503
  %v508 = vld [vmem:[%s8] sm:$0xff]
  %v509 = vld [vmem:[%s8 + $0x8] sm:$0xff]
  %v510 = vld [vmem:[%s8 + $0x10] sm:$0xff]
  %v511 = vld [vmem:[%s8 + $0x18] sm:$0xff]
  %v512 = vld [vmem:[%s8 + $0x20] sm:$0xff]
  %v513 = vld [vmem:[%s8 + $0x28] sm:$0xff]
  %v514 = vld [vmem:[%s8 + $0x30] sm:$0xff]
  %v515 = vld [vmem:[%s8 + $0x38] sm:$0xff]
  %v516 = vld [vmem:[%s8 + $0x40] sm:$0xff]
  %v517 = vld [vmem:[%s8 + $0x48] sm:$0xff]
  %v518 = vld [vmem:[%s8 + $0x50] sm:$0xff]
  %v519 = vld [vmem:[%s8 + $0x58] sm:$0xff]
  %v520 = vld [vmem:[%s8 + $0x60] sm:$0xff]
  %v521 = vld [vmem:[%s8 + $0x68] sm:$0xff]
  %v522 = vld [vmem:[%s8 + $0x70] sm:$0xff]
  %v523 = vld [vmem:[%s8 + $0x78] sm:$0xff]
  %v524 = vld [vmem:[%s8 + $0x80] sm:$0xff]
  %v525 = vld [vmem:[%s8 + $0x88] sm:$0xff]
  %v526 = vld [vmem:[%s8 + $0x90] sm:$0xff]
  %v527 = vld [vmem:[%s8 + $0x98] sm:$0xff]
  %v528 = vld [vmem:[%s8 + $0xa0] sm:$0xff]
  %v529 = vld [vmem:[%s8 + $0xa8] sm:$0xff]
  %v530 = vld [vmem:[%s8 + $0xb0] sm:$0xff]
  %v531 = vld [vmem:[%s8 + $0xb8] sm:$0xff]
  %v532 = vld [vmem:[%s8 + $0xc0] sm:$0xff]
  %v533 = vld [vmem:[%s8 + $0xc8] sm:$0xff]
  %v534 = vld [vmem:[%s8 + $0xd0] sm:$0xff]
  %v535 = vld [vmem:[%s8 + $0xd8] sm:$0xff]
  %v536 = vld [vmem:[%s8 + $0xe0] sm:$0xff]
  %v537 = vld [vmem:[%s8 + $0xe8] sm:$0xff]
  %v538 = vld [vmem:[%s8 + $0xf0] sm:$0xff]
  %v539 = vld [vmem:[%s8 + $0xf8] sm:$0xff]
  %v540 = vld [vmem:[%s8 + $0x100] sm:$0xff]
  %v541 = vld [vmem:[%s8 + $0x108] sm:$0xff]
  %v542 = vld [vmem:[%s8 + $0x110] sm:$0xff]
  %v543 = vld [vmem:[%s8 + $0x118] sm:$0xff]
  %v544 = vld [vmem:[%s8 + $0x120] sm:$0xff]
  %v545 = vld [vmem:[%s8 + $0x128] sm:$0xff]
  %v546 = vld [vmem:[%s8 + $0x130] sm:$0xff]
  %v547 = vld [vmem:[%s8 + $0x138] sm:$0xff]
  %v548 = vld [vmem:[%s8 + $0x140] sm:$0xff]
  %v549 = vld [vmem:[%s8 + $0x148] sm:$0xff]
  %v550 = vld [vmem:[%s8 + $0x150] sm:$0xff]
  %v551 = vld [vmem:[%s8 + $0x158] sm:$0xff]
  %v552 = vld [vmem:[%s8 + $0x160] sm:$0xff]
  %v553 = vld [vmem:[%s8 + $0x168] sm:$0xff]
  %v554 = vld [vmem:[%s8 + $0x170] sm:$0xff]
  %v555 = vld [vmem:[%s8 + $0x178] sm:$0xff]
  %v556 = vld [vmem:[%s9] sm:$0x3]
  %v558 = vlaneseq
  %v559 = vshrl.u32 %v558, 7
  %v560 = vsub.s32 0, %v559
  %v561 = vrot.slane %v556, %v560
  %v562 = vlaneseq
  %v563 = vshrl.u32 %v562, 7
  %v564 = vsub.s32 1, %v563
  %v565 = vrot.slane %v556, %v564
  %v616 = vunpack.c.l.b16 %v508
  %v617 = vunpack.c.h.b16 %v508
  %v618 = vunpack.c.l.b16 %v509
  %v619 = vunpack.c.h.b16 %v509
  %v620 = vunpack.c.l.b16 %v510
  %v621 = vunpack.c.h.b16 %v510
  %v622 = vunpack.c.l.b16 %v511
  %v623 = vunpack.c.h.b16 %v511
  %v624 = vunpack.c.l.b16 %v512
  %v625 = vunpack.c.h.b16 %v512
  %v626 = vunpack.c.l.b16 %v513
  %v627 = vunpack.c.h.b16 %v513
  %v628 = vunpack.c.l.b16 %v514
  %v629 = vunpack.c.h.b16 %v514
  %v630 = vunpack.c.l.b16 %v515
  %v631 = vunpack.c.h.b16 %v515
  %v632 = vunpack.c.l.b16 %v516
  %v633 = vunpack.c.h.b16 %v516
  %v634 = vunpack.c.l.b16 %v517
  %v635 = vunpack.c.h.b16 %v517
  %v636 = vunpack.c.l.b16 %v518
  %v637 = vunpack.c.h.b16 %v518
  %v638 = vunpack.c.l.b16 %v519
  %v639 = vunpack.c.h.b16 %v519
  %v640 = vunpack.c.l.b16 %v520
  %v641 = vunpack.c.h.b16 %v520
  %v642 = vunpack.c.l.b16 %v521
  %v643 = vunpack.c.h.b16 %v521
  %v644 = vunpack.c.l.b16 %v522
  %v645 = vunpack.c.h.b16 %v522
  %v646 = vunpack.c.l.b16 %v523
  %v647 = vunpack.c.h.b16 %v523
  %v648 = vunpack.c.l.b16 %v524
  %v649 = vunpack.c.h.b16 %v524
  %v650 = vunpack.c.l.b16 %v525
  %v651 = vunpack.c.h.b16 %v525
  %v652 = vunpack.c.l.b16 %v526
  %v653 = vunpack.c.h.b16 %v526
  %v654 = vunpack.c.l.b16 %v527
  %v655 = vunpack.c.h.b16 %v527
  %v656 = vunpack.c.l.b16 %v528
  %v657 = vunpack.c.h.b16 %v528
  %v658 = vunpack.c.l.b16 %v529
  %v659 = vunpack.c.h.b16 %v529
  %v660 = vunpack.c.l.b16 %v530
  %v661 = vunpack.c.h.b16 %v530
  %v662 = vunpack.c.l.b16 %v531
  %v663 = vunpack.c.h.b16 %v531
  %v664 = vunpack.c.l.b16 %v532
  %v665 = vunpack.c.h.b16 %v532
  %v666 = vunpack.c.l.b16 %v533
  %v667 = vunpack.c.h.b16 %v533
  %v668 = vunpack.c.l.b16 %v534
  %v669 = vunpack.c.h.b16 %v534
  %v670 = vunpack.c.l.b16 %v535
  %v671 = vunpack.c.h.b16 %v535
  %v672 = vunpack.c.l.b16 %v536
  %v673 = vunpack.c.h.b16 %v536
  %v674 = vunpack.c.l.b16 %v537
  %v675 = vunpack.c.h.b16 %v537
  %v676 = vunpack.c.l.b16 %v538
  %v677 = vunpack.c.h.b16 %v538
  %v678 = vunpack.c.l.b16 %v539
  %v679 = vunpack.c.h.b16 %v539
  %v680 = vunpack.c.l.b16 %v540
  %v681 = vunpack.c.h.b16 %v540
  %v682 = vunpack.c.l.b16 %v541
  %v683 = vunpack.c.h.b16 %v541
  %v684 = vunpack.c.l.b16 %v542
  %v685 = vunpack.c.h.b16 %v542
  %v686 = vunpack.c.l.b16 %v543
  %v687 = vunpack.c.h.b16 %v543
  %v688 = vunpack.c.l.b16 %v544
  %v689 = vunpack.c.h.b16 %v544
  %v690 = vunpack.c.l.b16 %v545
  %v691 = vunpack.c.h.b16 %v545
  %v692 = vunpack.c.l.b16 %v546
  %v693 = vunpack.c.h.b16 %v546
  %v694 = vunpack.c.l.b16 %v547
  %v695 = vunpack.c.h.b16 %v547
  %v696 = vunpack.c.l.b16 %v548
  %v697 = vunpack.c.h.b16 %v548
  %v698 = vunpack.c.l.b16 %v549
  %v699 = vunpack.c.h.b16 %v549
  %v700 = vunpack.c.l.b16 %v550
  %v701 = vunpack.c.h.b16 %v550
  %v702 = vunpack.c.l.b16 %v551
  %v703 = vunpack.c.h.b16 %v551
  %v704 = vunpack.c.l.b16 %v552
  %v705 = vunpack.c.h.b16 %v552
  %v706 = vunpack.c.l.b16 %v553
  %v707 = vunpack.c.h.b16 %v553
  %v708 = vunpack.c.l.b16 %v554
  %v709 = vunpack.c.h.b16 %v554
  %v710 = vunpack.c.l.b16 %v555
  %v711 = vunpack.c.h.b16 %v555
  %v712 = vpack.c.b16 %v618, %v616
  %v713 = vpack.c.b16 %v619, %v617
  %v714 = vpack.c.b16 %v622, %v620
  %v715 = vpack.c.b16 %v623, %v621
  %v716 = vpack.c.b16 %v626, %v624
  %v717 = vpack.c.b16 %v627, %v625
  %v718 = vpack.c.b16 %v630, %v628
  %v719 = vpack.c.b16 %v631, %v629
  %v720 = vpack.c.b16 %v634, %v632
  %v721 = vpack.c.b16 %v635, %v633
  %v722 = vpack.c.b16 %v638, %v636
  %v723 = vpack.c.b16 %v639, %v637
  %v724 = vpack.c.b16 %v642, %v640
  %v725 = vpack.c.b16 %v643, %v641
  %v726 = vpack.c.b16 %v646, %v644
  %v727 = vpack.c.b16 %v647, %v645
  %v728 = vpack.c.b16 %v650, %v648
  %v729 = vpack.c.b16 %v651, %v649
  %v730 = vpack.c.b16 %v654, %v652
  %v731 = vpack.c.b16 %v655, %v653
  %v732 = vpack.c.b16 %v658, %v656
  %v733 = vpack.c.b16 %v659, %v657
  %v734 = vpack.c.b16 %v662, %v660
  %v735 = vpack.c.b16 %v663, %v661
  %v736 = vpack.c.b16 %v666, %v664
  %v737 = vpack.c.b16 %v667, %v665
  %v738 = vpack.c.b16 %v670, %v668
  %v739 = vpack.c.b16 %v671, %v669
  %v740 = vpack.c.b16 %v674, %v672
  %v741 = vpack.c.b16 %v675, %v673
  %v742 = vpack.c.b16 %v678, %v676
  %v743 = vpack.c.b16 %v679, %v677
  %v744 = vpack.c.b16 %v682, %v680
  %v745 = vpack.c.b16 %v683, %v681
  %v746 = vpack.c.b16 %v686, %v684
  %v747 = vpack.c.b16 %v687, %v685
  %v748 = vpack.c.b16 %v690, %v688
  %v749 = vpack.c.b16 %v691, %v689
  %v750 = vpack.c.b16 %v694, %v692
  %v751 = vpack.c.b16 %v695, %v693
  %v752 = vpack.c.b16 %v698, %v696
  %v753 = vpack.c.b16 %v699, %v697
  %v754 = vpack.c.b16 %v702, %v700
  %v755 = vpack.c.b16 %v703, %v701
  %v756 = vpack.c.b16 %v706, %v704
  %v757 = vpack.c.b16 %v707, %v705
  %v758 = vpack.c.b16 %v710, %v708
  %v759 = vpack.c.b16 %v711, %v709
  %808 = vmatprep.subr.bf16.mxu0 %v713
  %809 = vmatpush1.bf16.msra.mxu0 %v712
  %810 = vmatprep.subr.bf16.mxu0 %v715
  %811 = vmatpush1.bf16.msra.mxu0 %v714
  %812 = vmatprep.subr.bf16.mxu0 %v717
  %813 = vmatpush1.bf16.msra.mxu0 %v716
  %814 = vmatprep.subr.bf16.mxu0 %v719
  %815 = vmatpush1.bf16.msra.mxu0 %v718
  %816 = vmatprep.subr.bf16.mxu0 %v721
  %817 = vmatpush1.bf16.msra.mxu0 %v720
  %818 = vmatprep.subr.bf16.mxu0 %v723
  %819 = vmatpush1.bf16.msra.mxu0 %v722
  %820 = vmatprep.subr.bf16.mxu0 %v725
  %821 = vmatpush1.bf16.msra.mxu0 %v724
  %822 = vmatprep.subr.bf16.mxu0 %v727
  %823 = vmatpush1.bf16.msra.mxu0 %v726
  %824 = vmatprep.subr.bf16.mxu0 %v729
  %825 = vmatpush1.bf16.msra.mxu0 %v728
  %826 = vmatprep.subr.bf16.mxu0 %v731
  %827 = vmatpush1.bf16.msra.mxu0 %v730
  %828 = vmatprep.subr.bf16.mxu0 %v733
  %829 = vmatpush1.bf16.msra.mxu0 %v732
  %830 = vmatprep.subr.bf16.mxu0 %v735
  %831 = vmatpush1.bf16.msra.mxu0 %v734
  %832 = vmatprep.subr.bf16.mxu0 %v737
  %833 = vmatpush1.bf16.msra.mxu0 %v736
  %834 = vmatprep.subr.bf16.mxu0 %v739
  %835 = vmatpush1.bf16.msra.mxu0 %v738
  %836 = vmatprep.subr.bf16.mxu0 %v741
  %837 = vmatpush1.bf16.msra.mxu0 %v740
  %838 = vmatprep.subr.bf16.mxu0 %v743
  %839 = vmatpush1.bf16.msra.mxu0 %v742
  %840 = vmatprep.mubr.bf16.mxu0 %v506
  %841 = vmatmul.mubr.bf16.gmra.mrb[0].mxu0 %v505
  %v842 = vpop.f32.mrb[0].mxu0
  %v843 = vadd.f32 %v561, %v842
  %v844 = vpop.f32.mrb[0].mxu0
  %v845 = vadd.f32 %v565, %v844
  %v846 = vpop.f32.mrb[0].mxu0
  %v847 = vadd.f32 %v561, %v846
  %v848 = vpop.f32.mrb[0].mxu0
  %v849 = vadd.f32 %v565, %v848
  %850 = vdwg.mxu0
  %851 = vmatprep.subr.bf16.mxu0 %v745
  %852 = vmatpush1.bf16.msra.mxu0 %v744
  %853 = vmatprep.subr.bf16.mxu0 %v747
  %854 = vmatpush1.bf16.msra.mxu0 %v746
  %855 = vmatprep.subr.bf16.mxu0 %v749
  %856 = vmatpush1.bf16.msra.mxu0 %v748
  %857 = vmatprep.subr.bf16.mxu0 %v751
  %858 = vmatpush1.bf16.msra.mxu0 %v750
  %859 = vmatprep.subr.bf16.mxu0 %v753
  %860 = vmatpush1.bf16.msra.mxu0 %v752
  %861 = vmatprep.subr.bf16.mxu0 %v755
  %862 = vmatpush1.bf16.msra.mxu0 %v754
  %863 = vmatprep.subr.bf16.mxu0 %v757
  %864 = vmatpush1.bf16.msra.mxu0 %v756
  %865 = vmatprep.subr.bf16.mxu0 %v759
  %866 = vmatpush1.bf16.msra.mxu0 %v758
  %867 = vmatprep.subr.bf16.mxu0 0
  %868 = vmatpush1.bf16.msra.mxu0 0
  %869 = vmatprep.subr.bf16.mxu0 0
  %870 = vmatpush1.bf16.msra.mxu0 0
  %871 = vmatprep.subr.bf16.mxu0 0
  %872 = vmatpush1.bf16.msra.mxu0 0
  %873 = vmatprep.subr.bf16.mxu0 0
  %874 = vmatpush1.bf16.msra.mxu0 0
  %875 = vmatprep.subr.bf16.mxu0 0
  %876 = vmatpush1.bf16.msra.mxu0 0
  %877 = vmatprep.subr.bf16.mxu0 0
  %878 = vmatpush1.bf16.msra.mxu0 0
  %879 = vmatprep.subr.bf16.mxu0 0
  %880 = vmatpush1.bf16.msra.mxu0 0
  %881 = vmatprep.subr.bf16.mxu0 0
  %882 = vmatpush1.bf16.msra.mxu0 0
  %883 = vmatprep.mubr.bf16.mxu0 0
  %884 = vmatmul.mubr.bf16.gmra.mrb[0].mxu0 %v507
  %v885 = vpop.f32.mrb[0].mxu0
  %v886 = vadd.f32 %v843, %v885
  %v887 = vpop.f32.mrb[0].mxu0
  %v888 = vadd.f32 %v845, %v887
  %v889 = vpop.f32.mrb[0].mxu0
  %v890 = vadd.f32 %v847, %v889
  %v891 = vpop.f32.mrb[0].mxu0
  %v892 = vadd.f32 %v849, %v891
  %893 = vdwg.mxu0
  %v894 = vxor.u32 %v886, 2147483648
  %v895 = vxor.u32 %v888, 2147483648
  %v896 = vxor.u32 %v890, 2147483648
  %v897 = vxor.u32 %v892, 2147483648
  %v898 = vmul.f32 %v894, 1.442695
  %v899 = vpow.pop %v898
  %v900 = vmul.f32 %v895, 1.442695
  %v901 = vpow.pop %v900
  %v902 = vmul.f32 %v896, 1.442695
  %v903 = vpow.pop %v902
  %v904 = vmul.f32 %v897, 1.442695
  %v905 = vpow.pop %v904
  %v906 = vadd.f32 %v899, 1.0
  %v907 = vadd.f32 %v901, 1.0
  %v908 = vadd.f32 %v903, 1.0
  %v909 = vadd.f32 %v905, 1.0
  %v910 = vrcp.pop %v906
  %v911 = vmul.f32 1.0, %v910
  %v912 = vrcp.pop %v907
  %v913 = vmul.f32 1.0, %v912
  %v914 = vrcp.pop %v908
  %v915 = vmul.f32 1.0, %v914
  %v916 = vrcp.pop %v909
  %v917 = vmul.f32 1.0, %v916
  %v918 = vmul.f32 %v913, %v56
  %v919 = vmul.f32 %v917, %v57
  %v920 = vpack.c.bf16 %v919, %v918
  %v921 = vld [vmem:[%s10] sm:$0xf]
  %v922 = vld [vmem:[%s10 + $0x4] sm:$0xf]
  %v923 = vld [vmem:[%s10 + $0x8] sm:$0xf]
  %v924 = vld [vmem:[%s10 + $0xc] sm:$0xf]
  %v925 = vld [vmem:[%s10 + $0x10] sm:$0xf]
  %v926 = vld [vmem:[%s10 + $0x14] sm:$0xf]
  %v927 = vld [vmem:[%s10 + $0x18] sm:$0xf]
  %v928 = vld [vmem:[%s10 + $0x1c] sm:$0xf]
  %v929 = vld [vmem:[%s10 + $0x20] sm:$0xf]
  %v930 = vld [vmem:[%s10 + $0x24] sm:$0xf]
  %v931 = vld [vmem:[%s10 + $0x28] sm:$0xf]
  %v932 = vld [vmem:[%s10 + $0x2c] sm:$0xf]
  %v933 = vld [vmem:[%s10 + $0x30] sm:$0xf]
  %v934 = vld [vmem:[%s10 + $0x34] sm:$0xf]
  %v935 = vld [vmem:[%s10 + $0x38] sm:$0xf]
  %v936 = vld [vmem:[%s10 + $0x3c] sm:$0xf]
  %v937 = vld [vmem:[%s10 + $0x40] sm:$0xf]
  %v938 = vld [vmem:[%s10 + $0x44] sm:$0xf]
  %v939 = vld [vmem:[%s10 + $0x48] sm:$0xf]
  %v940 = vld [vmem:[%s10 + $0x4c] sm:$0xf]
  %v941 = vld [vmem:[%s10 + $0x50] sm:$0xf]
  %v942 = vld [vmem:[%s10 + $0x54] sm:$0xf]
  %v943 = vld [vmem:[%s10 + $0x58] sm:$0xf]
  %v944 = vld [vmem:[%s10 + $0x5c] sm:$0xf]
  %v945 = vld [vmem:[%s10 + $0x60] sm:$0xf]
  %v946 = vld [vmem:[%s10 + $0x64] sm:$0xf]
  %v947 = vld [vmem:[%s10 + $0x68] sm:$0xf]
  %v948 = vld [vmem:[%s10 + $0x6c] sm:$0xf]
  %v949 = vld [vmem:[%s10 + $0x70] sm:$0xf]
  %v950 = vld [vmem:[%s10 + $0x74] sm:$0xf]
  %v951 = vld [vmem:[%s10 + $0x78] sm:$0xf]
  %v952 = vld [vmem:[%s10 + $0x7c] sm:$0xf]
  %v953 = vld [vmem:[%s10 + $0x80] sm:$0xf]
  %v954 = vld [vmem:[%s10 + $0x84] sm:$0xf]
  %v955 = vld [vmem:[%s10 + $0x88] sm:$0xf]
  %v956 = vld [vmem:[%s10 + $0x8c] sm:$0xf]
  %v957 = vld [vmem:[%s10 + $0x90] sm:$0xf]
  %v958 = vld [vmem:[%s10 + $0x94] sm:$0xf]
  %v959 = vld [vmem:[%s10 + $0x98] sm:$0xf]
  %v960 = vld [vmem:[%s10 + $0x9c] sm:$0xf]
  %v961 = vld [vmem:[%s10 + $0xa0] sm:$0xf]
  %v962 = vld [vmem:[%s10 + $0xa4] sm:$0xf]
  %v963 = vld [vmem:[%s10 + $0xa8] sm:$0xf]
  %v964 = vld [vmem:[%s10 + $0xac] sm:$0xf]
  %v965 = vld [vmem:[%s10 + $0xb0] sm:$0xf]
  %v966 = vld [vmem:[%s10 + $0xb4] sm:$0xf]
  %v967 = vld [vmem:[%s10 + $0xb8] sm:$0xf]
  %v968 = vld [vmem:[%s10 + $0xbc] sm:$0xf]
  %v969 = vld [vmem:[%s11] sm:$0x1]
  %v971 = vlaneseq
  %v972 = vshrl.u32 %v971, 7
  %v973 = vsub.s32 0, %v972
  %v974 = vrot.slane %v969, %v973
  %v1024 = vunpack.c.l.b16 %v921
  %v1025 = vunpack.c.l.b16 %v922
  %v1026 = vunpack.c.l.b16 %v923
  %v1027 = vunpack.c.l.b16 %v924
  %v1028 = vunpack.c.l.b16 %v925
  %v1029 = vunpack.c.l.b16 %v926
  %v1030 = vunpack.c.l.b16 %v927
  %v1031 = vunpack.c.l.b16 %v928
  %v1032 = vunpack.c.l.b16 %v929
  %v1033 = vunpack.c.l.b16 %v930
  %v1034 = vunpack.c.l.b16 %v931
  %v1035 = vunpack.c.l.b16 %v932
  %v1036 = vunpack.c.l.b16 %v933
  %v1037 = vunpack.c.l.b16 %v934
  %v1038 = vunpack.c.l.b16 %v935
  %v1039 = vunpack.c.l.b16 %v936
  %v1040 = vunpack.c.l.b16 %v937
  %v1041 = vunpack.c.l.b16 %v938
  %v1042 = vunpack.c.l.b16 %v939
  %v1043 = vunpack.c.l.b16 %v940
  %v1044 = vunpack.c.l.b16 %v941
  %v1045 = vunpack.c.l.b16 %v942
  %v1046 = vunpack.c.l.b16 %v943
  %v1047 = vunpack.c.l.b16 %v944
  %v1048 = vunpack.c.l.b16 %v945
  %v1049 = vunpack.c.l.b16 %v946
  %v1050 = vunpack.c.l.b16 %v947
  %v1051 = vunpack.c.l.b16 %v948
  %v1052 = vunpack.c.l.b16 %v949
  %v1053 = vunpack.c.l.b16 %v950
  %v1054 = vunpack.c.l.b16 %v951
  %v1055 = vunpack.c.l.b16 %v952
  %v1056 = vunpack.c.l.b16 %v953
  %v1057 = vunpack.c.l.b16 %v954
  %v1058 = vunpack.c.l.b16 %v955
  %v1059 = vunpack.c.l.b16 %v956
  %v1060 = vunpack.c.l.b16 %v957
  %v1061 = vunpack.c.l.b16 %v958
  %v1062 = vunpack.c.l.b16 %v959
  %v1063 = vunpack.c.l.b16 %v960
  %v1064 = vunpack.c.l.b16 %v961
  %v1065 = vunpack.c.l.b16 %v962
  %v1066 = vunpack.c.l.b16 %v963
  %v1067 = vunpack.c.l.b16 %v964
  %v1068 = vunpack.c.l.b16 %v965
  %v1069 = vunpack.c.l.b16 %v966
  %v1070 = vunpack.c.l.b16 %v967
  %v1071 = vunpack.c.l.b16 %v968
  %v1072 = vpack.c.b16 %v1025, %v1024
  %v1073 = vpack.c.b16 %v1027, %v1026
  %v1074 = vpack.c.b16 %v1029, %v1028
  %v1075 = vpack.c.b16 %v1031, %v1030
  %v1076 = vpack.c.b16 %v1033, %v1032
  %v1077 = vpack.c.b16 %v1035, %v1034
  %v1078 = vpack.c.b16 %v1037, %v1036
  %v1079 = vpack.c.b16 %v1039, %v1038
  %v1080 = vpack.c.b16 %v1041, %v1040
  %v1081 = vpack.c.b16 %v1043, %v1042
  %v1082 = vpack.c.b16 %v1045, %v1044
  %v1083 = vpack.c.b16 %v1047, %v1046
  %v1084 = vpack.c.b16 %v1049, %v1048
  %v1085 = vpack.c.b16 %v1051, %v1050
  %v1086 = vpack.c.b16 %v1053, %v1052
  %v1087 = vpack.c.b16 %v1055, %v1054
  %v1088 = vpack.c.b16 %v1057, %v1056
  %v1089 = vpack.c.b16 %v1059, %v1058
  %v1090 = vpack.c.b16 %v1061, %v1060
  %v1091 = vpack.c.b16 %v1063, %v1062
  %v1092 = vpack.c.b16 %v1065, %v1064
  %v1093 = vpack.c.b16 %v1067, %v1066
  %v1094 = vpack.c.b16 %v1069, %v1068
  %v1095 = vpack.c.b16 %v1071, %v1070
  %1120 = vmatprep.subr.bf16.mxu0 0
  %1121 = vmatpush1.bf16.msra.mxu0 %v1072
  %1122 = vmatprep.subr.bf16.mxu0 0
  %1123 = vmatpush1.bf16.msra.mxu0 %v1073
  %1124 = vmatprep.subr.bf16.mxu0 0
  %1125 = vmatpush1.bf16.msra.mxu0 %v1074
  %1126 = vmatprep.subr.bf16.mxu0 0
  %1127 = vmatpush1.bf16.msra.mxu0 %v1075
  %1128 = vmatprep.subr.bf16.mxu0 0
  %1129 = vmatpush1.bf16.msra.mxu0 %v1076
  %1130 = vmatprep.subr.bf16.mxu0 0
  %1131 = vmatpush1.bf16.msra.mxu0 %v1077
  %1132 = vmatprep.subr.bf16.mxu0 0
  %1133 = vmatpush1.bf16.msra.mxu0 %v1078
  %1134 = vmatprep.subr.bf16.mxu0 0
  %1135 = vmatpush1.bf16.msra.mxu0 %v1079
  %1136 = vmatprep.subr.bf16.mxu0 0
  %1137 = vmatpush1.bf16.msra.mxu0 %v1080
  %1138 = vmatprep.subr.bf16.mxu0 0
  %1139 = vmatpush1.bf16.msra.mxu0 %v1081
  %1140 = vmatprep.subr.bf16.mxu0 0
  %1141 = vmatpush1.bf16.msra.mxu0 %v1082
  %1142 = vmatprep.subr.bf16.mxu0 0
  %1143 = vmatpush1.bf16.msra.mxu0 %v1083
  %1144 = vmatprep.subr.bf16.mxu0 0
  %1145 = vmatpush1.bf16.msra.mxu0 %v1084
  %1146 = vmatprep.subr.bf16.mxu0 0
  %1147 = vmatpush1.bf16.msra.mxu0 %v1085
  %1148 = vmatprep.subr.bf16.mxu0 0
  %1149 = vmatpush1.bf16.msra.mxu0 %v1086
  %1150 = vmatprep.subr.bf16.mxu0 0
  %1151 = vmatpush1.bf16.msra.mxu0 %v1087
  %1152 = vmatprep.mubr.bf16.mxu0 %v506
  %1153 = vmatmul.mubr.bf16.gmra.mrb[0].mxu0 %v920
  %v1154 = vpop.f32.mrb[0].mxu0
  %v1155 = vadd.f32 %v974, %v1154
  %v1156 = vpop.f32.mrb[0].mxu0
  %v1157 = vpop.f32.mrb[0].mxu0
  %v1158 = vadd.f32 %v974, %v1157
  %v1159 = vpop.f32.mrb[0].mxu0
  %1160 = vdwg.mxu0
  %1161 = vmatprep.subr.bf16.mxu0 0
  %1162 = vmatpush1.bf16.msra.mxu0 %v1088
  %1163 = vmatprep.subr.bf16.mxu0 0
  %1164 = vmatpush1.bf16.msra.mxu0 %v1089
  %1165 = vmatprep.subr.bf16.mxu0 0
  %1166 = vmatpush1.bf16.msra.mxu0 %v1090
  %1167 = vmatprep.subr.bf16.mxu0 0
  %1168 = vmatpush1.bf16.msra.mxu0 %v1091
  %1169 = vmatprep.subr.bf16.mxu0 0
  %1170 = vmatpush1.bf16.msra.mxu0 %v1092
  %1171 = vmatprep.subr.bf16.mxu0 0
  %1172 = vmatpush1.bf16.msra.mxu0 %v1093
  %1173 = vmatprep.subr.bf16.mxu0 0
  %1174 = vmatpush1.bf16.msra.mxu0 %v1094
  %1175 = vmatprep.subr.bf16.mxu0 0
  %1176 = vmatpush1.bf16.msra.mxu0 %v1095
  %1177 = vmatprep.subr.bf16.mxu0 0
  %1178 = vmatpush1.bf16.msra.mxu0 0
  %1179 = vmatprep.subr.bf16.mxu0 0
  %1180 = vmatpush1.bf16.msra.mxu0 0
  %1181 = vmatprep.subr.bf16.mxu0 0
  %1182 = vmatpush1.bf16.msra.mxu0 0
  %1183 = vmatprep.subr.bf16.mxu0 0
  %1184 = vmatpush1.bf16.msra.mxu0 0
  %1185 = vmatprep.subr.bf16.mxu0 0
  %1186 = vmatpush1.bf16.msra.mxu0 0
  %1187 = vmatprep.subr.bf16.mxu0 0
  %1188 = vmatpush1.bf16.msra.mxu0 0
  %1189 = vmatprep.subr.bf16.mxu0 0
  %1190 = vmatpush1.bf16.msra.mxu0 0
  %1191 = vmatprep.subr.bf16.mxu0 0
  %1192 = vmatpush1.bf16.msra.mxu0 0
  %1193 = vmatprep.mubr.bf16.mxu0 0
  %1194 = vmatmul.mubr.bf16.gmra.mrb[0].mxu0 %v507
  %v1195 = vpop.f32.mrb[0].mxu0
  %v1196 = vadd.f32 %v1155, %v1195
  %v1197 = vpop.f32.mrb[0].mxu0
  %v1198 = vpop.f32.mrb[0].mxu0
  %v1199 = vadd.f32 %v1158, %v1198
  %v1200 = vpop.f32.mrb[0].mxu0
  %1201 = vdwg.mxu0
  %v1202 = vtanh.pop %v1196
  %v1203 = vtanh.pop %v1199
  %v1204 = vsub.f32 1.0, %v911
  %v1205 = vsub.f32 1.0, %v915
  %v1206 = vmul.f32 %v1204, %v56
  %v1207 = vmul.f32 %v1205, %v57
  %v1208 = vmul.f32 %v911, %v1202
  %v1209 = vmul.f32 %v915, %v1203
  %v1210 = vadd.f32 %v1206, %v1208
  %v1211 = vadd.f32 %v1207, %v1209
  %1212 = vst [vmem:[%s16] sm:$0xff] %v1210
  %1213 = vst [vmem:[%s16 + $0x8] sm:$0xff] %v1211
  %v1214 = vpack.c.bf16 %v1211, %v1210
  %v1215 = vld [vmem:[%s12] sm:$0xff]
  %v1216 = vld [vmem:[%s12 + $0x8] sm:$0xff]
  %v1217 = vld [vmem:[%s12 + $0x10] sm:$0xff]
  %v1218 = vld [vmem:[%s12 + $0x18] sm:$0xff]
  %v1219 = vld [vmem:[%s12 + $0x20] sm:$0xff]
  %v1220 = vld [vmem:[%s12 + $0x28] sm:$0xff]
  %v1221 = vld [vmem:[%s12 + $0x30] sm:$0xff]
  %v1222 = vld [vmem:[%s12 + $0x38] sm:$0xff]
  %v1223 = vld [vmem:[%s12 + $0x40] sm:$0xff]
  %v1224 = vld [vmem:[%s12 + $0x48] sm:$0xff]
  %v1225 = vld [vmem:[%s12 + $0x50] sm:$0xff]
  %v1226 = vld [vmem:[%s12 + $0x58] sm:$0xff]
  %v1227 = vld [vmem:[%s12 + $0x60] sm:$0xff]
  %v1228 = vld [vmem:[%s12 + $0x68] sm:$0xff]
  %v1229 = vld [vmem:[%s12 + $0x70] sm:$0xff]
  %v1230 = vld [vmem:[%s12 + $0x78] sm:$0xff]
  %v1231 = vld [vmem:[%s12 + $0x80] sm:$0xff]
  %v1232 = vld [vmem:[%s12 + $0x88] sm:$0xff]
  %v1233 = vld [vmem:[%s12 + $0x90] sm:$0xff]
  %v1234 = vld [vmem:[%s12 + $0x98] sm:$0xff]
  %v1235 = vld [vmem:[%s12 + $0xa0] sm:$0xff]
  %v1236 = vld [vmem:[%s12 + $0xa8] sm:$0xff]
  %v1237 = vld [vmem:[%s12 + $0xb0] sm:$0xff]
  %v1238 = vld [vmem:[%s12 + $0xb8] sm:$0xff]
  %v1239 = vld [vmem:[%s12 + $0xc0] sm:$0xff]
  %v1240 = vld [vmem:[%s12 + $0xc8] sm:$0xff]
  %v1241 = vld [vmem:[%s12 + $0xd0] sm:$0xff]
  %v1242 = vld [vmem:[%s12 + $0xd8] sm:$0xff]
  %v1243 = vld [vmem:[%s12 + $0xe0] sm:$0xff]
  %v1244 = vld [vmem:[%s12 + $0xe8] sm:$0xff]
  %v1245 = vld [vmem:[%s12 + $0xf0] sm:$0xff]
  %v1246 = vld [vmem:[%s12 + $0xf8] sm:$0xff]
  %v1247 = vld [vmem:[%s13] sm:$0xf]
  %v1249 = vlaneseq
  %v1250 = vshrl.u32 %v1249, 7
  %v1251 = vsub.s32 0, %v1250
  %v1252 = vrot.slane %v1247, %v1251
  %v1253 = vlaneseq
  %v1254 = vshrl.u32 %v1253, 7
  %v1255 = vsub.s32 1, %v1254
  %v1256 = vrot.slane %v1247, %v1255
  %v1257 = vlaneseq
  %v1258 = vshrl.u32 %v1257, 7
  %v1259 = vsub.s32 2, %v1258
  %v1260 = vrot.slane %v1247, %v1259
  %v1261 = vlaneseq
  %v1262 = vshrl.u32 %v1261, 7
  %v1263 = vsub.s32 3, %v1262
  %v1264 = vrot.slane %v1247, %v1263
  %v1301 = vunpack.c.l.b16 %v1215
  %v1302 = vunpack.c.h.b16 %v1215
  %v1303 = vunpack.c.l.b16 %v1216
  %v1304 = vunpack.c.h.b16 %v1216
  %v1305 = vunpack.c.l.b16 %v1217
  %v1306 = vunpack.c.h.b16 %v1217
  %v1307 = vunpack.c.l.b16 %v1218
  %v1308 = vunpack.c.h.b16 %v1218
  %v1309 = vunpack.c.l.b16 %v1219
  %v1310 = vunpack.c.h.b16 %v1219
  %v1311 = vunpack.c.l.b16 %v1220
  %v1312 = vunpack.c.h.b16 %v1220
  %v1313 = vunpack.c.l.b16 %v1221
  %v1314 = vunpack.c.h.b16 %v1221
  %v1315 = vunpack.c.l.b16 %v1222
  %v1316 = vunpack.c.h.b16 %v1222
  %v1317 = vunpack.c.l.b16 %v1223
  %v1318 = vunpack.c.h.b16 %v1223
  %v1319 = vunpack.c.l.b16 %v1224
  %v1320 = vunpack.c.h.b16 %v1224
  %v1321 = vunpack.c.l.b16 %v1225
  %v1322 = vunpack.c.h.b16 %v1225
  %v1323 = vunpack.c.l.b16 %v1226
  %v1324 = vunpack.c.h.b16 %v1226
  %v1325 = vunpack.c.l.b16 %v1227
  %v1326 = vunpack.c.h.b16 %v1227
  %v1327 = vunpack.c.l.b16 %v1228
  %v1328 = vunpack.c.h.b16 %v1228
  %v1329 = vunpack.c.l.b16 %v1229
  %v1330 = vunpack.c.h.b16 %v1229
  %v1331 = vunpack.c.l.b16 %v1230
  %v1332 = vunpack.c.h.b16 %v1230
  %v1333 = vunpack.c.l.b16 %v1231
  %v1334 = vunpack.c.h.b16 %v1231
  %v1335 = vunpack.c.l.b16 %v1232
  %v1336 = vunpack.c.h.b16 %v1232
  %v1337 = vunpack.c.l.b16 %v1233
  %v1338 = vunpack.c.h.b16 %v1233
  %v1339 = vunpack.c.l.b16 %v1234
  %v1340 = vunpack.c.h.b16 %v1234
  %v1341 = vunpack.c.l.b16 %v1235
  %v1342 = vunpack.c.h.b16 %v1235
  %v1343 = vunpack.c.l.b16 %v1236
  %v1344 = vunpack.c.h.b16 %v1236
  %v1345 = vunpack.c.l.b16 %v1237
  %v1346 = vunpack.c.h.b16 %v1237
  %v1347 = vunpack.c.l.b16 %v1238
  %v1348 = vunpack.c.h.b16 %v1238
  %v1349 = vunpack.c.l.b16 %v1239
  %v1350 = vunpack.c.h.b16 %v1239
  %v1351 = vunpack.c.l.b16 %v1240
  %v1352 = vunpack.c.h.b16 %v1240
  %v1353 = vunpack.c.l.b16 %v1241
  %v1354 = vunpack.c.h.b16 %v1241
  %v1355 = vunpack.c.l.b16 %v1242
  %v1356 = vunpack.c.h.b16 %v1242
  %v1357 = vunpack.c.l.b16 %v1243
  %v1358 = vunpack.c.h.b16 %v1243
  %v1359 = vunpack.c.l.b16 %v1244
  %v1360 = vunpack.c.h.b16 %v1244
  %v1361 = vunpack.c.l.b16 %v1245
  %v1362 = vunpack.c.h.b16 %v1245
  %v1363 = vunpack.c.l.b16 %v1246
  %v1364 = vunpack.c.h.b16 %v1246
  %v1365 = vpack.c.b16 %v1305, %v1301
  %v1366 = vpack.c.b16 %v1306, %v1302
  %v1367 = vpack.c.b16 %v1307, %v1303
  %v1368 = vpack.c.b16 %v1308, %v1304
  %v1369 = vpack.c.b16 %v1313, %v1309
  %v1370 = vpack.c.b16 %v1314, %v1310
  %v1371 = vpack.c.b16 %v1315, %v1311
  %v1372 = vpack.c.b16 %v1316, %v1312
  %v1373 = vpack.c.b16 %v1321, %v1317
  %v1374 = vpack.c.b16 %v1322, %v1318
  %v1375 = vpack.c.b16 %v1323, %v1319
  %v1376 = vpack.c.b16 %v1324, %v1320
  %v1377 = vpack.c.b16 %v1329, %v1325
  %v1378 = vpack.c.b16 %v1330, %v1326
  %v1379 = vpack.c.b16 %v1331, %v1327
  %v1380 = vpack.c.b16 %v1332, %v1328
  %v1381 = vpack.c.b16 %v1337, %v1333
  %v1382 = vpack.c.b16 %v1338, %v1334
  %v1383 = vpack.c.b16 %v1339, %v1335
  %v1384 = vpack.c.b16 %v1340, %v1336
  %v1385 = vpack.c.b16 %v1345, %v1341
  %v1386 = vpack.c.b16 %v1346, %v1342
  %v1387 = vpack.c.b16 %v1347, %v1343
  %v1388 = vpack.c.b16 %v1348, %v1344
  %v1389 = vpack.c.b16 %v1353, %v1349
  %v1390 = vpack.c.b16 %v1354, %v1350
  %v1391 = vpack.c.b16 %v1355, %v1351
  %v1392 = vpack.c.b16 %v1356, %v1352
  %v1393 = vpack.c.b16 %v1361, %v1357
  %v1394 = vpack.c.b16 %v1362, %v1358
  %v1395 = vpack.c.b16 %v1363, %v1359
  %v1396 = vpack.c.b16 %v1364, %v1360
  %1429 = vmatprep.subr.bf16.mxu0 %v1366
  %1430 = vmatpush1.bf16.msra.mxu0 %v1365
  %1431 = vmatprep.subr.bf16.mxu0 %v1370
  %1432 = vmatpush1.bf16.msra.mxu0 %v1369
  %1433 = vmatprep.subr.bf16.mxu0 %v1374
  %1434 = vmatpush1.bf16.msra.mxu0 %v1373
  %1435 = vmatprep.subr.bf16.mxu0 %v1378
  %1436 = vmatpush1.bf16.msra.mxu0 %v1377
  %1437 = vmatprep.subr.bf16.mxu0 %v1382
  %1438 = vmatpush1.bf16.msra.mxu0 %v1381
  %1439 = vmatprep.subr.bf16.mxu0 %v1386
  %1440 = vmatpush1.bf16.msra.mxu0 %v1385
  %1441 = vmatprep.subr.bf16.mxu0 %v1390
  %1442 = vmatpush1.bf16.msra.mxu0 %v1389
  %1443 = vmatprep.subr.bf16.mxu0 %v1394
  %1444 = vmatpush1.bf16.msra.mxu0 %v1393
  %1445 = vmatprep.subr.bf16.mxu0 0
  %1446 = vmatpush1.bf16.msra.mxu0 0
  %1447 = vmatprep.subr.bf16.mxu0 0
  %1448 = vmatpush1.bf16.msra.mxu0 0
  %1449 = vmatprep.subr.bf16.mxu0 0
  %1450 = vmatpush1.bf16.msra.mxu0 0
  %1451 = vmatprep.subr.bf16.mxu0 0
  %1452 = vmatpush1.bf16.msra.mxu0 0
  %1453 = vmatprep.subr.bf16.mxu0 0
  %1454 = vmatpush1.bf16.msra.mxu0 0
  %1455 = vmatprep.subr.bf16.mxu0 0
  %1456 = vmatpush1.bf16.msra.mxu0 0
  %1457 = vmatprep.subr.bf16.mxu0 0
  %1458 = vmatpush1.bf16.msra.mxu0 0
  %1459 = vmatprep.subr.bf16.mxu0 0
  %1460 = vmatpush1.bf16.msra.mxu0 0
  %1461 = vmatprep.mubr.bf16.mxu0 0
  %1462 = vmatmul.mubr.bf16.gmra.mrb[0].mxu0 %v1214
  %v1463 = vpop.f32.mrb[0].mxu0
  %v1464 = vadd.f32 %v1252, %v1463
  %v1465 = vpop.f32.mrb[0].mxu0
  %v1466 = vadd.f32 %v1256, %v1465
  %v1467 = vpop.f32.mrb[0].mxu0
  %v1468 = vadd.f32 %v1252, %v1467
  %v1469 = vpop.f32.mrb[0].mxu0
  %v1470 = vadd.f32 %v1256, %v1469
  %1471 = vdwg.mxu0
  %1472 = vmatprep.subr.bf16.mxu0 %v1368
  %1473 = vmatpush1.bf16.msra.mxu0 %v1367
  %1474 = vmatprep.subr.bf16.mxu0 %v1372
  %1475 = vmatpush1.bf16.msra.mxu0 %v1371
  %1476 = vmatprep.subr.bf16.mxu0 %v1376
  %1477 = vmatpush1.bf16.msra.mxu0 %v1375
  %1478 = vmatprep.subr.bf16.mxu0 %v1380
  %1479 = vmatpush1.bf16.msra.mxu0 %v1379
  %1480 = vmatprep.subr.bf16.mxu0 %v1384
  %1481 = vmatpush1.bf16.msra.mxu0 %v1383
  %1482 = vmatprep.subr.bf16.mxu0 %v1388
  %1483 = vmatpush1.bf16.msra.mxu0 %v1387
  %1484 = vmatprep.subr.bf16.mxu0 %v1392
  %1485 = vmatpush1.bf16.msra.mxu0 %v1391
  %1486 = vmatprep.subr.bf16.mxu0 %v1396
  %1487 = vmatpush1.bf16.msra.mxu0 %v1395
  %1488 = vmatprep.subr.bf16.mxu0 0
  %1489 = vmatpush1.bf16.msra.mxu0 0
  %1490 = vmatprep.subr.bf16.mxu0 0
  %1491 = vmatpush1.bf16.msra.mxu0 0
  %1492 = vmatprep.subr.bf16.mxu0 0
  %1493 = vmatpush1.bf16.msra.mxu0 0
  %1494 = vmatprep.subr.bf16.mxu0 0
  %1495 = vmatpush1.bf16.msra.mxu0 0
  %1496 = vmatprep.subr.bf16.mxu0 0
  %1497 = vmatpush1.bf16.msra.mxu0 0
  %1498 = vmatprep.subr.bf16.mxu0 0
  %1499 = vmatpush1.bf16.msra.mxu0 0
  %1500 = vmatprep.subr.bf16.mxu0 0
  %1501 = vmatpush1.bf16.msra.mxu0 0
  %1502 = vmatprep.subr.bf16.mxu0 0
  %1503 = vmatpush1.bf16.msra.mxu0 0
  %1504 = vmatprep.mubr.bf16.mxu0 0
  %1505 = vmatmul.mubr.bf16.gmra.mrb[0].mxu0 %v1214
  %v1506 = vpop.f32.mrb[0].mxu0
  %v1507 = vadd.f32 %v1260, %v1506
  %v1508 = vpop.f32.mrb[0].mxu0
  %v1509 = vadd.f32 %v1264, %v1508
  %v1510 = vpop.f32.mrb[0].mxu0
  %v1511 = vadd.f32 %v1260, %v1510
  %v1512 = vpop.f32.mrb[0].mxu0
  %v1513 = vadd.f32 %v1264, %v1512
  %1514 = vdwg.mxu0
  %v1515 = vmax.f32 %v1464, 0.0
  %v1516 = vmax.f32 %v1466, 0.0
  %v1517 = vmax.f32 %v1507, 0.0
  %v1518 = vmax.f32 %v1509, 0.0
  %v1519 = vmax.f32 %v1468, 0.0
  %v1520 = vmax.f32 %v1470, 0.0
  %v1521 = vmax.f32 %v1511, 0.0
  %v1522 = vmax.f32 %v1513, 0.0
  %v1523 = vpack.c.bf16 %v1519, %v1515
  %v1524 = vpack.c.bf16 %v1520, %v1516
  %v1525 = vpack.c.bf16 %v1521, %v1517
  %v1526 = vpack.c.bf16 %v1522, %v1518
  %v1527 = vld [vmem:[%s14] sm:$0xff]
  %v1528 = vld [vmem:[%s14 + $0x8] sm:$0xff]
  %v1529 = vld [vmem:[%s14 + $0x10] sm:$0xff]
  %v1530 = vld [vmem:[%s14 + $0x18] sm:$0xff]
  %v1531 = vld [vmem:[%s14 + $0x20] sm:$0xff]
  %v1532 = vld [vmem:[%s14 + $0x28] sm:$0xff]
  %v1533 = vld [vmem:[%s14 + $0x30] sm:$0xff]
  %v1534 = vld [vmem:[%s14 + $0x38] sm:$0xff]
  %v1535 = vld [vmem:[%s14 + $0x40] sm:$0xff]
  %v1536 = vld [vmem:[%s14 + $0x48] sm:$0xff]
  %v1537 = vld [vmem:[%s14 + $0x50] sm:$0xff]
  %v1538 = vld [vmem:[%s14 + $0x58] sm:$0xff]
  %v1539 = vld [vmem:[%s14 + $0x60] sm:$0xff]
  %v1540 = vld [vmem:[%s14 + $0x68] sm:$0xff]
  %v1541 = vld [vmem:[%s14 + $0x70] sm:$0xff]
  %v1542 = vld [vmem:[%s14 + $0x78] sm:$0xff]
  %v1543 = vld [vmem:[%s14 + $0x80] sm:$0xff]
  %v1544 = vld [vmem:[%s14 + $0x88] sm:$0xff]
  %v1545 = vld [vmem:[%s14 + $0x90] sm:$0xff]
  %v1546 = vld [vmem:[%s14 + $0x98] sm:$0xff]
  %v1547 = vld [vmem:[%s14 + $0xa0] sm:$0xff]
  %v1548 = vld [vmem:[%s14 + $0xa8] sm:$0xff]
  %v1549 = vld [vmem:[%s14 + $0xb0] sm:$0xff]
  %v1550 = vld [vmem:[%s14 + $0xb8] sm:$0xff]
  %v1551 = vld [vmem:[%s14 + $0xc0] sm:$0xff]
  %v1552 = vld [vmem:[%s14 + $0xc8] sm:$0xff]
  %v1553 = vld [vmem:[%s14 + $0xd0] sm:$0xff]
  %v1554 = vld [vmem:[%s14 + $0xd8] sm:$0xff]
  %v1555 = vld [vmem:[%s14 + $0xe0] sm:$0xff]
  %v1556 = vld [vmem:[%s14 + $0xe8] sm:$0xff]
  %v1557 = vld [vmem:[%s14 + $0xf0] sm:$0xff]
  %v1558 = vld [vmem:[%s14 + $0xf8] sm:$0xff]
  %v1559 = vld [vmem:[%s14 + $0x100] sm:$0xff]
  %v1560 = vld [vmem:[%s14 + $0x108] sm:$0xff]
  %v1561 = vld [vmem:[%s14 + $0x110] sm:$0xff]
  %v1562 = vld [vmem:[%s14 + $0x118] sm:$0xff]
  %v1563 = vld [vmem:[%s14 + $0x120] sm:$0xff]
  %v1564 = vld [vmem:[%s14 + $0x128] sm:$0xff]
  %v1565 = vld [vmem:[%s14 + $0x130] sm:$0xff]
  %v1566 = vld [vmem:[%s14 + $0x138] sm:$0xff]
  %v1567 = vld [vmem:[%s14 + $0x140] sm:$0xff]
  %v1568 = vld [vmem:[%s14 + $0x148] sm:$0xff]
  %v1569 = vld [vmem:[%s14 + $0x150] sm:$0xff]
  %v1570 = vld [vmem:[%s14 + $0x158] sm:$0xff]
  %v1571 = vld [vmem:[%s14 + $0x160] sm:$0xff]
  %v1572 = vld [vmem:[%s14 + $0x168] sm:$0xff]
  %v1573 = vld [vmem:[%s14 + $0x170] sm:$0xff]
  %v1574 = vld [vmem:[%s14 + $0x178] sm:$0xff]
  %v1575 = vld [vmem:[%s14 + $0x180] sm:$0xff]
  %v1576 = vld [vmem:[%s14 + $0x188] sm:$0xff]
  %v1577 = vld [vmem:[%s14 + $0x190] sm:$0xff]
  %v1578 = vld [vmem:[%s14 + $0x198] sm:$0xff]
  %v1579 = vld [vmem:[%s14 + $0x1a0] sm:$0xff]
  %v1580 = vld [vmem:[%s14 + $0x1a8] sm:$0xff]
  %v1581 = vld [vmem:[%s14 + $0x1b0] sm:$0xff]
  %v1582 = vld [vmem:[%s14 + $0x1b8] sm:$0xff]
  %v1583 = vld [vmem:[%s14 + $0x1c0] sm:$0xff]
  %v1584 = vld [vmem:[%s14 + $0x1c8] sm:$0xff]
  %v1585 = vld [vmem:[%s14 + $0x1d0] sm:$0xff]
  %v1586 = vld [vmem:[%s14 + $0x1d8] sm:$0xff]
  %v1587 = vld [vmem:[%s14 + $0x1e0] sm:$0xff]
  %v1588 = vld [vmem:[%s14 + $0x1e8] sm:$0xff]
  %v1589 = vld [vmem:[%s14 + $0x1f0] sm:$0xff]
  %v1590 = vld [vmem:[%s14 + $0x1f8] sm:$0xff]
  %v1591 = vld [vmem:[%s14 + $0x200] sm:$0xff]
  %v1592 = vld [vmem:[%s14 + $0x208] sm:$0xff]
  %v1593 = vld [vmem:[%s14 + $0x210] sm:$0xff]
  %v1594 = vld [vmem:[%s14 + $0x218] sm:$0xff]
  %v1595 = vld [vmem:[%s14 + $0x220] sm:$0xff]
  %v1596 = vld [vmem:[%s14 + $0x228] sm:$0xff]
  %v1597 = vld [vmem:[%s14 + $0x230] sm:$0xff]
  %v1598 = vld [vmem:[%s14 + $0x238] sm:$0xff]
  %v1599 = vld [vmem:[%s14 + $0x240] sm:$0xff]
  %v1600 = vld [vmem:[%s14 + $0x248] sm:$0xff]
  %v1601 = vld [vmem:[%s14 + $0x250] sm:$0xff]
  %v1602 = vld [vmem:[%s14 + $0x258] sm:$0xff]
  %v1603 = vld [vmem:[%s14 + $0x260] sm:$0xff]
  %v1604 = vld [vmem:[%s14 + $0x268] sm:$0xff]
  %v1605 = vld [vmem:[%s14 + $0x270] sm:$0xff]
  %v1606 = vld [vmem:[%s14 + $0x278] sm:$0xff]
  %v1607 = vld [vmem:[%s14 + $0x280] sm:$0xff]
  %v1608 = vld [vmem:[%s14 + $0x288] sm:$0xff]
  %v1609 = vld [vmem:[%s14 + $0x290] sm:$0xff]
  %v1610 = vld [vmem:[%s14 + $0x298] sm:$0xff]
  %v1611 = vld [vmem:[%s14 + $0x2a0] sm:$0xff]
  %v1612 = vld [vmem:[%s14 + $0x2a8] sm:$0xff]
  %v1613 = vld [vmem:[%s14 + $0x2b0] sm:$0xff]
  %v1614 = vld [vmem:[%s14 + $0x2b8] sm:$0xff]
  %v1615 = vld [vmem:[%s14 + $0x2c0] sm:$0xff]
  %v1616 = vld [vmem:[%s14 + $0x2c8] sm:$0xff]
  %v1617 = vld [vmem:[%s14 + $0x2d0] sm:$0xff]
  %v1618 = vld [vmem:[%s14 + $0x2d8] sm:$0xff]
  %v1619 = vld [vmem:[%s14 + $0x2e0] sm:$0xff]
  %v1620 = vld [vmem:[%s14 + $0x2e8] sm:$0xff]
  %v1621 = vld [vmem:[%s14 + $0x2f0] sm:$0xff]
  %v1622 = vld [vmem:[%s14 + $0x2f8] sm:$0xff]
  %v1623 = vld [vmem:[%s14 + $0x300] sm:$0xff]
  %v1624 = vld [vmem:[%s14 + $0x308] sm:$0xff]
  %v1625 = vld [vmem:[%s14 + $0x310] sm:$0xff]
  %v1626 = vld [vmem:[%s14 + $0x318] sm:$0xff]
  %v1627 = vld [vmem:[%s14 + $0x320] sm:$0xff]
  %v1628 = vld [vmem:[%s14 + $0x328] sm:$0xff]
  %v1629 = vld [vmem:[%s14 + $0x330] sm:$0xff]
  %v1630 = vld [vmem:[%s14 + $0x338] sm:$0xff]
  %v1631 = vld [vmem:[%s14 + $0x340] sm:$0xff]
  %v1632 = vld [vmem:[%s14 + $0x348] sm:$0xff]
  %v1633 = vld [vmem:[%s14 + $0x350] sm:$0xff]
  %v1634 = vld [vmem:[%s14 + $0x358] sm:$0xff]
  %v1635 = vld [vmem:[%s14 + $0x360] sm:$0xff]
  %v1636 = vld [vmem:[%s14 + $0x368] sm:$0xff]
  %v1637 = vld [vmem:[%s14 + $0x370] sm:$0xff]
  %v1638 = vld [vmem:[%s14 + $0x378] sm:$0xff]
  %v1639 = vld [vmem:[%s14 + $0x380] sm:$0xff]
  %v1640 = vld [vmem:[%s14 + $0x388] sm:$0xff]
  %v1641 = vld [vmem:[%s14 + $0x390] sm:$0xff]
  %v1642 = vld [vmem:[%s14 + $0x398] sm:$0xff]
  %v1643 = vld [vmem:[%s14 + $0x3a0] sm:$0xff]
  %v1644 = vld [vmem:[%s14 + $0x3a8] sm:$0xff]
  %v1645 = vld [vmem:[%s14 + $0x3b0] sm:$0xff]
  %v1646 = vld [vmem:[%s14 + $0x3b8] sm:$0xff]
  %v1647 = vld [vmem:[%s14 + $0x3c0] sm:$0xff]
  %v1648 = vld [vmem:[%s14 + $0x3c8] sm:$0xff]
  %v1649 = vld [vmem:[%s14 + $0x3d0] sm:$0xff]
  %v1650 = vld [vmem:[%s14 + $0x3d8] sm:$0xff]
  %v1651 = vld [vmem:[%s14 + $0x3e0] sm:$0xff]
  %v1652 = vld [vmem:[%s14 + $0x3e8] sm:$0xff]
  %v1653 = vld [vmem:[%s14 + $0x3f0] sm:$0xff]
  %v1654 = vld [vmem:[%s14 + $0x3f8] sm:$0xff]
  %v1655 = vld [vmem:[%s14 + $0x400] sm:$0xff]
  %v1656 = vld [vmem:[%s14 + $0x408] sm:$0xff]
  %v1657 = vld [vmem:[%s14 + $0x410] sm:$0xff]
  %v1658 = vld [vmem:[%s14 + $0x418] sm:$0xff]
  %v1659 = vld [vmem:[%s14 + $0x420] sm:$0xff]
  %v1660 = vld [vmem:[%s14 + $0x428] sm:$0xff]
  %v1661 = vld [vmem:[%s14 + $0x430] sm:$0xff]
  %v1662 = vld [vmem:[%s14 + $0x438] sm:$0xff]
  %v1663 = vld [vmem:[%s14 + $0x440] sm:$0xff]
  %v1664 = vld [vmem:[%s14 + $0x448] sm:$0xff]
  %v1665 = vld [vmem:[%s14 + $0x450] sm:$0xff]
  %v1666 = vld [vmem:[%s14 + $0x458] sm:$0xff]
  %v1667 = vld [vmem:[%s14 + $0x460] sm:$0xff]
  %v1668 = vld [vmem:[%s14 + $0x468] sm:$0xff]
  %v1669 = vld [vmem:[%s14 + $0x470] sm:$0xff]
  %v1670 = vld [vmem:[%s14 + $0x478] sm:$0xff]
  %v1671 = vld [vmem:[%s14 + $0x480] sm:$0xff]
  %v1672 = vld [vmem:[%s14 + $0x488] sm:$0xff]
  %v1673 = vld [vmem:[%s14 + $0x490] sm:$0xff]
  %v1674 = vld [vmem:[%s14 + $0x498] sm:$0xff]
  %v1675 = vld [vmem:[%s14 + $0x4a0] sm:$0xff]
  %v1676 = vld [vmem:[%s14 + $0x4a8] sm:$0xff]
  %v1677 = vld [vmem:[%s14 + $0x4b0] sm:$0xff]
  %v1678 = vld [vmem:[%s14 + $0x4b8] sm:$0xff]
  %v1679 = vld [vmem:[%s14 + $0x4c0] sm:$0xff]
  %v1680 = vld [vmem:[%s14 + $0x4c8] sm:$0xff]
  %v1681 = vld [vmem:[%s14 + $0x4d0] sm:$0xff]
  %v1682 = vld [vmem:[%s14 + $0x4d8] sm:$0xff]
  %v1683 = vld [vmem:[%s14 + $0x4e0] sm:$0xff]
  %v1684 = vld [vmem:[%s14 + $0x4e8] sm:$0xff]
  %v1685 = vld [vmem:[%s14 + $0x4f0] sm:$0xff]
  %v1686 = vld [vmem:[%s14 + $0x4f8] sm:$0xff]
  %v1687 = vld [vmem:[%s14 + $0x500] sm:$0xff]
  %v1688 = vld [vmem:[%s14 + $0x508] sm:$0xff]
  %v1689 = vld [vmem:[%s14 + $0x510] sm:$0xff]
  %v1690 = vld [vmem:[%s14 + $0x518] sm:$0xff]
  %v1691 = vld [vmem:[%s14 + $0x520] sm:$0xff]
  %v1692 = vld [vmem:[%s14 + $0x528] sm:$0xff]
  %v1693 = vld [vmem:[%s14 + $0x530] sm:$0xff]
  %v1694 = vld [vmem:[%s14 + $0x538] sm:$0xff]
  %v1695 = vld [vmem:[%s14 + $0x540] sm:$0xff]
  %v1696 = vld [vmem:[%s14 + $0x548] sm:$0xff]
  %v1697 = vld [vmem:[%s14 + $0x550] sm:$0xff]
  %v1698 = vld [vmem:[%s14 + $0x558] sm:$0xff]
  %v1699 = vld [vmem:[%s14 + $0x560] sm:$0xff]
  %v1700 = vld [vmem:[%s14 + $0x568] sm:$0xff]
  %v1701 = vld [vmem:[%s14 + $0x570] sm:$0xff]
  %v1702 = vld [vmem:[%s14 + $0x578] sm:$0xff]
  %v1703 = vld [vmem:[%s14 + $0x580] sm:$0xff]
  %v1704 = vld [vmem:[%s14 + $0x588] sm:$0xff]
  %v1705 = vld [vmem:[%s14 + $0x590] sm:$0xff]
  %v1706 = vld [vmem:[%s14 + $0x598] sm:$0xff]
  %v1707 = vld [vmem:[%s14 + $0x5a0] sm:$0xff]
  %v1708 = vld [vmem:[%s14 + $0x5a8] sm:$0xff]
  %v1709 = vld [vmem:[%s14 + $0x5b0] sm:$0xff]
  %v1710 = vld [vmem:[%s14 + $0x5b8] sm:$0xff]
  %v1711 = vld [vmem:[%s14 + $0x5c0] sm:$0xff]
  %v1712 = vld [vmem:[%s14 + $0x5c8] sm:$0xff]
  %v1713 = vld [vmem:[%s14 + $0x5d0] sm:$0xff]
  %v1714 = vld [vmem:[%s14 + $0x5d8] sm:$0xff]
  %v1715 = vld [vmem:[%s14 + $0x5e0] sm:$0xff]
  %v1716 = vld [vmem:[%s14 + $0x5e8] sm:$0xff]
  %v1717 = vld [vmem:[%s14 + $0x5f0] sm:$0xff]
  %v1718 = vld [vmem:[%s14 + $0x5f8] sm:$0xff]
  %v1719 = vld [vmem:[%s15] sm:$0x3f]
  %v1721 = vlaneseq
  %v1722 = vshrl.u32 %v1721, 7
  %v1723 = vsub.s32 0, %v1722
  %v1724 = vrot.slane %v1719, %v1723
  %v1725 = vlaneseq
  %v1726 = vshrl.u32 %v1725, 7
  %v1727 = vsub.s32 1, %v1726
  %v1728 = vrot.slane %v1719, %v1727
  %v1729 = vlaneseq
  %v1730 = vshrl.u32 %v1729, 7
  %v1731 = vsub.s32 2, %v1730
  %v1732 = vrot.slane %v1719, %v1731
  %v1733 = vlaneseq
  %v1734 = vshrl.u32 %v1733, 7
  %v1735 = vsub.s32 3, %v1734
  %v1736 = vrot.slane %v1719, %v1735
  %v1737 = vlaneseq
  %v1738 = vshrl.u32 %v1737, 7
  %v1739 = vsub.s32 4, %v1738
  %v1740 = vrot.slane %v1719, %v1739
  %v1741 = vlaneseq
  %v1742 = vshrl.u32 %v1741, 7
  %v1743 = vsub.s32 5, %v1742
  %v1744 = vrot.slane %v1719, %v1743
  %v1943 = vunpack.c.l.b16 %v1527
  %v1944 = vunpack.c.h.b16 %v1527
  %v1945 = vunpack.c.l.b16 %v1528
  %v1946 = vunpack.c.h.b16 %v1528
  %v1947 = vunpack.c.l.b16 %v1529
  %v1948 = vunpack.c.h.b16 %v1529
  %v1949 = vunpack.c.l.b16 %v1530
  %v1950 = vunpack.c.h.b16 %v1530
  %v1951 = vunpack.c.l.b16 %v1531
  %v1952 = vunpack.c.h.b16 %v1531
  %v1953 = vunpack.c.l.b16 %v1532
  %v1954 = vunpack.c.h.b16 %v1532
  %v1955 = vunpack.c.l.b16 %v1533
  %v1956 = vunpack.c.h.b16 %v1533
  %v1957 = vunpack.c.l.b16 %v1534
  %v1958 = vunpack.c.h.b16 %v1534
  %v1959 = vunpack.c.l.b16 %v1535
  %v1960 = vunpack.c.h.b16 %v1535
  %v1961 = vunpack.c.l.b16 %v1536
  %v1962 = vunpack.c.h.b16 %v1536
  %v1963 = vunpack.c.l.b16 %v1537
  %v1964 = vunpack.c.h.b16 %v1537
  %v1965 = vunpack.c.l.b16 %v1538
  %v1966 = vunpack.c.h.b16 %v1538
  %v1967 = vunpack.c.l.b16 %v1539
  %v1968 = vunpack.c.h.b16 %v1539
  %v1969 = vunpack.c.l.b16 %v1540
  %v1970 = vunpack.c.h.b16 %v1540
  %v1971 = vunpack.c.l.b16 %v1541
  %v1972 = vunpack.c.h.b16 %v1541
  %v1973 = vunpack.c.l.b16 %v1542
  %v1974 = vunpack.c.h.b16 %v1542
  %v1975 = vunpack.c.l.b16 %v1543
  %v1976 = vunpack.c.h.b16 %v1543
  %v1977 = vunpack.c.l.b16 %v1544
  %v1978 = vunpack.c.h.b16 %v1544
  %v1979 = vunpack.c.l.b16 %v1545
  %v1980 = vunpack.c.h.b16 %v1545
  %v1981 = vunpack.c.l.b16 %v1546
  %v1982 = vunpack.c.h.b16 %v1546
  %v1983 = vunpack.c.l.b16 %v1547
  %v1984 = vunpack.c.h.b16 %v1547
  %v1985 = vunpack.c.l.b16 %v1548
  %v1986 = vunpack.c.h.b16 %v1548
  %v1987 = vunpack.c.l.b16 %v1549
  %v1988 = vunpack.c.h.b16 %v1549
  %v1989 = vunpack.c.l.b16 %v1550
  %v1990 = vunpack.c.h.b16 %v1550
  %v1991 = vunpack.c.l.b16 %v1551
  %v1992 = vunpack.c.h.b16 %v1551
  %v1993 = vunpack.c.l.b16 %v1552
  %v1994 = vunpack.c.h.b16 %v1552
  %v1995 = vunpack.c.l.b16 %v1553
  %v1996 = vunpack.c.h.b16 %v1553
  %v1997 = vunpack.c.l.b16 %v1554
  %v1998 = vunpack.c.h.b16 %v1554
  %v1999 = vunpack.c.l.b16 %v1555
  %v2000 = vunpack.c.h.b16 %v1555
  %v2001 = vunpack.c.l.b16 %v1556
  %v2002 = vunpack.c.h.b16 %v1556
  %v2003 = vunpack.c.l.b16 %v1557
  %v2004 = vunpack.c.h.b16 %v1557
  %v2005 = vunpack.c.l.b16 %v1558
  %v2006 = vunpack.c.h.b16 %v1558
  %v2007 = vunpack.c.l.b16 %v1559
  %v2008 = vunpack.c.h.b16 %v1559
  %v2009 = vunpack.c.l.b16 %v1560
  %v2010 = vunpack.c.h.b16 %v1560
  %v2011 = vunpack.c.l.b16 %v1561
  %v2012 = vunpack.c.h.b16 %v1561
  %v2013 = vunpack.c.l.b16 %v1562
  %v2014 = vunpack.c.h.b16 %v1562
  %v2015 = vunpack.c.l.b16 %v1563
  %v2016 = vunpack.c.h.b16 %v1563
  %v2017 = vunpack.c.l.b16 %v1564
  %v2018 = vunpack.c.h.b16 %v1564
  %v2019 = vunpack.c.l.b16 %v1565
  %v2020 = vunpack.c.h.b16 %v1565
  %v2021 = vunpack.c.l.b16 %v1566
  %v2022 = vunpack.c.h.b16 %v1566
  %v2023 = vunpack.c.l.b16 %v1567
  %v2024 = vunpack.c.h.b16 %v1567
  %v2025 = vunpack.c.l.b16 %v1568
  %v2026 = vunpack.c.h.b16 %v1568
  %v2027 = vunpack.c.l.b16 %v1569
  %v2028 = vunpack.c.h.b16 %v1569
  %v2029 = vunpack.c.l.b16 %v1570
  %v2030 = vunpack.c.h.b16 %v1570
  %v2031 = vunpack.c.l.b16 %v1571
  %v2032 = vunpack.c.h.b16 %v1571
  %v2033 = vunpack.c.l.b16 %v1572
  %v2034 = vunpack.c.h.b16 %v1572
  %v2035 = vunpack.c.l.b16 %v1573
  %v2036 = vunpack.c.h.b16 %v1573
  %v2037 = vunpack.c.l.b16 %v1574
  %v2038 = vunpack.c.h.b16 %v1574
  %v2039 = vunpack.c.l.b16 %v1575
  %v2040 = vunpack.c.h.b16 %v1575
  %v2041 = vunpack.c.l.b16 %v1576
  %v2042 = vunpack.c.h.b16 %v1576
  %v2043 = vunpack.c.l.b16 %v1577
  %v2044 = vunpack.c.h.b16 %v1577
  %v2045 = vunpack.c.l.b16 %v1578
  %v2046 = vunpack.c.h.b16 %v1578
  %v2047 = vunpack.c.l.b16 %v1579
  %v2048 = vunpack.c.h.b16 %v1579
  %v2049 = vunpack.c.l.b16 %v1580
  %v2050 = vunpack.c.h.b16 %v1580
  %v2051 = vunpack.c.l.b16 %v1581
  %v2052 = vunpack.c.h.b16 %v1581
  %v2053 = vunpack.c.l.b16 %v1582
  %v2054 = vunpack.c.h.b16 %v1582
  %v2055 = vunpack.c.l.b16 %v1583
  %v2056 = vunpack.c.h.b16 %v1583
  %v2057 = vunpack.c.l.b16 %v1584
  %v2058 = vunpack.c.h.b16 %v1584
  %v2059 = vunpack.c.l.b16 %v1585
  %v2060 = vunpack.c.h.b16 %v1585
  %v2061 = vunpack.c.l.b16 %v1586
  %v2062 = vunpack.c.h.b16 %v1586
  %v2063 = vunpack.c.l.b16 %v1587
  %v2064 = vunpack.c.h.b16 %v1587
  %v2065 = vunpack.c.l.b16 %v1588
  %v2066 = vunpack.c.h.b16 %v1588
  %v2067 = vunpack.c.l.b16 %v1589
  %v2068 = vunpack.c.h.b16 %v1589
  %v2069 = vunpack.c.l.b16 %v1590
  %v2070 = vunpack.c.h.b16 %v1590
  %v2071 = vunpack.c.l.b16 %v1591
  %v2072 = vunpack.c.h.b16 %v1591
  %v2073 = vunpack.c.l.b16 %v1592
  %v2074 = vunpack.c.h.b16 %v1592
  %v2075 = vunpack.c.l.b16 %v1593
  %v2076 = vunpack.c.h.b16 %v1593
  %v2077 = vunpack.c.l.b16 %v1594
  %v2078 = vunpack.c.h.b16 %v1594
  %v2079 = vunpack.c.l.b16 %v1595
  %v2080 = vunpack.c.h.b16 %v1595
  %v2081 = vunpack.c.l.b16 %v1596
  %v2082 = vunpack.c.h.b16 %v1596
  %v2083 = vunpack.c.l.b16 %v1597
  %v2084 = vunpack.c.h.b16 %v1597
  %v2085 = vunpack.c.l.b16 %v1598
  %v2086 = vunpack.c.h.b16 %v1598
  %v2087 = vunpack.c.l.b16 %v1599
  %v2088 = vunpack.c.h.b16 %v1599
  %v2089 = vunpack.c.l.b16 %v1600
  %v2090 = vunpack.c.h.b16 %v1600
  %v2091 = vunpack.c.l.b16 %v1601
  %v2092 = vunpack.c.h.b16 %v1601
  %v2093 = vunpack.c.l.b16 %v1602
  %v2094 = vunpack.c.h.b16 %v1602
  %v2095 = vunpack.c.l.b16 %v1603
  %v2096 = vunpack.c.h.b16 %v1603
  %v2097 = vunpack.c.l.b16 %v1604
  %v2098 = vunpack.c.h.b16 %v1604
  %v2099 = vunpack.c.l.b16 %v1605
  %v2100 = vunpack.c.h.b16 %v1605
  %v2101 = vunpack.c.l.b16 %v1606
  %v2102 = vunpack.c.h.b16 %v1606
  %v2103 = vunpack.c.l.b16 %v1607
  %v2104 = vunpack.c.h.b16 %v1607
  %v2105 = vunpack.c.l.b16 %v1608
  %v2106 = vunpack.c.h.b16 %v1608
  %v2107 = vunpack.c.l.b16 %v1609
  %v2108 = vunpack.c.h.b16 %v1609
  %v2109 = vunpack.c.l.b16 %v1610
  %v2110 = vunpack.c.h.b16 %v1610
  %v2111 = vunpack.c.l.b16 %v1611
  %v2112 = vunpack.c.h.b16 %v1611
  %v2113 = vunpack.c.l.b16 %v1612
  %v2114 = vunpack.c.h.b16 %v1612
  %v2115 = vunpack.c.l.b16 %v1613
  %v2116 = vunpack.c.h.b16 %v1613
  %v2117 = vunpack.c.l.b16 %v1614
  %v2118 = vunpack.c.h.b16 %v1614
  %v2119 = vunpack.c.l.b16 %v1615
  %v2120 = vunpack.c.h.b16 %v1615
  %v2121 = vunpack.c.l.b16 %v1616
  %v2122 = vunpack.c.h.b16 %v1616
  %v2123 = vunpack.c.l.b16 %v1617
  %v2124 = vunpack.c.h.b16 %v1617
  %v2125 = vunpack.c.l.b16 %v1618
  %v2126 = vunpack.c.h.b16 %v1618
  %v2127 = vunpack.c.l.b16 %v1619
  %v2128 = vunpack.c.h.b16 %v1619
  %v2129 = vunpack.c.l.b16 %v1620
  %v2130 = vunpack.c.h.b16 %v1620
  %v2131 = vunpack.c.l.b16 %v1621
  %v2132 = vunpack.c.h.b16 %v1621
  %v2133 = vunpack.c.l.b16 %v1622
  %v2134 = vunpack.c.h.b16 %v1622
  %v2135 = vunpack.c.l.b16 %v1623
  %v2136 = vunpack.c.h.b16 %v1623
  %v2137 = vunpack.c.l.b16 %v1624
  %v2138 = vunpack.c.h.b16 %v1624
  %v2139 = vunpack.c.l.b16 %v1625
  %v2140 = vunpack.c.h.b16 %v1625
  %v2141 = vunpack.c.l.b16 %v1626
  %v2142 = vunpack.c.h.b16 %v1626
  %v2143 = vunpack.c.l.b16 %v1627
  %v2144 = vunpack.c.h.b16 %v1627
  %v2145 = vunpack.c.l.b16 %v1628
  %v2146 = vunpack.c.h.b16 %v1628
  %v2147 = vunpack.c.l.b16 %v1629
  %v2148 = vunpack.c.h.b16 %v1629
  %v2149 = vunpack.c.l.b16 %v1630
  %v2150 = vunpack.c.h.b16 %v1630
  %v2151 = vunpack.c.l.b16 %v1631
  %v2152 = vunpack.c.h.b16 %v1631
  %v2153 = vunpack.c.l.b16 %v1632
  %v2154 = vunpack.c.h.b16 %v1632
  %v2155 = vunpack.c.l.b16 %v1633
  %v2156 = vunpack.c.h.b16 %v1633
  %v2157 = vunpack.c.l.b16 %v1634
  %v2158 = vunpack.c.h.b16 %v1634
  %v2159 = vunpack.c.l.b16 %v1635
  %v2160 = vunpack.c.h.b16 %v1635
  %v2161 = vunpack.c.l.b16 %v1636
  %v2162 = vunpack.c.h.b16 %v1636
  %v2163 = vunpack.c.l.b16 %v1637
  %v2164 = vunpack.c.h.b16 %v1637
  %v2165 = vunpack.c.l.b16 %v1638
  %v2166 = vunpack.c.h.b16 %v1638
  %v2167 = vunpack.c.l.b16 %v1639
  %v2168 = vunpack.c.h.b16 %v1639
  %v2169 = vunpack.c.l.b16 %v1640
  %v2170 = vunpack.c.h.b16 %v1640
  %v2171 = vunpack.c.l.b16 %v1641
  %v2172 = vunpack.c.h.b16 %v1641
  %v2173 = vunpack.c.l.b16 %v1642
  %v2174 = vunpack.c.h.b16 %v1642
  %v2175 = vunpack.c.l.b16 %v1643
  %v2176 = vunpack.c.h.b16 %v1643
  %v2177 = vunpack.c.l.b16 %v1644
  %v2178 = vunpack.c.h.b16 %v1644
  %v2179 = vunpack.c.l.b16 %v1645
  %v2180 = vunpack.c.h.b16 %v1645
  %v2181 = vunpack.c.l.b16 %v1646
  %v2182 = vunpack.c.h.b16 %v1646
  %v2183 = vunpack.c.l.b16 %v1647
  %v2184 = vunpack.c.h.b16 %v1647
  %v2185 = vunpack.c.l.b16 %v1648
  %v2186 = vunpack.c.h.b16 %v1648
  %v2187 = vunpack.c.l.b16 %v1649
  %v2188 = vunpack.c.h.b16 %v1649
  %v2189 = vunpack.c.l.b16 %v1650
  %v2190 = vunpack.c.h.b16 %v1650
  %v2191 = vunpack.c.l.b16 %v1651
  %v2192 = vunpack.c.h.b16 %v1651
  %v2193 = vunpack.c.l.b16 %v1652
  %v2194 = vunpack.c.h.b16 %v1652
  %v2195 = vunpack.c.l.b16 %v1653
  %v2196 = vunpack.c.h.b16 %v1653
  %v2197 = vunpack.c.l.b16 %v1654
  %v2198 = vunpack.c.h.b16 %v1654
  %v2199 = vunpack.c.l.b16 %v1655
  %v2200 = vunpack.c.h.b16 %v1655
  %v2201 = vunpack.c.l.b16 %v1656
  %v2202 = vunpack.c.h.b16 %v1656
  %v2203 = vunpack.c.l.b16 %v1657
  %v2204 = vunpack.c.h.b16 %v1657
  %v2205 = vunpack.c.l.b16 %v1658
  %v2206 = vunpack.c.h.b16 %v1658
  %v2207 = vunpack.c.l.b16 %v1659
  %v2208 = vunpack.c.h.b16 %v1659
  %v2209 = vunpack.c.l.b16 %v1660
  %v2210 = vunpack.c.h.b16 %v1660
  %v2211 = vunpack.c.l.b16 %v1661
  %v2212 = vunpack.c.h.b16 %v1661
  %v2213 = vunpack.c.l.b16 %v1662
  %v2214 = vunpack.c.h.b16 %v1662
  %v2215 = vunpack.c.l.b16 %v1663
  %v2216 = vunpack.c.h.b16 %v1663
  %v2217 = vunpack.c.l.b16 %v1664
  %v2218 = vunpack.c.h.b16 %v1664
  %v2219 = vunpack.c.l.b16 %v1665
  %v2220 = vunpack.c.h.b16 %v1665
  %v2221 = vunpack.c.l.b16 %v1666
  %v2222 = vunpack.c.h.b16 %v1666
  %v2223 = vunpack.c.l.b16 %v1667
  %v2224 = vunpack.c.h.b16 %v1667
  %v2225 = vunpack.c.l.b16 %v1668
  %v2226 = vunpack.c.h.b16 %v1668
  %v2227 = vunpack.c.l.b16 %v1669
  %v2228 = vunpack.c.h.b16 %v1669
  %v2229 = vunpack.c.l.b16 %v1670
  %v2230 = vunpack.c.h.b16 %v1670
  %v2231 = vunpack.c.l.b16 %v1671
  %v2232 = vunpack.c.h.b16 %v1671
  %v2233 = vunpack.c.l.b16 %v1672
  %v2234 = vunpack.c.h.b16 %v1672
  %v2235 = vunpack.c.l.b16 %v1673
  %v2236 = vunpack.c.h.b16 %v1673
  %v2237 = vunpack.c.l.b16 %v1674
  %v2238 = vunpack.c.h.b16 %v1674
  %v2239 = vunpack.c.l.b16 %v1675
  %v2240 = vunpack.c.h.b16 %v1675
  %v2241 = vunpack.c.l.b16 %v1676
  %v2242 = vunpack.c.h.b16 %v1676
  %v2243 = vunpack.c.l.b16 %v1677
  %v2244 = vunpack.c.h.b16 %v1677
  %v2245 = vunpack.c.l.b16 %v1678
  %v2246 = vunpack.c.h.b16 %v1678
  %v2247 = vunpack.c.l.b16 %v1679
  %v2248 = vunpack.c.h.b16 %v1679
  %v2249 = vunpack.c.l.b16 %v1680
  %v2250 = vunpack.c.h.b16 %v1680
  %v2251 = vunpack.c.l.b16 %v1681
  %v2252 = vunpack.c.h.b16 %v1681
  %v2253 = vunpack.c.l.b16 %v1682
  %v2254 = vunpack.c.h.b16 %v1682
  %v2255 = vunpack.c.l.b16 %v1683
  %v2256 = vunpack.c.h.b16 %v1683
  %v2257 = vunpack.c.l.b16 %v1684
  %v2258 = vunpack.c.h.b16 %v1684
  %v2259 = vunpack.c.l.b16 %v1685
  %v2260 = vunpack.c.h.b16 %v1685
  %v2261 = vunpack.c.l.b16 %v1686
  %v2262 = vunpack.c.h.b16 %v1686
  %v2263 = vunpack.c.l.b16 %v1687
  %v2264 = vunpack.c.h.b16 %v1687
  %v2265 = vunpack.c.l.b16 %v1688
  %v2266 = vunpack.c.h.b16 %v1688
  %v2267 = vunpack.c.l.b16 %v1689
  %v2268 = vunpack.c.h.b16 %v1689
  %v2269 = vunpack.c.l.b16 %v1690
  %v2270 = vunpack.c.h.b16 %v1690
  %v2271 = vunpack.c.l.b16 %v1691
  %v2272 = vunpack.c.h.b16 %v1691
  %v2273 = vunpack.c.l.b16 %v1692
  %v2274 = vunpack.c.h.b16 %v1692
  %v2275 = vunpack.c.l.b16 %v1693
  %v2276 = vunpack.c.h.b16 %v1693
  %v2277 = vunpack.c.l.b16 %v1694
  %v2278 = vunpack.c.h.b16 %v1694
  %v2279 = vunpack.c.l.b16 %v1695
  %v2280 = vunpack.c.h.b16 %v1695
  %v2281 = vunpack.c.l.b16 %v1696
  %v2282 = vunpack.c.h.b16 %v1696
  %v2283 = vunpack.c.l.b16 %v1697
  %v2284 = vunpack.c.h.b16 %v1697
  %v2285 = vunpack.c.l.b16 %v1698
  %v2286 = vunpack.c.h.b16 %v1698
  %v2287 = vunpack.c.l.b16 %v1699
  %v2288 = vunpack.c.h.b16 %v1699
  %v2289 = vunpack.c.l.b16 %v1700
  %v2290 = vunpack.c.h.b16 %v1700
  %v2291 = vunpack.c.l.b16 %v1701
  %v2292 = vunpack.c.h.b16 %v1701
  %v2293 = vunpack.c.l.b16 %v1702
  %v2294 = vunpack.c.h.b16 %v1702
  %v2295 = vunpack.c.l.b16 %v1703
  %v2296 = vunpack.c.h.b16 %v1703
  %v2297 = vunpack.c.l.b16 %v1704
  %v2298 = vunpack.c.h.b16 %v1704
  %v2299 = vunpack.c.l.b16 %v1705
  %v2300 = vunpack.c.h.b16 %v1705
  %v2301 = vunpack.c.l.b16 %v1706
  %v2302 = vunpack.c.h.b16 %v1706
  %v2303 = vunpack.c.l.b16 %v1707
  %v2304 = vunpack.c.h.b16 %v1707
  %v2305 = vunpack.c.l.b16 %v1708
  %v2306 = vunpack.c.h.b16 %v1708
  %v2307 = vunpack.c.l.b16 %v1709
  %v2308 = vunpack.c.h.b16 %v1709
  %v2309 = vunpack.c.l.b16 %v1710
  %v2310 = vunpack.c.h.b16 %v1710
  %v2311 = vunpack.c.l.b16 %v1711
  %v2312 = vunpack.c.h.b16 %v1711
  %v2313 = vunpack.c.l.b16 %v1712
  %v2314 = vunpack.c.h.b16 %v1712
  %v2315 = vunpack.c.l.b16 %v1713
  %v2316 = vunpack.c.h.b16 %v1713
  %v2317 = vunpack.c.l.b16 %v1714
  %v2318 = vunpack.c.h.b16 %v1714
  %v2319 = vunpack.c.l.b16 %v1715
  %v2320 = vunpack.c.h.b16 %v1715
  %v2321 = vunpack.c.l.b16 %v1716
  %v2322 = vunpack.c.h.b16 %v1716
  %v2323 = vunpack.c.l.b16 %v1717
  %v2324 = vunpack.c.h.b16 %v1717
  %v2325 = vunpack.c.l.b16 %v1718
  %v2326 = vunpack.c.h.b16 %v1718
  %v2327 = vpack.c.b16 %v1949, %v1943
  %v2328 = vpack.c.b16 %v1950, %v1944
  %v2329 = vpack.c.b16 %v1951, %v1945
  %v2330 = vpack.c.b16 %v1952, %v1946
  %v2331 = vpack.c.b16 %v1953, %v1947
  %v2332 = vpack.c.b16 %v1954, %v1948
  %v2333 = vpack.c.b16 %v1961, %v1955
  %v2334 = vpack.c.b16 %v1962, %v1956
  %v2335 = vpack.c.b16 %v1963, %v1957
  %v2336 = vpack.c.b16 %v1964, %v1958
  %v2337 = vpack.c.b16 %v1965, %v1959
  %v2338 = vpack.c.b16 %v1966, %v1960
  %v2339 = vpack.c.b16 %v1973, %v1967
  %v2340 = vpack.c.b16 %v1974, %v1968
  %v2341 = vpack.c.b16 %v1975, %v1969
  %v2342 = vpack.c.b16 %v1976, %v1970
  %v2343 = vpack.c.b16 %v1977, %v1971
  %v2344 = vpack.c.b16 %v1978, %v1972
  %v2345 = vpack.c.b16 %v1985, %v1979
  %v2346 = vpack.c.b16 %v1986, %v1980
  %v2347 = vpack.c.b16 %v1987, %v1981
  %v2348 = vpack.c.b16 %v1988, %v1982
  %v2349 = vpack.c.b16 %v1989, %v1983
  %v2350 = vpack.c.b16 %v1990, %v1984
  %v2351 = vpack.c.b16 %v1997, %v1991
  %v2352 = vpack.c.b16 %v1998, %v1992
  %v2353 = vpack.c.b16 %v1999, %v1993
  %v2354 = vpack.c.b16 %v2000, %v1994
  %v2355 = vpack.c.b16 %v2001, %v1995
  %v2356 = vpack.c.b16 %v2002, %v1996
  %v2357 = vpack.c.b16 %v2009, %v2003
  %v2358 = vpack.c.b16 %v2010, %v2004
  %v2359 = vpack.c.b16 %v2011, %v2005
  %v2360 = vpack.c.b16 %v2012, %v2006
  %v2361 = vpack.c.b16 %v2013, %v2007
  %v2362 = vpack.c.b16 %v2014, %v2008
  %v2363 = vpack.c.b16 %v2021, %v2015
  %v2364 = vpack.c.b16 %v2022, %v2016
  %v2365 = vpack.c.b16 %v2023, %v2017
  %v2366 = vpack.c.b16 %v2024, %v2018
  %v2367 = vpack.c.b16 %v2025, %v2019
  %v2368 = vpack.c.b16 %v2026, %v2020
  %v2369 = vpack.c.b16 %v2033, %v2027
  %v2370 = vpack.c.b16 %v2034, %v2028
  %v2371 = vpack.c.b16 %v2035, %v2029
  %v2372 = vpack.c.b16 %v2036, %v2030
  %v2373 = vpack.c.b16 %v2037, %v2031
  %v2374 = vpack.c.b16 %v2038, %v2032
  %v2375 = vpack.c.b16 %v2045, %v2039
  %v2376 = vpack.c.b16 %v2046, %v2040
  %v2377 = vpack.c.b16 %v2047, %v2041
  %v2378 = vpack.c.b16 %v2048, %v2042
  %v2379 = vpack.c.b16 %v2049, %v2043
  %v2380 = vpack.c.b16 %v2050, %v2044
  %v2381 = vpack.c.b16 %v2057, %v2051
  %v2382 = vpack.c.b16 %v2058, %v2052
  %v2383 = vpack.c.b16 %v2059, %v2053
  %v2384 = vpack.c.b16 %v2060, %v2054
  %v2385 = vpack.c.b16 %v2061, %v2055
  %v2386 = vpack.c.b16 %v2062, %v2056
  %v2387 = vpack.c.b16 %v2069, %v2063
  %v2388 = vpack.c.b16 %v2070, %v2064
  %v2389 = vpack.c.b16 %v2071, %v2065
  %v2390 = vpack.c.b16 %v2072, %v2066
  %v2391 = vpack.c.b16 %v2073, %v2067
  %v2392 = vpack.c.b16 %v2074, %v2068
  %v2393 = vpack.c.b16 %v2081, %v2075
  %v2394 = vpack.c.b16 %v2082, %v2076
  %v2395 = vpack.c.b16 %v2083, %v2077
  %v2396 = vpack.c.b16 %v2084, %v2078
  %v2397 = vpack.c.b16 %v2085, %v2079
  %v2398 = vpack.c.b16 %v2086, %v2080
  %v2399 = vpack.c.b16 %v2093, %v2087
  %v2400 = vpack.c.b16 %v2094, %v2088
  %v2401 = vpack.c.b16 %v2095, %v2089
  %v2402 = vpack.c.b16 %v2096, %v2090
  %v2403 = vpack.c.b16 %v2097, %v2091
  %v2404 = vpack.c.b16 %v2098, %v2092
  %v2405 = vpack.c.b16 %v2105, %v2099
  %v2406 = vpack.c.b16 %v2106, %v2100
  %v2407 = vpack.c.b16 %v2107, %v2101
  %v2408 = vpack.c.b16 %v2108, %v2102
  %v2409 = vpack.c.b16 %v2109, %v2103
  %v2410 = vpack.c.b16 %v2110, %v2104
  %v2411 = vpack.c.b16 %v2117, %v2111
  %v2412 = vpack.c.b16 %v2118, %v2112
  %v2413 = vpack.c.b16 %v2119, %v2113
  %v2414 = vpack.c.b16 %v2120, %v2114
  %v2415 = vpack.c.b16 %v2121, %v2115
  %v2416 = vpack.c.b16 %v2122, %v2116
  %v2417 = vpack.c.b16 %v2129, %v2123
  %v2418 = vpack.c.b16 %v2130, %v2124
  %v2419 = vpack.c.b16 %v2131, %v2125
  %v2420 = vpack.c.b16 %v2132, %v2126
  %v2421 = vpack.c.b16 %v2133, %v2127
  %v2422 = vpack.c.b16 %v2134, %v2128
  %v2423 = vpack.c.b16 %v2141, %v2135
  %v2424 = vpack.c.b16 %v2142, %v2136
  %v2425 = vpack.c.b16 %v2143, %v2137
  %v2426 = vpack.c.b16 %v2144, %v2138
  %v2427 = vpack.c.b16 %v2145, %v2139
  %v2428 = vpack.c.b16 %v2146, %v2140
  %v2429 = vpack.c.b16 %v2153, %v2147
  %v2430 = vpack.c.b16 %v2154, %v2148
  %v2431 = vpack.c.b16 %v2155, %v2149
  %v2432 = vpack.c.b16 %v2156, %v2150
  %v2433 = vpack.c.b16 %v2157, %v2151
  %v2434 = vpack.c.b16 %v2158, %v2152
  %v2435 = vpack.c.b16 %v2165, %v2159
  %v2436 = vpack.c.b16 %v2166, %v2160
  %v2437 = vpack.c.b16 %v2167, %v2161
  %v2438 = vpack.c.b16 %v2168, %v2162
  %v2439 = vpack.c.b16 %v2169, %v2163
  %v2440 = vpack.c.b16 %v2170, %v2164
  %v2441 = vpack.c.b16 %v2177, %v2171
  %v2442 = vpack.c.b16 %v2178, %v2172
  %v2443 = vpack.c.b16 %v2179, %v2173
  %v2444 = vpack.c.b16 %v2180, %v2174
  %v2445 = vpack.c.b16 %v2181, %v2175
  %v2446 = vpack.c.b16 %v2182, %v2176
  %v2447 = vpack.c.b16 %v2189, %v2183
  %v2448 = vpack.c.b16 %v2190, %v2184
  %v2449 = vpack.c.b16 %v2191, %v2185
  %v2450 = vpack.c.b16 %v2192, %v2186
  %v2451 = vpack.c.b16 %v2193, %v2187
  %v2452 = vpack.c.b16 %v2194, %v2188
  %v2453 = vpack.c.b16 %v2201, %v2195
  %v2454 = vpack.c.b16 %v2202, %v2196
  %v2455 = vpack.c.b16 %v2203, %v2197
  %v2456 = vpack.c.b16 %v2204, %v2198
  %v2457 = vpack.c.b16 %v2205, %v2199
  %v2458 = vpack.c.b16 %v2206, %v2200
  %v2459 = vpack.c.b16 %v2213, %v2207
  %v2460 = vpack.c.b16 %v2214, %v2208
  %v2461 = vpack.c.b16 %v2215, %v2209
  %v2462 = vpack.c.b16 %v2216, %v2210
  %v2463 = vpack.c.b16 %v2217, %v2211
  %v2464 = vpack.c.b16 %v2218, %v2212
  %v2465 = vpack.c.b16 %v2225, %v2219
  %v2466 = vpack.c.b16 %v2226, %v2220
  %v2467 = vpack.c.b16 %v2227, %v2221
  %v2468 = vpack.c.b16 %v2228, %v2222
  %v2469 = vpack.c.b16 %v2229, %v2223
  %v2470 = vpack.c.b16 %v2230, %v2224
  %v2471 = vpack.c.b16 %v2237, %v2231
  %v2472 = vpack.c.b16 %v2238, %v2232
  %v2473 = vpack.c.b16 %v2239, %v2233
  %v2474 = vpack.c.b16 %v2240, %v2234
  %v2475 = vpack.c.b16 %v2241, %v2235
  %v2476 = vpack.c.b16 %v2242, %v2236
  %v2477 = vpack.c.b16 %v2249, %v2243
  %v2478 = vpack.c.b16 %v2250, %v2244
  %v2479 = vpack.c.b16 %v2251, %v2245
  %v2480 = vpack.c.b16 %v2252, %v2246
  %v2481 = vpack.c.b16 %v2253, %v2247
  %v2482 = vpack.c.b16 %v2254, %v2248
  %v2483 = vpack.c.b16 %v2261, %v2255
  %v2484 = vpack.c.b16 %v2262, %v2256
  %v2485 = vpack.c.b16 %v2263, %v2257
  %v2486 = vpack.c.b16 %v2264, %v2258
  %v2487 = vpack.c.b16 %v2265, %v2259
  %v2488 = vpack.c.b16 %v2266, %v2260
  %v2489 = vpack.c.b16 %v2273, %v2267
  %v2490 = vpack.c.b16 %v2274, %v2268
  %v2491 = vpack.c.b16 %v2275, %v2269
  %v2492 = vpack.c.b16 %v2276, %v2270
  %v2493 = vpack.c.b16 %v2277, %v2271
  %v2494 = vpack.c.b16 %v2278, %v2272
  %v2495 = vpack.c.b16 %v2285, %v2279
  %v2496 = vpack.c.b16 %v2286, %v2280
  %v2497 = vpack.c.b16 %v2287, %v2281
  %v2498 = vpack.c.b16 %v2288, %v2282
  %v2499 = vpack.c.b16 %v2289, %v2283
  %v2500 = vpack.c.b16 %v2290, %v2284
  %v2501 = vpack.c.b16 %v2297, %v2291
  %v2502 = vpack.c.b16 %v2298, %v2292
  %v2503 = vpack.c.b16 %v2299, %v2293
  %v2504 = vpack.c.b16 %v2300, %v2294
  %v2505 = vpack.c.b16 %v2301, %v2295
  %v2506 = vpack.c.b16 %v2302, %v2296
  %v2507 = vpack.c.b16 %v2309, %v2303
  %v2508 = vpack.c.b16 %v2310, %v2304
  %v2509 = vpack.c.b16 %v2311, %v2305
  %v2510 = vpack.c.b16 %v2312, %v2306
  %v2511 = vpack.c.b16 %v2313, %v2307
  %v2512 = vpack.c.b16 %v2314, %v2308
  %v2513 = vpack.c.b16 %v2321, %v2315
  %v2514 = vpack.c.b16 %v2322, %v2316
  %v2515 = vpack.c.b16 %v2323, %v2317
  %v2516 = vpack.c.b16 %v2324, %v2318
  %v2517 = vpack.c.b16 %v2325, %v2319
  %v2518 = vpack.c.b16 %v2326, %v2320
  %2711 = vmatprep.subr.bf16.mxu0 %v2328
  %2712 = vmatpush1.bf16.msra.mxu0 %v2327
  %2713 = vmatprep.subr.bf16.mxu0 %v2334
  %2714 = vmatpush1.bf16.msra.mxu0 %v2333
  %2715 = vmatprep.subr.bf16.mxu0 %v2340
  %2716 = vmatpush1.bf16.msra.mxu0 %v2339
  %2717 = vmatprep.subr.bf16.mxu0 %v2346
  %2718 = vmatpush1.bf16.msra.mxu0 %v2345
  %2719 = vmatprep.subr.bf16.mxu0 %v2352
  %2720 = vmatpush1.bf16.msra.mxu0 %v2351
  %2721 = vmatprep.subr.bf16.mxu0 %v2358
  %2722 = vmatpush1.bf16.msra.mxu0 %v2357
  %2723 = vmatprep.subr.bf16.mxu0 %v2364
  %2724 = vmatpush1.bf16.msra.mxu0 %v2363
  %2725 = vmatprep.subr.bf16.mxu0 %v2370
  %2726 = vmatpush1.bf16.msra.mxu0 %v2369
  %2727 = vmatprep.subr.bf16.mxu0 %v2376
  %2728 = vmatpush1.bf16.msra.mxu0 %v2375
  %2729 = vmatprep.subr.bf16.mxu0 %v2382
  %2730 = vmatpush1.bf16.msra.mxu0 %v2381
  %2731 = vmatprep.subr.bf16.mxu0 %v2388
  %2732 = vmatpush1.bf16.msra.mxu0 %v2387
  %2733 = vmatprep.subr.bf16.mxu0 %v2394
  %2734 = vmatpush1.bf16.msra.mxu0 %v2393
  %2735 = vmatprep.subr.bf16.mxu0 %v2400
  %2736 = vmatpush1.bf16.msra.mxu0 %v2399
  %2737 = vmatprep.subr.bf16.mxu0 %v2406
  %2738 = vmatpush1.bf16.msra.mxu0 %v2405
  %2739 = vmatprep.subr.bf16.mxu0 %v2412
  %2740 = vmatpush1.bf16.msra.mxu0 %v2411
  %2741 = vmatprep.subr.bf16.mxu0 %v2418
  %2742 = vmatpush1.bf16.msra.mxu0 %v2417
  %2743 = vmatprep.mubr.bf16.mxu0 %v1524
  %2744 = vmatmul.mubr.bf16.gmra.mrb[0].mxu0 %v1523
  %v2745 = vpop.f32.mrb[0].mxu0
  %v2746 = vadd.f32 %v1724, %v2745
  %v2747 = vpop.f32.mrb[0].mxu0
  %v2748 = vadd.f32 %v1728, %v2747
  %v2749 = vpop.f32.mrb[0].mxu0
  %v2750 = vadd.f32 %v1724, %v2749
  %v2751 = vpop.f32.mrb[0].mxu0
  %v2752 = vadd.f32 %v1728, %v2751
  %2753 = vdwg.mxu0
  %2754 = vmatprep.subr.bf16.mxu0 %v2424
  %2755 = vmatpush1.bf16.msra.mxu0 %v2423
  %2756 = vmatprep.subr.bf16.mxu0 %v2430
  %2757 = vmatpush1.bf16.msra.mxu0 %v2429
  %2758 = vmatprep.subr.bf16.mxu0 %v2436
  %2759 = vmatpush1.bf16.msra.mxu0 %v2435
  %2760 = vmatprep.subr.bf16.mxu0 %v2442
  %2761 = vmatpush1.bf16.msra.mxu0 %v2441
  %2762 = vmatprep.subr.bf16.mxu0 %v2448
  %2763 = vmatpush1.bf16.msra.mxu0 %v2447
  %2764 = vmatprep.subr.bf16.mxu0 %v2454
  %2765 = vmatpush1.bf16.msra.mxu0 %v2453
  %2766 = vmatprep.subr.bf16.mxu0 %v2460
  %2767 = vmatpush1.bf16.msra.mxu0 %v2459
  %2768 = vmatprep.subr.bf16.mxu0 %v2466
  %2769 = vmatpush1.bf16.msra.mxu0 %v2465
  %2770 = vmatprep.subr.bf16.mxu0 %v2472
  %2771 = vmatpush1.bf16.msra.mxu0 %v2471
  %2772 = vmatprep.subr.bf16.mxu0 %v2478
  %2773 = vmatpush1.bf16.msra.mxu0 %v2477
  %2774 = vmatprep.subr.bf16.mxu0 %v2484
  %2775 = vmatpush1.bf16.msra.mxu0 %v2483
  %2776 = vmatprep.subr.bf16.mxu0 %v2490
  %2777 = vmatpush1.bf16.msra.mxu0 %v2489
  %2778 = vmatprep.subr.bf16.mxu0 %v2496
  %2779 = vmatpush1.bf16.msra.mxu0 %v2495
  %2780 = vmatprep.subr.bf16.mxu0 %v2502
  %2781 = vmatpush1.bf16.msra.mxu0 %v2501
  %2782 = vmatprep.subr.bf16.mxu0 %v2508
  %2783 = vmatpush1.bf16.msra.mxu0 %v2507
  %2784 = vmatprep.subr.bf16.mxu0 %v2514
  %2785 = vmatpush1.bf16.msra.mxu0 %v2513
  %2786 = vmatprep.mubr.bf16.mxu0 %v1526
  %2787 = vmatmul.mubr.bf16.gmra.mrb[0].mxu0 %v1525
  %v2788 = vpop.f32.mrb[0].mxu0
  %v2789 = vadd.f32 %v2746, %v2788
  %v2790 = vpop.f32.mrb[0].mxu0
  %v2791 = vadd.f32 %v2748, %v2790
  %v2792 = vpop.f32.mrb[0].mxu0
  %v2793 = vadd.f32 %v2750, %v2792
  %v2794 = vpop.f32.mrb[0].mxu0
  %v2795 = vadd.f32 %v2752, %v2794
  %2796 = vdwg.mxu0
  %2797 = vmatprep.subr.bf16.mxu0 %v2330
  %2798 = vmatpush1.bf16.msra.mxu0 %v2329
  %2799 = vmatprep.subr.bf16.mxu0 %v2336
  %2800 = vmatpush1.bf16.msra.mxu0 %v2335
  %2801 = vmatprep.subr.bf16.mxu0 %v2342
  %2802 = vmatpush1.bf16.msra.mxu0 %v2341
  %2803 = vmatprep.subr.bf16.mxu0 %v2348
  %2804 = vmatpush1.bf16.msra.mxu0 %v2347
  %2805 = vmatprep.subr.bf16.mxu0 %v2354
  %2806 = vmatpush1.bf16.msra.mxu0 %v2353
  %2807 = vmatprep.subr.bf16.mxu0 %v2360
  %2808 = vmatpush1.bf16.msra.mxu0 %v2359
  %2809 = vmatprep.subr.bf16.mxu0 %v2366
  %2810 = vmatpush1.bf16.msra.mxu0 %v2365
  %2811 = vmatprep.subr.bf16.mxu0 %v2372
  %2812 = vmatpush1.bf16.msra.mxu0 %v2371
  %2813 = vmatprep.subr.bf16.mxu0 %v2378
  %2814 = vmatpush1.bf16.msra.mxu0 %v2377
  %2815 = vmatprep.subr.bf16.mxu0 %v2384
  %2816 = vmatpush1.bf16.msra.mxu0 %v2383
  %2817 = vmatprep.subr.bf16.mxu0 %v2390
  %2818 = vmatpush1.bf16.msra.mxu0 %v2389
  %2819 = vmatprep.subr.bf16.mxu0 %v2396
  %2820 = vmatpush1.bf16.msra.mxu0 %v2395
  %2821 = vmatprep.subr.bf16.mxu0 %v2402
  %2822 = vmatpush1.bf16.msra.mxu0 %v2401
  %2823 = vmatprep.subr.bf16.mxu0 %v2408
  %2824 = vmatpush1.bf16.msra.mxu0 %v2407
  %2825 = vmatprep.subr.bf16.mxu0 %v2414
  %2826 = vmatpush1.bf16.msra.mxu0 %v2413
  %2827 = vmatprep.subr.bf16.mxu0 %v2420
  %2828 = vmatpush1.bf16.msra.mxu0 %v2419
  %2829 = vmatprep.mubr.bf16.mxu0 %v1524
  %2830 = vmatmul.mubr.bf16.gmra.mrb[0].mxu0 %v1523
  %v2831 = vpop.f32.mrb[0].mxu0
  %v2832 = vadd.f32 %v1732, %v2831
  %v2833 = vpop.f32.mrb[0].mxu0
  %v2834 = vadd.f32 %v1736, %v2833
  %v2835 = vpop.f32.mrb[0].mxu0
  %v2836 = vadd.f32 %v1732, %v2835
  %v2837 = vpop.f32.mrb[0].mxu0
  %v2838 = vadd.f32 %v1736, %v2837
  %2839 = vdwg.mxu0
  %2840 = vmatprep.subr.bf16.mxu0 %v2426
  %2841 = vmatpush1.bf16.msra.mxu0 %v2425
  %2842 = vmatprep.subr.bf16.mxu0 %v2432
  %2843 = vmatpush1.bf16.msra.mxu0 %v2431
  %2844 = vmatprep.subr.bf16.mxu0 %v2438
  %2845 = vmatpush1.bf16.msra.mxu0 %v2437
  %2846 = vmatprep.subr.bf16.mxu0 %v2444
  %2847 = vmatpush1.bf16.msra.mxu0 %v2443
  %2848 = vmatprep.subr.bf16.mxu0 %v2450
  %2849 = vmatpush1.bf16.msra.mxu0 %v2449
  %2850 = vmatprep.subr.bf16.mxu0 %v2456
  %2851 = vmatpush1.bf16.msra.mxu0 %v2455
  %2852 = vmatprep.subr.bf16.mxu0 %v2462
  %2853 = vmatpush1.bf16.msra.mxu0 %v2461
  %2854 = vmatprep.subr.bf16.mxu0 %v2468
  %2855 = vmatpush1.bf16.msra.mxu0 %v2467
  %2856 = vmatprep.subr.bf16.mxu0 %v2474
  %2857 = vmatpush1.bf16.msra.mxu0 %v2473
  %2858 = vmatprep.subr.bf16.mxu0 %v2480
  %2859 = vmatpush1.bf16.msra.mxu0 %v2479
  %2860 = vmatprep.subr.bf16.mxu0 %v2486
  %2861 = vmatpush1.bf16.msra.mxu0 %v2485
  %2862 = vmatprep.subr.bf16.mxu0 %v2492
  %2863 = vmatpush1.bf16.msra.mxu0 %v2491
  %2864 = vmatprep.subr.bf16.mxu0 %v2498
  %2865 = vmatpush1.bf16.msra.mxu0 %v2497
  %2866 = vmatprep.subr.bf16.mxu0 %v2504
  %2867 = vmatpush1.bf16.msra.mxu0 %v2503
  %2868 = vmatprep.subr.bf16.mxu0 %v2510
  %2869 = vmatpush1.bf16.msra.mxu0 %v2509
  %2870 = vmatprep.subr.bf16.mxu0 %v2516
  %2871 = vmatpush1.bf16.msra.mxu0 %v2515
  %2872 = vmatprep.mubr.bf16.mxu0 %v1526
  %2873 = vmatmul.mubr.bf16.gmra.mrb[0].mxu0 %v1525
  %v2874 = vpop.f32.mrb[0].mxu0
  %v2875 = vadd.f32 %v2832, %v2874
  %v2876 = vpop.f32.mrb[0].mxu0
  %v2877 = vadd.f32 %v2834, %v2876
  %v2878 = vpop.f32.mrb[0].mxu0
  %v2879 = vadd.f32 %v2836, %v2878
  %v2880 = vpop.f32.mrb[0].mxu0
  %v2881 = vadd.f32 %v2838, %v2880
  %2882 = vdwg.mxu0
  %2883 = vmatprep.subr.bf16.mxu0 %v2332
  %2884 = vmatpush1.bf16.msra.mxu0 %v2331
  %2885 = vmatprep.subr.bf16.mxu0 %v2338
  %2886 = vmatpush1.bf16.msra.mxu0 %v2337
  %2887 = vmatprep.subr.bf16.mxu0 %v2344
  %2888 = vmatpush1.bf16.msra.mxu0 %v2343
  %2889 = vmatprep.subr.bf16.mxu0 %v2350
  %2890 = vmatpush1.bf16.msra.mxu0 %v2349
  %2891 = vmatprep.subr.bf16.mxu0 %v2356
  %2892 = vmatpush1.bf16.msra.mxu0 %v2355
  %2893 = vmatprep.subr.bf16.mxu0 %v2362
  %2894 = vmatpush1.bf16.msra.mxu0 %v2361
  %2895 = vmatprep.subr.bf16.mxu0 %v2368
  %2896 = vmatpush1.bf16.msra.mxu0 %v2367
  %2897 = vmatprep.subr.bf16.mxu0 %v2374
  %2898 = vmatpush1.bf16.msra.mxu0 %v2373
  %2899 = vmatprep.subr.bf16.mxu0 %v2380
  %2900 = vmatpush1.bf16.msra.mxu0 %v2379
  %2901 = vmatprep.subr.bf16.mxu0 %v2386
  %2902 = vmatpush1.bf16.msra.mxu0 %v2385
  %2903 = vmatprep.subr.bf16.mxu0 %v2392
  %2904 = vmatpush1.bf16.msra.mxu0 %v2391
  %2905 = vmatprep.subr.bf16.mxu0 %v2398
  %2906 = vmatpush1.bf16.msra.mxu0 %v2397
  %2907 = vmatprep.subr.bf16.mxu0 %v2404
  %2908 = vmatpush1.bf16.msra.mxu0 %v2403
  %2909 = vmatprep.subr.bf16.mxu0 %v2410
  %2910 = vmatpush1.bf16.msra.mxu0 %v2409
  %2911 = vmatprep.subr.bf16.mxu0 %v2416
  %2912 = vmatpush1.bf16.msra.mxu0 %v2415
  %2913 = vmatprep.subr.bf16.mxu0 %v2422
  %2914 = vmatpush1.bf16.msra.mxu0 %v2421
  %2915 = vmatprep.mubr.bf16.mxu0 %v1524
  %2916 = vmatmul.mubr.bf16.gmra.mrb[0].mxu0 %v1523
  %v2917 = vpop.f32.mrb[0].mxu0
  %v2918 = vadd.f32 %v1740, %v2917
  %v2919 = vpop.f32.mrb[0].mxu0
  %v2920 = vadd.f32 %v1744, %v2919
  %v2921 = vpop.f32.mrb[0].mxu0
  %v2922 = vadd.f32 %v1740, %v2921
  %v2923 = vpop.f32.mrb[0].mxu0
  %v2924 = vadd.f32 %v1744, %v2923
  %2925 = vdwg.mxu0
  %2926 = vmatprep.subr.bf16.mxu0 %v2428
  %2927 = vmatpush1.bf16.msra.mxu0 %v2427
  %2928 = vmatprep.subr.bf16.mxu0 %v2434
  %2929 = vmatpush1.bf16.msra.mxu0 %v2433
  %2930 = vmatprep.subr.bf16.mxu0 %v2440
  %2931 = vmatpush1.bf16.msra.mxu0 %v2439
  %2932 = vmatprep.subr.bf16.mxu0 %v2446
  %2933 = vmatpush1.bf16.msra.mxu0 %v2445
  %2934 = vmatprep.subr.bf16.mxu0 %v2452
  %2935 = vmatpush1.bf16.msra.mxu0 %v2451
  %2936 = vmatprep.subr.bf16.mxu0 %v2458
  %2937 = vmatpush1.bf16.msra.mxu0 %v2457
  %2938 = vmatprep.subr.bf16.mxu0 %v2464
  %2939 = vmatpush1.bf16.msra.mxu0 %v2463
  %2940 = vmatprep.subr.bf16.mxu0 %v2470
  %2941 = vmatpush1.bf16.msra.mxu0 %v2469
  %2942 = vmatprep.subr.bf16.mxu0 %v2476
  %2943 = vmatpush1.bf16.msra.mxu0 %v2475
  %2944 = vmatprep.subr.bf16.mxu0 %v2482
  %2945 = vmatpush1.bf16.msra.mxu0 %v2481
  %2946 = vmatprep.subr.bf16.mxu0 %v2488
  %2947 = vmatpush1.bf16.msra.mxu0 %v2487
  %2948 = vmatprep.subr.bf16.mxu0 %v2494
  %2949 = vmatpush1.bf16.msra.mxu0 %v2493
  %2950 = vmatprep.subr.bf16.mxu0 %v2500
  %2951 = vmatpush1.bf16.msra.mxu0 %v2499
  %2952 = vmatprep.subr.bf16.mxu0 %v2506
  %2953 = vmatpush1.bf16.msra.mxu0 %v2505
  %2954 = vmatprep.subr.bf16.mxu0 %v2512
  %2955 = vmatpush1.bf16.msra.mxu0 %v2511
  %2956 = vmatprep.subr.bf16.mxu0 %v2518
  %2957 = vmatpush1.bf16.msra.mxu0 %v2517
  %2958 = vmatprep.mubr.bf16.mxu0 %v1526
  %2959 = vmatmul.mubr.bf16.gmra.mrb[0].mxu0 %v1525
  %v2960 = vpop.f32.mrb[0].mxu0
  %v2961 = vadd.f32 %v2918, %v2960
  %v2962 = vpop.f32.mrb[0].mxu0
  %v2963 = vadd.f32 %v2920, %v2962
  %v2964 = vpop.f32.mrb[0].mxu0
  %v2965 = vadd.f32 %v2922, %v2964
  %v2966 = vpop.f32.mrb[0].mxu0
  %v2967 = vadd.f32 %v2924, %v2966
  %2968 = vdwg.mxu0
  %2969 = vst [vmem:[%s17] sm:$0xff] %v2789
  %2970 = vst [vmem:[%s17 + $0x8] sm:$0xff] %v2791
  %2971 = vst [vmem:[%s17 + $0x10] sm:$0xff] %v2875
  %2972 = vst [vmem:[%s17 + $0x18] sm:$0xff] %v2877
  %2973 = vst [vmem:[%s17 + $0x20] sm:$0xff] %v2961
  %2974 = vst [vmem:[%s17 + $0x28] sm:$0xff] %v2963
  %2975 = vst [vmem:[%s17 + $0x30] sm:$0xff] %v2793
  %2976 = vst [vmem:[%s17 + $0x38] sm:$0xff] %v2795
  %2977 = vst [vmem:[%s17 + $0x40] sm:$0xff] %v2879
  %2978 = vst [vmem:[%s17 + $0x48] sm:$0xff] %v2881
  %2979 = vst [vmem:[%s17 + $0x50] sm:$0xff] %v2965
  %2980 = vst [vmem:[%s17 + $0x58] sm:$0xff] %v2967
  // Predicated region
  $region66: #{mask_raft_forward.8} parent=0 // pred_check
    _
  $region67: #{mask_raft_forward.8} parent=0 // pred_check_branch
    %2982 = sbr.rel (0) target = $region69
  $region68: #{mask_raft_forward.8} parent=0 // pred_region
    _
  $region69: #{mask_raft_forward.8} parent=0 // pred_fallthru
    _
  // Predicated region
  $region70: #{mask_raft_forward.8} parent=0 // pred_check
    _
  $region71: #{mask_raft_forward.8} parent=0 // pred_check_branch
    %2984 = sbr.rel (0) target = $region73
  $region72: #{mask_raft_forward.8} parent=0 // pred_region
    _
  $region73: #{mask_raft_forward.8} parent=0 // pred_fallthru
    _
  // Predicated region
  $region74: #{mask_raft_forward.8} parent=0 // pred_check
    _
  $region75: #{mask_raft_forward.8} parent=0 // pred_check_branch
    %2986 = sbr.rel (0) target = $region77
  $region76: #{mask_raft_forward.8} parent=0 // pred_region
    _
  $region77: #{mask_raft_forward.8} parent=0 // pred_fallthru
    _
  // Predicated region
  $region78: #{mask_raft_forward.8} parent=0 // pred_check
    _
  $region79: #{mask_raft_forward.8} parent=0 // pred_check_branch
    %2988 = sbr.rel (0) target = $region81
  $region80: #{mask_raft_forward.8} parent=0 // pred_region
    _
  $region81: #{mask_raft_forward.8} parent=0 // pred_fallthru
    _

// kernel: mask_raft_forward.11
$region0: #{mask_raft_forward.11}
  #allocation0 [shape = 'u32[]', space=smem, size = 0x4, offset = 0x4, fixed_abs, tag = 'smem constant byte address 0x4 - core index']
  #allocation1 [shape = 'u32[144,128]{1,0:T(1,128)}', space=vmem, size = 0x12000, scoped, tag = 'internal scratch']
  %s0 = inlined_call_operand.vmem [shape: f32[1,9,64,16], index: 0, kind: input, shape index: {}]
  %s1 = inlined_call_operand.vmem [shape: f32[1,2,9,16], index: 1, kind: input, shape index: {}]
  %s2 = inlined_call_operand.vmem [shape: f32[1,2,64,16], index: 2, kind: output, shape index: {}]
  %s3 = sld [smem:[#allocation0]]
  $region18: #{mask_raft_forward.11} parent=0
    _
  %s5 = ssub.s32 1, %s3
  %s6 = scalar_select 0, %s5, %s3
  // Predicated region
  $region2: #{mask_raft_forward.11} parent=0 // pred_check
    _
  $region3: #{mask_raft_forward.11} parent=0 // pred_check_branch
    %8 = sbr.rel (0) target = $region5
  $region4: #{mask_raft_forward.11} parent=0 // pred_region
    _
  $region5: #{mask_raft_forward.11} parent=0 // pred_fallthru
    _
  // Predicated region
  $region6: #{mask_raft_forward.11} parent=0 // pred_check
    _
  $region7: #{mask_raft_forward.11} parent=0 // pred_check_branch
    %10 = sbr.rel (0) target = $region9
  $region8: #{mask_raft_forward.11} parent=0 // pred_region
    _
  $region9: #{mask_raft_forward.11} parent=0 // pred_fallthru
    _
  %v11 = vld [vmem:[%s0] sm:$0xff]
  %v12 = vld [vmem:[%s0 + $0x8] sm:$0xff]
  %v13 = vld [vmem:[%s0 + $0x10] sm:$0xff]
  %v14 = vld [vmem:[%s0 + $0x18] sm:$0xff]
  %v15 = vld [vmem:[%s0 + $0x20] sm:$0xff]
  %v16 = vld [vmem:[%s0 + $0x28] sm:$0xff]
  %v17 = vld [vmem:[%s0 + $0x30] sm:$0xff]
  %v18 = vld [vmem:[%s0 + $0x38] sm:$0xff]
  %v19 = vld [vmem:[%s0 + $0x40] sm:$0xff]
  %v20 = vld [vmem:[%s0 + $0x48] sm:$0xff]
  %v21 = vld [vmem:[%s0 + $0x50] sm:$0xff]
  %v22 = vld [vmem:[%s0 + $0x58] sm:$0xff]
  %v23 = vld [vmem:[%s0 + $0x60] sm:$0xff]
  %v24 = vld [vmem:[%s0 + $0x68] sm:$0xff]
  %v25 = vld [vmem:[%s0 + $0x70] sm:$0xff]
  %v26 = vld [vmem:[%s0 + $0x78] sm:$0xff]
  %v27 = vld [vmem:[%s0 + $0x80] sm:$0xff]
  %v28 = vld [vmem:[%s0 + $0x88] sm:$0xff]
  %v29 = vld [vmem:[%s0 + $0x90] sm:$0xff]
  %v30 = vld [vmem:[%s0 + $0x98] sm:$0xff]
  %v31 = vld [vmem:[%s0 + $0xa0] sm:$0xff]
  %v32 = vld [vmem:[%s0 + $0xa8] sm:$0xff]
  %v33 = vld [vmem:[%s0 + $0xb0] sm:$0xff]
  %v34 = vld [vmem:[%s0 + $0xb8] sm:$0xff]
  %v35 = vld [vmem:[%s0 + $0xc0] sm:$0xff]
  %v36 = vld [vmem:[%s0 + $0xc8] sm:$0xff]
  %v37 = vld [vmem:[%s0 + $0xd0] sm:$0xff]
  %v38 = vld [vmem:[%s0 + $0xd8] sm:$0xff]
  %v39 = vld [vmem:[%s0 + $0xe0] sm:$0xff]
  %v40 = vld [vmem:[%s0 + $0xe8] sm:$0xff]
  %v41 = vld [vmem:[%s0 + $0xf0] sm:$0xff]
  %v42 = vld [vmem:[%s0 + $0xf8] sm:$0xff]
  %v43 = vld [vmem:[%s0 + $0x100] sm:$0xff]
  %v44 = vld [vmem:[%s0 + $0x108] sm:$0xff]
  %v45 = vld [vmem:[%s0 + $0x110] sm:$0xff]
  %v46 = vld [vmem:[%s0 + $0x118] sm:$0xff]
  %v47 = vld [vmem:[%s0 + $0x120] sm:$0xff]
  %v48 = vld [vmem:[%s0 + $0x128] sm:$0xff]
  %v49 = vld [vmem:[%s0 + $0x130] sm:$0xff]
  %v50 = vld [vmem:[%s0 + $0x138] sm:$0xff]
  %v51 = vld [vmem:[%s0 + $0x140] sm:$0xff]
  %v52 = vld [vmem:[%s0 + $0x148] sm:$0xff]
  %v53 = vld [vmem:[%s0 + $0x150] sm:$0xff]
  %v54 = vld [vmem:[%s0 + $0x158] sm:$0xff]
  %v55 = vld [vmem:[%s0 + $0x160] sm:$0xff]
  %v56 = vld [vmem:[%s0 + $0x168] sm:$0xff]
  %v57 = vld [vmem:[%s0 + $0x170] sm:$0xff]
  %v58 = vld [vmem:[%s0 + $0x178] sm:$0xff]
  %v59 = vld [vmem:[%s0 + $0x180] sm:$0xff]
  %v60 = vld [vmem:[%s0 + $0x188] sm:$0xff]
  %v61 = vld [vmem:[%s0 + $0x190] sm:$0xff]
  %v62 = vld [vmem:[%s0 + $0x198] sm:$0xff]
  %v63 = vld [vmem:[%s0 + $0x1a0] sm:$0xff]
  %v64 = vld [vmem:[%s0 + $0x1a8] sm:$0xff]
  %v65 = vld [vmem:[%s0 + $0x1b0] sm:$0xff]
  %v66 = vld [vmem:[%s0 + $0x1b8] sm:$0xff]
  %v67 = vld [vmem:[%s0 + $0x1c0] sm:$0xff]
  %v68 = vld [vmem:[%s0 + $0x1c8] sm:$0xff]
  %v69 = vld [vmem:[%s0 + $0x1d0] sm:$0xff]
  %v70 = vld [vmem:[%s0 + $0x1d8] sm:$0xff]
  %v71 = vld [vmem:[%s0 + $0x1e0] sm:$0xff]
  %v72 = vld [vmem:[%s0 + $0x1e8] sm:$0xff]
  %v73 = vld [vmem:[%s0 + $0x1f0] sm:$0xff]
  %v74 = vld [vmem:[%s0 + $0x1f8] sm:$0xff]
  %v75 = vld [vmem:[%s0 + $0x200] sm:$0xff]
  %v76 = vld [vmem:[%s0 + $0x208] sm:$0xff]
  %v77 = vld [vmem:[%s0 + $0x210] sm:$0xff]
  %v78 = vld [vmem:[%s0 + $0x218] sm:$0xff]
  %v79 = vld [vmem:[%s0 + $0x220] sm:$0xff]
  %v80 = vld [vmem:[%s0 + $0x228] sm:$0xff]
  %v81 = vld [vmem:[%s0 + $0x230] sm:$0xff]
  %v82 = vld [vmem:[%s0 + $0x238] sm:$0xff]
  %vm83 = vcmask 130048
  %v84 = vsel %vm83, %v11, -inf
  %v85 = vsel %vm83, %v19, -inf
  %v86 = vmax.f32 %v84, %v85
  %v87 = vsel %vm83, %v27, -inf
  %v88 = vmax.f32 %v86, %v87
  %v89 = vsel %vm83, %v35, -inf
  %v90 = vmax.f32 %v88, %v89
  %v91 = vsel %vm83, %v43, -inf
  %v92 = vmax.f32 %v90, %v91
  %v93 = vsel %vm83, %v51, -inf
  %v94 = vmax.f32 %v92, %v93
  %v95 = vsel %vm83, %v59, -inf
  %v96 = vmax.f32 %v94, %v95
  %v97 = vsel %vm83, %v67, -inf
  %v98 = vmax.f32 %v96, %v97
  %v99 = vsel %vm83, %v75, -inf
  %v100 = vmax.f32 %v98, %v99
  %v101 = vsel %vm83, %v12, -inf
  %v102 = vsel %vm83, %v20, -inf
  %v103 = vmax.f32 %v101, %v102
  %v104 = vsel %vm83, %v28, -inf
  %v105 = vmax.f32 %v103, %v104
  %v106 = vsel %vm83, %v36, -inf
  %v107 = vmax.f32 %v105, %v106
  %v108 = vsel %vm83, %v44, -inf
  %v109 = vmax.f32 %v107, %v108
  %v110 = vsel %vm83, %v52, -inf
  %v111 = vmax.f32 %v109, %v110
  %v112 = vsel %vm83, %v60, -inf
  %v113 = vmax.f32 %v111, %v112
  %v114 = vsel %vm83, %v68, -inf
  %v115 = vmax.f32 %v113, %v114
  %v116 = vsel %vm83, %v76, -inf
  %v117 = vmax.f32 %v115, %v116
  %v118 = vsel %vm83, %v13, -inf
  %v119 = vsel %vm83, %v21, -inf
  %v120 = vmax.f32 %v118, %v119
  %v121 = vsel %vm83, %v29, -inf
  %v122 = vmax.f32 %v120, %v121
  %v123 = vsel %vm83, %v37, -inf
  %v124 = vmax.f32 %v122, %v123
  %v125 = vsel %vm83, %v45, -inf
  %v126 = vmax.f32 %v124, %v125
  %v127 = vsel %vm83, %v53, -inf
  %v128 = vmax.f32 %v126, %v127
  %v129 = vsel %vm83, %v61, -inf
  %v130 = vmax.f32 %v128, %v129
  %v131 = vsel %vm83, %v69, -inf
  %v132 = vmax.f32 %v130, %v131
  %v133 = vsel %vm83, %v77, -inf
  %v134 = vmax.f32 %v132, %v133
  %v135 = vsel %vm83, %v14, -inf
  %v136 = vsel %vm83, %v22, -inf
  %v137 = vmax.f32 %v135, %v136
  %v138 = vsel %vm83, %v30, -inf
  %v139 = vmax.f32 %v137, %v138
  %v140 = vsel %vm83, %v38, -inf
  %v141 = vmax.f32 %v139, %v140
  %v142 = vsel %vm83, %v46, -inf
  %v143 = vmax.f32 %v141, %v142
  %v144 = vsel %vm83, %v54, -inf
  %v145 = vmax.f32 %v143, %v144
  %v146 = vsel %vm83, %v62, -inf
  %v147 = vmax.f32 %v145, %v146
  %v148 = vsel %vm83, %v70, -inf
  %v149 = vmax.f32 %v147, %v148
  %v150 = vsel %vm83, %v78, -inf
  %v151 = vmax.f32 %v149, %v150
  %v152 = vsel %vm83, %v15, -inf
  %v153 = vsel %vm83, %v23, -inf
  %v154 = vmax.f32 %v152, %v153
  %v155 = vsel %vm83, %v31, -inf
  %v156 = vmax.f32 %v154, %v155
  %v157 = vsel %vm83, %v39, -inf
  %v158 = vmax.f32 %v156, %v157
  %v159 = vsel %vm83, %v47, -inf
  %v160 = vmax.f32 %v158, %v159
  %v161 = vsel %vm83, %v55, -inf
  %v162 = vmax.f32 %v160, %v161
  %v163 = vsel %vm83, %v63, -inf
  %v164 = vmax.f32 %v162, %v163
  %v165 = vsel %vm83, %v71, -inf
  %v166 = vmax.f32 %v164, %v165
  %v167 = vsel %vm83, %v79, -inf
  %v168 = vmax.f32 %v166, %v167
  %v169 = vsel %vm83, %v16, -inf
  %v170 = vsel %vm83, %v24, -inf
  %v171 = vmax.f32 %v169, %v170
  %v172 = vsel %vm83, %v32, -inf
  %v173 = vmax.f32 %v171, %v172
  %v174 = vsel %vm83, %v40, -inf
  %v175 = vmax.f32 %v173, %v174
  %v176 = vsel %vm83, %v48, -inf
  %v177 = vmax.f32 %v175, %v176
  %v178 = vsel %vm83, %v56, -inf
  %v179 = vmax.f32 %v177, %v178
  %v180 = vsel %vm83, %v64, -inf
  %v181 = vmax.f32 %v179, %v180
  %v182 = vsel %vm83, %v72, -inf
  %v183 = vmax.f32 %v181, %v182
  %v184 = vsel %vm83, %v80, -inf
  %v185 = vmax.f32 %v183, %v184
  %v186 = vsel %vm83, %v17, -inf
  %v187 = vsel %vm83, %v25, -inf
  %v188 = vmax.f32 %v186, %v187
  %v189 = vsel %vm83, %v33, -inf
  %v190 = vmax.f32 %v188, %v189
  %v191 = vsel %vm83, %v41, -inf
  %v192 = vmax.f32 %v190, %v191
  %v193 = vsel %vm83, %v49, -inf
  %v194 = vmax.f32 %v192, %v193
  %v195 = vsel %vm83, %v57, -inf
  %v196 = vmax.f32 %v194, %v195
  %v197 = vsel %vm83, %v65, -inf
  %v198 = vmax.f32 %v196, %v197
  %v199 = vsel %vm83, %v73, -inf
  %v200 = vmax.f32 %v198, %v199
  %v201 = vsel %vm83, %v81, -inf
  %v202 = vmax.f32 %v200, %v201
  %v203 = vsel %vm83, %v18, -inf
  %v204 = vsel %vm83, %v26, -inf
  %v205 = vmax.f32 %v203, %v204
  %v206 = vsel %vm83, %v34, -inf
  %v207 = vmax.f32 %v205, %v206
  %v208 = vsel %vm83, %v42, -inf
  %v209 = vmax.f32 %v207, %v208
  %v210 = vsel %vm83, %v50, -inf
  %v211 = vmax.f32 %v209, %v210
  %v212 = vsel %vm83, %v58, -inf
  %v213 = vmax.f32 %v211, %v212
  %v214 = vsel %vm83, %v66, -inf
  %v215 = vmax.f32 %v213, %v214
  %v216 = vsel %vm83, %v74, -inf
  %v217 = vmax.f32 %v215, %v216
  %v218 = vsel %vm83, %v82, -inf
  %v219 = vmax.f32 %v217, %v218
  %v220 = vsub.f32 %v11, %v100
  %v221 = vsub.f32 %v12, %v117
  %v222 = vsub.f32 %v13, %v134
  %v223 = vsub.f32 %v14, %v151
  %v224 = vsub.f32 %v15, %v168
  %v225 = vsub.f32 %v16, %v185
  %v226 = vsub.f32 %v17, %v202
  %v227 = vsub.f32 %v18, %v219
  %v228 = vsub.f32 %v19, %v100
  %v229 = vsub.f32 %v20, %v117
  %v230 = vsub.f32 %v21, %v134
  %v231 = vsub.f32 %v22, %v151
  %v232 = vsub.f32 %v23, %v168
  %v233 = vsub.f32 %v24, %v185
  %v234 = vsub.f32 %v25, %v202
  %v235 = vsub.f32 %v26, %v219
  %v236 = vsub.f32 %v27, %v100
  %v237 = vsub.f32 %v28, %v117
  %v238 = vsub.f32 %v29, %v134
  %v239 = vsub.f32 %v30, %v151
  %v240 = vsub.f32 %v31, %v168
  %v241 = vsub.f32 %v32, %v185
  %v242 = vsub.f32 %v33, %v202
  %v243 = vsub.f32 %v34, %v219
  %v244 = vsub.f32 %v35, %v100
  %v245 = vsub.f32 %v36, %v117
  %v246 = vsub.f32 %v37, %v134
  %v247 = vsub.f32 %v38, %v151
  %v248 = vsub.f32 %v39, %v168
  %v249 = vsub.f32 %v40, %v185
  %v250 = vsub.f32 %v41, %v202
  %v251 = vsub.f32 %v42, %v219
  %v252 = vsub.f32 %v43, %v100
  %v253 = vsub.f32 %v44, %v117
  %v254 = vsub.f32 %v45, %v134
  %v255 = vsub.f32 %v46, %v151
  %v256 = vsub.f32 %v47, %v168
  %v257 = vsub.f32 %v48, %v185
  %v258 = vsub.f32 %v49, %v202
  %v259 = vsub.f32 %v50, %v219
  %v260 = vsub.f32 %v51, %v100
  %v261 = vsub.f32 %v52, %v117
  %v262 = vsub.f32 %v53, %v134
  %v263 = vsub.f32 %v54, %v151
  %v264 = vsub.f32 %v55, %v168
  %v265 = vsub.f32 %v56, %v185
  %v266 = vsub.f32 %v57, %v202
  %v267 = vsub.f32 %v58, %v219
  %v268 = vsub.f32 %v59, %v100
  %v269 = vsub.f32 %v60, %v117
  %v270 = vsub.f32 %v61, %v134
  %v271 = vsub.f32 %v62, %v151
  %v272 = vsub.f32 %v63, %v168
  %v273 = vsub.f32 %v64, %v185
  %v274 = vsub.f32 %v65, %v202
  %v275 = vsub.f32 %v66, %v219
  %v276 = vsub.f32 %v67, %v100
  %v277 = vsub.f32 %v68, %v117
  %v278 = vsub.f32 %v69, %v134
  %v279 = vsub.f32 %v70, %v151
  %v280 = vsub.f32 %v71, %v168
  %v281 = vsub.f32 %v72, %v185
  %v282 = vsub.f32 %v73, %v202
  %v283 = vsub.f32 %v74, %v219
  %v284 = vsub.f32 %v75, %v100
  %v285 = vsub.f32 %v76, %v117
  %v286 = vsub.f32 %v77, %v134
  %v287 = vsub.f32 %v78, %v151
  %v288 = vsub.f32 %v79, %v168
  %v289 = vsub.f32 %v80, %v185
  %v290 = vsub.f32 %v81, %v202
  %v291 = vsub.f32 %v82, %v219
  %v292 = vmul.f32 %v220, 1.442695
  %v293 = vpow.pop %v292
  %v294 = vmul.f32 %v221, 1.442695
  %v295 = vpow.pop %v294
  %v296 = vmul.f32 %v222, 1.442695
  %v297 = vpow.pop %v296
  %v298 = vmul.f32 %v223, 1.442695
  %v299 = vpow.pop %v298
  %v300 = vmul.f32 %v224, 1.442695
  %v301 = vpow.pop %v300
  %v302 = vmul.f32 %v225, 1.442695
  %v303 = vpow.pop %v302
  %v304 = vmul.f32 %v226, 1.442695
  %v305 = vpow.pop %v304
  %v306 = vmul.f32 %v227, 1.442695
  %v307 = vpow.pop %v306
  %v308 = vmul.f32 %v228, 1.442695
  %v309 = vpow.pop %v308
  %v310 = vmul.f32 %v229, 1.442695
  %v311 = vpow.pop %v310
  %v312 = vmul.f32 %v230, 1.442695
  %v313 = vpow.pop %v312
  %v314 = vmul.f32 %v231, 1.442695
  %v315 = vpow.pop %v314
  %v316 = vmul.f32 %v232, 1.442695
  %v317 = vpow.pop %v316
  %v318 = vmul.f32 %v233, 1.442695
  %v319 = vpow.pop %v318
  %v320 = vmul.f32 %v234, 1.442695
  %v321 = vpow.pop %v320
  %v322 = vmul.f32 %v235, 1.442695
  %v323 = vpow.pop %v322
  %v324 = vmul.f32 %v236, 1.442695
  %v325 = vpow.pop %v324
  %v326 = vmul.f32 %v237, 1.442695
  %v327 = vpow.pop %v326
  %v328 = vmul.f32 %v238, 1.442695
  %v329 = vpow.pop %v328
  %v330 = vmul.f32 %v239, 1.442695
  %v331 = vpow.pop %v330
  %v332 = vmul.f32 %v240, 1.442695
  %v333 = vpow.pop %v332
  %v334 = vmul.f32 %v241, 1.442695
  %v335 = vpow.pop %v334
  %v336 = vmul.f32 %v242, 1.442695
  %v337 = vpow.pop %v336
  %v338 = vmul.f32 %v243, 1.442695
  %v339 = vpow.pop %v338
  %v340 = vmul.f32 %v244, 1.442695
  %v341 = vpow.pop %v340
  %v342 = vmul.f32 %v245, 1.442695
  %v343 = vpow.pop %v342
  %v344 = vmul.f32 %v246, 1.442695
  %v345 = vpow.pop %v344
  %v346 = vmul.f32 %v247, 1.442695
  %v347 = vpow.pop %v346
  %v348 = vmul.f32 %v248, 1.442695
  %v349 = vpow.pop %v348
  %v350 = vmul.f32 %v249, 1.442695
  %v351 = vpow.pop %v350
  %v352 = vmul.f32 %v250, 1.442695
  %v353 = vpow.pop %v352
  %v354 = vmul.f32 %v251, 1.442695
  %v355 = vpow.pop %v354
  %v356 = vmul.f32 %v252, 1.442695
  %v357 = vpow.pop %v356
  %v358 = vmul.f32 %v253, 1.442695
  %v359 = vpow.pop %v358
  %v360 = vmul.f32 %v254, 1.442695
  %v361 = vpow.pop %v360
  %v362 = vmul.f32 %v255, 1.442695
  %v363 = vpow.pop %v362
  %v364 = vmul.f32 %v256, 1.442695
  %v365 = vpow.pop %v364
  %v366 = vmul.f32 %v257, 1.442695
  %v367 = vpow.pop %v366
  %v368 = vmul.f32 %v258, 1.442695
  %v369 = vpow.pop %v368
  %v370 = vmul.f32 %v259, 1.442695
  %v371 = vpow.pop %v370
  %v372 = vmul.f32 %v260, 1.442695
  %v373 = vpow.pop %v372
  %v374 = vmul.f32 %v261, 1.442695
  %v375 = vpow.pop %v374
  %v376 = vmul.f32 %v262, 1.442695
  %v377 = vpow.pop %v376
  %v378 = vmul.f32 %v263, 1.442695
  %v379 = vpow.pop %v378
  %v380 = vmul.f32 %v264, 1.442695
  %v381 = vpow.pop %v380
  %v382 = vmul.f32 %v265, 1.442695
  %v383 = vpow.pop %v382
  %v384 = vmul.f32 %v266, 1.442695
  %v385 = vpow.pop %v384
  %v386 = vmul.f32 %v267, 1.442695
  %v387 = vpow.pop %v386
  %v388 = vmul.f32 %v268, 1.442695
  %v389 = vpow.pop %v388
  %v390 = vmul.f32 %v269, 1.442695
  %v391 = vpow.pop %v390
  %v392 = vmul.f32 %v270, 1.442695
  %v393 = vpow.pop %v392
  %v394 = vmul.f32 %v271, 1.442695
  %v395 = vpow.pop %v394
  %v396 = vmul.f32 %v272, 1.442695
  %v397 = vpow.pop %v396
  %v398 = vmul.f32 %v273, 1.442695
  %v399 = vpow.pop %v398
  %v400 = vmul.f32 %v274, 1.442695
  %v401 = vpow.pop %v400
  %v402 = vmul.f32 %v275, 1.442695
  %v403 = vpow.pop %v402
  %v404 = vmul.f32 %v276, 1.442695
  %v405 = vpow.pop %v404
  %v406 = vmul.f32 %v277, 1.442695
  %v407 = vpow.pop %v406
  %v408 = vmul.f32 %v278, 1.442695
  %v409 = vpow.pop %v408
  %v410 = vmul.f32 %v279, 1.442695
  %v411 = vpow.pop %v410
  %v412 = vmul.f32 %v280, 1.442695
  %v413 = vpow.pop %v412
  %v414 = vmul.f32 %v281, 1.442695
  %v415 = vpow.pop %v414
  %v416 = vmul.f32 %v282, 1.442695
  %v417 = vpow.pop %v416
  %v418 = vmul.f32 %v283, 1.442695
  %v419 = vpow.pop %v418
  %v420 = vmul.f32 %v284, 1.442695
  %v421 = vpow.pop %v420
  %v422 = vmul.f32 %v285, 1.442695
  %v423 = vpow.pop %v422
  %v424 = vmul.f32 %v286, 1.442695
  %v425 = vpow.pop %v424
  %v426 = vmul.f32 %v287, 1.442695
  %v427 = vpow.pop %v426
  %v428 = vmul.f32 %v288, 1.442695
  %v429 = vpow.pop %v428
  %v430 = vmul.f32 %v289, 1.442695
  %v431 = vpow.pop %v430
  %v432 = vmul.f32 %v290, 1.442695
  %v433 = vpow.pop %v432
  %v434 = vmul.f32 %v291, 1.442695
  %v435 = vpow.pop %v434
  %v436 = vsel %vm83, %v293, 0.0
  %v437 = vsel %vm83, %v309, 0.0
  %v438 = vadd.f32 %v436, %v437
  %v439 = vsel %vm83, %v325, 0.0
  %v440 = vadd.f32 %v438, %v439
  %v441 = vsel %vm83, %v341, 0.0
  %v442 = vadd.f32 %v440, %v441
  %v443 = vsel %vm83, %v357, 0.0
  %v444 = vadd.f32 %v442, %v443
  %v445 = vsel %vm83, %v373, 0.0
  %v446 = vadd.f32 %v444, %v445
  %v447 = vsel %vm83, %v389, 0.0
  %v448 = vadd.f32 %v446, %v447
  %v449 = vsel %vm83, %v405, 0.0
  %v450 = vadd.f32 %v448, %v449
  %v451 = vsel %vm83, %v421, 0.0
  %v452 = vadd.f32 %v450, %v451
  %v453 = vsel %vm83, %v295, 0.0
  %v454 = vsel %vm83, %v311, 0.0
  %v455 = vadd.f32 %v453, %v454
  %v456 = vsel %vm83, %v327, 0.0
  %v457 = vadd.f32 %v455, %v456
  %v458 = vsel %vm83, %v343, 0.0
  %v459 = vadd.f32 %v457, %v458
  %v460 = vsel %vm83, %v359, 0.0
  %v461 = vadd.f32 %v459, %v460
  %v462 = vsel %vm83, %v375, 0.0
  %v463 = vadd.f32 %v461, %v462
  %v464 = vsel %vm83, %v391, 0.0
  %v465 = vadd.f32 %v463, %v464
  %v466 = vsel %vm83, %v407, 0.0
  %v467 = vadd.f32 %v465, %v466
  %v468 = vsel %vm83, %v423, 0.0
  %v469 = vadd.f32 %v467, %v468
  %v470 = vsel %vm83, %v297, 0.0
  %v471 = vsel %vm83, %v313, 0.0
  %v472 = vadd.f32 %v470, %v471
  %v473 = vsel %vm83, %v329, 0.0
  %v474 = vadd.f32 %v472, %v473
  %v475 = vsel %vm83, %v345, 0.0
  %v476 = vadd.f32 %v474, %v475
  %v477 = vsel %vm83, %v361, 0.0
  %v478 = vadd.f32 %v476, %v477
  %v479 = vsel %vm83, %v377, 0.0
  %v480 = vadd.f32 %v478, %v479
  %v481 = vsel %vm83, %v393, 0.0
  %v482 = vadd.f32 %v480, %v481
  %v483 = vsel %vm83, %v409, 0.0
  %v484 = vadd.f32 %v482, %v483
  %v485 = vsel %vm83, %v425, 0.0
  %v486 = vadd.f32 %v484, %v485
  %v487 = vsel %vm83, %v299, 0.0
  %v488 = vsel %vm83, %v315, 0.0
  %v489 = vadd.f32 %v487, %v488
  %v490 = vsel %vm83, %v331, 0.0
  %v491 = vadd.f32 %v489, %v490
  %v492 = vsel %vm83, %v347, 0.0
  %v493 = vadd.f32 %v491, %v492
  %v494 = vsel %vm83, %v363, 0.0
  %v495 = vadd.f32 %v493, %v494
  %v496 = vsel %vm83, %v379, 0.0
  %v497 = vadd.f32 %v495, %v496
  %v498 = vsel %vm83, %v395, 0.0
  %v499 = vadd.f32 %v497, %v498
  %v500 = vsel %vm83, %v411, 0.0
  %v501 = vadd.f32 %v499, %v500
  %v502 = vsel %vm83, %v427, 0.0
  %v503 = vadd.f32 %v501, %v502
  %v504 = vsel %vm83, %v301, 0.0
  %v505 = vsel %vm83, %v317, 0.0
  %v506 = vadd.f32 %v504, %v505
  %v507 = vsel %vm83, %v333, 0.0
  %v508 = vadd.f32 %v506, %v507
  %v509 = vsel %vm83, %v349, 0.0
  %v510 = vadd.f32 %v508, %v509
  %v511 = vsel %vm83, %v365, 0.0
  %v512 = vadd.f32 %v510, %v511
  %v513 = vsel %vm83, %v381, 0.0
  %v514 = vadd.f32 %v512, %v513
  %v515 = vsel %vm83, %v397, 0.0
  %v516 = vadd.f32 %v514, %v515
  %v517 = vsel %vm83, %v413, 0.0
  %v518 = vadd.f32 %v516, %v517
  %v519 = vsel %vm83, %v429, 0.0
  %v520 = vadd.f32 %v518, %v519
  %v521 = vsel %vm83, %v303, 0.0
  %v522 = vsel %vm83, %v319, 0.0
  %v523 = vadd.f32 %v521, %v522
  %v524 = vsel %vm83, %v335, 0.0
  %v525 = vadd.f32 %v523, %v524
  %v526 = vsel %vm83, %v351, 0.0
  %v527 = vadd.f32 %v525, %v526
  %v528 = vsel %vm83, %v367, 0.0
  %v529 = vadd.f32 %v527, %v528
  %v530 = vsel %vm83, %v383, 0.0
  %v531 = vadd.f32 %v529, %v530
  %v532 = vsel %vm83, %v399, 0.0
  %v533 = vadd.f32 %v531, %v532
  %v534 = vsel %vm83, %v415, 0.0
  %v535 = vadd.f32 %v533, %v534
  %v536 = vsel %vm83, %v431, 0.0
  %v537 = vadd.f32 %v535, %v536
  %v538 = vsel %vm83, %v305, 0.0
  %v539 = vsel %vm83, %v321, 0.0
  %v540 = vadd.f32 %v538, %v539
  %v541 = vsel %vm83, %v337, 0.0
  %v542 = vadd.f32 %v540, %v541
  %v543 = vsel %vm83, %v353, 0.0
  %v544 = vadd.f32 %v542, %v543
  %v545 = vsel %vm83, %v369, 0.0
  %v546 = vadd.f32 %v544, %v545
  %v547 = vsel %vm83, %v385, 0.0
  %v548 = vadd.f32 %v546, %v547
  %v549 = vsel %vm83, %v401, 0.0
  %v550 = vadd.f32 %v548, %v549
  %v551 = vsel %vm83, %v417, 0.0
  %v552 = vadd.f32 %v550, %v551
  %v553 = vsel %vm83, %v433, 0.0
  %v554 = vadd.f32 %v552, %v553
  %v555 = vsel %vm83, %v307, 0.0
  %v556 = vsel %vm83, %v323, 0.0
  %v557 = vadd.f32 %v555, %v556
  %v558 = vsel %vm83, %v339, 0.0
  %v559 = vadd.f32 %v557, %v558
  %v560 = vsel %vm83, %v355, 0.0
  %v561 = vadd.f32 %v559, %v560
  %v562 = vsel %vm83, %v371, 0.0
  %v563 = vadd.f32 %v561, %v562
  %v564 = vsel %vm83, %v387, 0.0
  %v565 = vadd.f32 %v563, %v564
  %v566 = vsel %vm83, %v403, 0.0
  %v567 = vadd.f32 %v565, %v566
  %v568 = vsel %vm83, %v419, 0.0
  %v569 = vadd.f32 %v567, %v568
  %v570 = vsel %vm83, %v435, 0.0
  %v571 = vadd.f32 %v569, %v570
  %v572 = vrcp.pop %v452
  %v573 = vrcp.pop %v469
  %v574 = vrcp.pop %v486
  %v575 = vrcp.pop %v503
  %v576 = vrcp.pop %v520
  %v577 = vrcp.pop %v537
  %v578 = vrcp.pop %v554
  %v579 = vrcp.pop %v571
  %v580 = vmul.f32 %v293, %v572
  %v581 = vmul.f32 %v295, %v573
  %v582 = vmul.f32 %v297, %v574
  %v583 = vmul.f32 %v299, %v575
  %v584 = vmul.f32 %v301, %v576
  %v585 = vmul.f32 %v303, %v577
  %v586 = vmul.f32 %v305, %v578
  %v587 = vmul.f32 %v307, %v579
  %v588 = vmul.f32 %v309, %v572
  %v589 = vmul.f32 %v311, %v573
  %v590 = vmul.f32 %v313, %v574
  %v591 = vmul.f32 %v315, %v575
  %v592 = vmul.f32 %v317, %v576
  %v593 = vmul.f32 %v319, %v577
  %v594 = vmul.f32 %v321, %v578
  %v595 = vmul.f32 %v323, %v579
  %v596 = vmul.f32 %v325, %v572
  %v597 = vmul.f32 %v327, %v573
  %v598 = vmul.f32 %v329, %v574
  %v599 = vmul.f32 %v331, %v575
  %v600 = vmul.f32 %v333, %v576
  %v601 = vmul.f32 %v335, %v577
  %v602 = vmul.f32 %v337, %v578
  %v603 = vmul.f32 %v339, %v579
  %v604 = vmul.f32 %v341, %v572
  %v605 = vmul.f32 %v343, %v573
  %v606 = vmul.f32 %v345, %v574
  %v607 = vmul.f32 %v347, %v575
  %v608 = vmul.f32 %v349, %v576
  %v609 = vmul.f32 %v351, %v577
  %v610 = vmul.f32 %v353, %v578
  %v611 = vmul.f32 %v355, %v579
  %v612 = vmul.f32 %v357, %v572
  %v613 = vmul.f32 %v359, %v573
  %v614 = vmul.f32 %v361, %v574
  %v615 = vmul.f32 %v363, %v575
  %v616 = vmul.f32 %v365, %v576
  %v617 = vmul.f32 %v367, %v577
  %v618 = vmul.f32 %v369, %v578
  %v619 = vmul.f32 %v371, %v579
  %v620 = vmul.f32 %v373, %v572
  %v621 = vmul.f32 %v375, %v573
  %v622 = vmul.f32 %v377, %v574
  %v623 = vmul.f32 %v379, %v575
  %v624 = vmul.f32 %v381, %v576
  %v625 = vmul.f32 %v383, %v577
  %v626 = vmul.f32 %v385, %v578
  %v627 = vmul.f32 %v387, %v579
  %v628 = vmul.f32 %v389, %v572
  %v629 = vmul.f32 %v391, %v573
  %v630 = vmul.f32 %v393, %v574
  %v631 = vmul.f32 %v395, %v575
  %v632 = vmul.f32 %v397, %v576
  %v633 = vmul.f32 %v399, %v577
  %v634 = vmul.f32 %v401, %v578
  %v635 = vmul.f32 %v403, %v579
  %v636 = vmul.f32 %v405, %v572
  %v637 = vmul.f32 %v407, %v573
  %v638 = vmul.f32 %v409, %v574
  %v639 = vmul.f32 %v411, %v575
  %v640 = vmul.f32 %v413, %v576
  %v641 = vmul.f32 %v415, %v577
  %v642 = vmul.f32 %v417, %v578
  %v643 = vmul.f32 %v419, %v579
  %v644 = vmul.f32 %v421, %v572
  %v645 = vmul.f32 %v423, %v573
  %v646 = vmul.f32 %v425, %v574
  %v647 = vmul.f32 %v427, %v575
  %v648 = vmul.f32 %v429, %v576
  %v649 = vmul.f32 %v431, %v577
  %v650 = vmul.f32 %v433, %v578
  %v651 = vmul.f32 %v435, %v579
  %v652 = vld [vmem:[%s1] sm:$0xff]
  %v653 = vld [vmem:[%s1 + $0x8] sm:$0x1]
  %v654 = vld [vmem:[%s1 + $0x10] sm:$0xff]
  %v655 = vld [vmem:[%s1 + $0x18] sm:$0x1]
  %v658 = vcombine.high %v652, %v652
  %v660 = vunpack.c.l.s4 1966171168
  %v661 = vunpack.c.0.s8 %v660
  %v662 = vlaneseq
  %v663 = vshrl.u32 %v662, 7
  %v664 = vsub.s32 %v661, %v663
  %v665 = vrot.slane %v652, %v664
  %v667 = vunpack.c.l.s4 1966171168
  %v668 = vunpack.c.0.s8 %v667
  %v669 = vlaneseq
  %v670 = vshrl.u32 %v669, 7
  %v671 = vsub.s32 %v668, %v670
  %v672 = vrot.slane %v658, %v671
  %v673 = vcombine.high %v665, %v665
  %v674 = vcombine.high %v672, %v672
  %v676 = vunpack.c.l.s4 1966171168
  %v677 = vunpack.c.0.s8 %v676
  %v678 = vlaneseq
  %v679 = vshrl.u32 %v678, 7
  %v680 = vsub.s32 %v677, %v679
  %v681 = vrot.slane %v665, %v680
  %v683 = vunpack.c.l.s4 1966171168
  %v684 = vunpack.c.0.s8 %v683
  %v685 = vlaneseq
  %v686 = vshrl.u32 %v685, 7
  %v687 = vsub.s32 %v684, %v686
  %v688 = vrot.slane %v672, %v687
  %v690 = vunpack.c.l.s4 1966171168
  %v691 = vunpack.c.0.s8 %v690
  %v692 = vlaneseq
  %v693 = vshrl.u32 %v692, 7
  %v694 = vsub.s32 %v691, %v693
  %v695 = vrot.slane %v673, %v694
  %v697 = vunpack.c.l.s4 1966171168
  %v698 = vunpack.c.0.s8 %v697
  %v699 = vlaneseq
  %v700 = vshrl.u32 %v699, 7
  %v701 = vsub.s32 %v698, %v700
  %v702 = vrot.slane %v674, %v701
  %v703 = vcombine.high %v681, %v681
  %v704 = vcombine.high %v688, %v688
  %v705 = vcombine.high %v695, %v695
  %v706 = vcombine.high %v702, %v702
  %v708 = vunpack.c.l.s4 1966171168
  %v709 = vunpack.c.0.s8 %v708
  %v710 = vlaneseq
  %v711 = vshrl.u32 %v710, 7
  %v712 = vsub.s32 %v709, %v711
  %v713 = vrot.slane %v653, %v712
  %v715 = vunpack.c.l.s4 1966171168
  %v716 = vunpack.c.0.s8 %v715
  %v717 = vlaneseq
  %v718 = vshrl.u32 %v717, 7
  %v719 = vsub.s32 %v716, %v718
  %v720 = vrot.slane %v713, %v719
  %v721 = vlaneseq
  %v722 = vshrl.u32 %v721, 7
  %v723 = vsub.s32 0, %v722
  %v724 = vrot.slane %v681, %v723
  %v725 = vlaneseq
  %v726 = vshrl.u32 %v725, 7
  %v727 = vsub.s32 0, %v726
  %v728 = vrot.slane %v695, %v727
  %v729 = vlaneseq
  %v730 = vshrl.u32 %v729, 7
  %v731 = vsub.s32 0, %v730
  %v732 = vrot.slane %v703, %v731
  %v733 = vlaneseq
  %v734 = vshrl.u32 %v733, 7
  %v735 = vsub.s32 0, %v734
  %v736 = vrot.slane %v705, %v735
  %v737 = vlaneseq
  %v738 = vshrl.u32 %v737, 7
  %v739 = vsub.s32 0, %v738
  %v740 = vrot.slane %v688, %v739
  %v741 = vlaneseq
  %v742 = vshrl.u32 %v741, 7
  %v743 = vsub.s32 0, %v742
  %v744 = vrot.slane %v702, %v743
  %v745 = vlaneseq
  %v746 = vshrl.u32 %v745, 7
  %v747 = vsub.s32 0, %v746
  %v748 = vrot.slane %v704, %v747
  %v749 = vlaneseq
  %v750 = vshrl.u32 %v749, 7
  %v751 = vsub.s32 0, %v750
  %v752 = vrot.slane %v706, %v751
  %v753 = vlaneseq
  %v754 = vshrl.u32 %v753, 7
  %v755 = vsub.s32 0, %v754
  %v756 = vrot.slane %v720, %v755
  %v766 = vmul.f32 %v580, %v724
  %v767 = vmul.f32 %v581, %v724
  %v768 = vmul.f32 %v582, %v724
  %v769 = vmul.f32 %v583, %v724
  %v770 = vmul.f32 %v584, %v724
  %v771 = vmul.f32 %v585, %v724
  %v772 = vmul.f32 %v586, %v724
  %v773 = vmul.f32 %v587, %v724
  %v774 = vmul.f32 %v588, %v728
  %v775 = vmul.f32 %v589, %v728
  %v776 = vmul.f32 %v590, %v728
  %v777 = vmul.f32 %v591, %v728
  %v778 = vmul.f32 %v592, %v728
  %v779 = vmul.f32 %v593, %v728
  %v780 = vmul.f32 %v594, %v728
  %v781 = vmul.f32 %v595, %v728
  %v782 = vmul.f32 %v596, %v732
  %v783 = vmul.f32 %v597, %v732
  %v784 = vmul.f32 %v598, %v732
  %v785 = vmul.f32 %v599, %v732
  %v786 = vmul.f32 %v600, %v732
  %v787 = vmul.f32 %v601, %v732
  %v788 = vmul.f32 %v602, %v732
  %v789 = vmul.f32 %v603, %v732
  %v790 = vmul.f32 %v604, %v736
  %v791 = vmul.f32 %v605, %v736
  %v792 = vmul.f32 %v606, %v736
  %v793 = vmul.f32 %v607, %v736
  %v794 = vmul.f32 %v608, %v736
  %v795 = vmul.f32 %v609, %v736
  %v796 = vmul.f32 %v610, %v736
  %v797 = vmul.f32 %v611, %v736
  %v798 = vmul.f32 %v612, %v740
  %v799 = vmul.f32 %v613, %v740
  %v800 = vmul.f32 %v614, %v740
  %v801 = vmul.f32 %v615, %v740
  %v802 = vmul.f32 %v616, %v740
  %v803 = vmul.f32 %v617, %v740
  %v804 = vmul.f32 %v618, %v740
  %v805 = vmul.f32 %v619, %v740
  %v806 = vmul.f32 %v620, %v744
  %v807 = vmul.f32 %v621, %v744
  %v808 = vmul.f32 %v622, %v744
  %v809 = vmul.f32 %v623, %v744
  %v810 = vmul.f32 %v624, %v744
  %v811 = vmul.f32 %v625, %v744
  %v812 = vmul.f32 %v626, %v744
  %v813 = vmul.f32 %v627, %v744
  %v814 = vmul.f32 %v628, %v748
  %v815 = vmul.f32 %v629, %v748
  %v816 = vmul.f32 %v630, %v748
  %v817 = vmul.f32 %v631, %v748
  %v818 = vmul.f32 %v632, %v748
  %v819 = vmul.f32 %v633, %v748
  %v820 = vmul.f32 %v634, %v748
  %v821 = vmul.f32 %v635, %v748
  %v822 = vmul.f32 %v636, %v752
  %v823 = vmul.f32 %v637, %v752
  %v824 = vmul.f32 %v638, %v752
  %v825 = vmul.f32 %v639, %v752
  %v826 = vmul.f32 %v640, %v752
  %v827 = vmul.f32 %v641, %v752
  %v828 = vmul.f32 %v642, %v752
  %v829 = vmul.f32 %v643, %v752
  %v830 = vmul.f32 %v644, %v756
  %v831 = vmul.f32 %v645, %v756
  %v832 = vmul.f32 %v646, %v756
  %v833 = vmul.f32 %v647, %v756
  %v834 = vmul.f32 %v648, %v756
  %v835 = vmul.f32 %v649, %v756
  %v836 = vmul.f32 %v650, %v756
  %v837 = vmul.f32 %v651, %v756
  %v838 = vsel %vm83, %v766, 0.0
  %v839 = vsel %vm83, %v774, 0.0
  %v840 = vadd.f32 %v838, %v839
  %v841 = vsel %vm83, %v782, 0.0
  %v842 = vadd.f32 %v840, %v841
  %v843 = vsel %vm83, %v790, 0.0
  %v844 = vadd.f32 %v842, %v843
  %v845 = vsel %vm83, %v798, 0.0
  %v846 = vadd.f32 %v844, %v845
  %v847 = vsel %vm83, %v806, 0.0
  %v848 = vadd.f32 %v846, %v847
  %v849 = vsel %vm83, %v814, 0.0
  %v850 = vadd.f32 %v848, %v849
  %v851 = vsel %vm83, %v822, 0.0
  %v852 = vadd.f32 %v850, %v851
  %v853 = vsel %vm83, %v830, 0.0
  %v854 = vadd.f32 %v852, %v853
  %v855 = vsel %vm83, %v767, 0.0
  %v856 = vsel %vm83, %v775, 0.0
  %v857 = vadd.f32 %v855, %v856
  %v858 = vsel %vm83, %v783, 0.0
  %v859 = vadd.f32 %v857, %v858
  %v860 = vsel %vm83, %v791, 0.0
  %v861 = vadd.f32 %v859, %v860
  %v862 = vsel %vm83, %v799, 0.0
  %v863 = vadd.f32 %v861, %v862
  %v864 = vsel %vm83, %v807, 0.0
  %v865 = vadd.f32 %v863, %v864
  %v866 = vsel %vm83, %v815, 0.0
  %v867 = vadd.f32 %v865, %v866
  %v868 = vsel %vm83, %v823, 0.0
  %v869 = vadd.f32 %v867, %v868
  %v870 = vsel %vm83, %v831, 0.0
  %v871 = vadd.f32 %v869, %v870
  %v872 = vsel %vm83, %v768, 0.0
  %v873 = vsel %vm83, %v776, 0.0
  %v874 = vadd.f32 %v872, %v873
  %v875 = vsel %vm83, %v784, 0.0
  %v876 = vadd.f32 %v874, %v875
  %v877 = vsel %vm83, %v792, 0.0
  %v878 = vadd.f32 %v876, %v877
  %v879 = vsel %vm83, %v800, 0.0
  %v880 = vadd.f32 %v878, %v879
  %v881 = vsel %vm83, %v808, 0.0
  %v882 = vadd.f32 %v880, %v881
  %v883 = vsel %vm83, %v816, 0.0
  %v884 = vadd.f32 %v882, %v883
  %v885 = vsel %vm83, %v824, 0.0
  %v886 = vadd.f32 %v884, %v885
  %v887 = vsel %vm83, %v832, 0.0
  %v888 = vadd.f32 %v886, %v887
  %v889 = vsel %vm83, %v769, 0.0
  %v890 = vsel %vm83, %v777, 0.0
  %v891 = vadd.f32 %v889, %v890
  %v892 = vsel %vm83, %v785, 0.0
  %v893 = vadd.f32 %v891, %v892
  %v894 = vsel %vm83, %v793, 0.0
  %v895 = vadd.f32 %v893, %v894
  %v896 = vsel %vm83, %v801, 0.0
  %v897 = vadd.f32 %v895, %v896
  %v898 = vsel %vm83, %v809, 0.0
  %v899 = vadd.f32 %v897, %v898
  %v900 = vsel %vm83, %v817, 0.0
  %v901 = vadd.f32 %v899, %v900
  %v902 = vsel %vm83, %v825, 0.0
  %v903 = vadd.f32 %v901, %v902
  %v904 = vsel %vm83, %v833, 0.0
  %v905 = vadd.f32 %v903, %v904
  %v906 = vsel %vm83, %v770, 0.0
  %v907 = vsel %vm83, %v778, 0.0
  %v908 = vadd.f32 %v906, %v907
  %v909 = vsel %vm83, %v786, 0.0
  %v910 = vadd.f32 %v908, %v909
  %v911 = vsel %vm83, %v794, 0.0
  %v912 = vadd.f32 %v910, %v911
  %v913 = vsel %vm83, %v802, 0.0
  %v914 = vadd.f32 %v912, %v913
  %v915 = vsel %vm83, %v810, 0.0
  %v916 = vadd.f32 %v914, %v915
  %v917 = vsel %vm83, %v818, 0.0
  %v918 = vadd.f32 %v916, %v917
  %v919 = vsel %vm83, %v826, 0.0
  %v920 = vadd.f32 %v918, %v919
  %v921 = vsel %vm83, %v834, 0.0
  %v922 = vadd.f32 %v920, %v921
  %v923 = vsel %vm83, %v771, 0.0
  %v924 = vsel %vm83, %v779, 0.0
  %v925 = vadd.f32 %v923, %v924
  %v926 = vsel %vm83, %v787, 0.0
  %v927 = vadd.f32 %v925, %v926
  %v928 = vsel %vm83, %v795, 0.0
  %v929 = vadd.f32 %v927, %v928
  %v930 = vsel %vm83, %v803, 0.0
  %v931 = vadd.f32 %v929, %v930
  %v932 = vsel %vm83, %v811, 0.0
  %v933 = vadd.f32 %v931, %v932
  %v934 = vsel %vm83, %v819, 0.0
  %v935 = vadd.f32 %v933, %v934
  %v936 = vsel %vm83, %v827, 0.0
  %v937 = vadd.f32 %v935, %v936
  %v938 = vsel %vm83, %v835, 0.0
  %v939 = vadd.f32 %v937, %v938
  %v940 = vsel %vm83, %v772, 0.0
  %v941 = vsel %vm83, %v780, 0.0
  %v942 = vadd.f32 %v940, %v941
  %v943 = vsel %vm83, %v788, 0.0
  %v944 = vadd.f32 %v942, %v943
  %v945 = vsel %vm83, %v796, 0.0
  %v946 = vadd.f32 %v944, %v945
  %v947 = vsel %vm83, %v804, 0.0
  %v948 = vadd.f32 %v946, %v947
  %v949 = vsel %vm83, %v812, 0.0
  %v950 = vadd.f32 %v948, %v949
  %v951 = vsel %vm83, %v820, 0.0
  %v952 = vadd.f32 %v950, %v951
  %v953 = vsel %vm83, %v828, 0.0
  %v954 = vadd.f32 %v952, %v953
  %v955 = vsel %vm83, %v836, 0.0
  %v956 = vadd.f32 %v954, %v955
  %v957 = vsel %vm83, %v773, 0.0
  %v958 = vsel %vm83, %v781, 0.0
  %v959 = vadd.f32 %v957, %v958
  %v960 = vsel %vm83, %v789, 0.0
  %v961 = vadd.f32 %v959, %v960
  %v962 = vsel %vm83, %v797, 0.0
  %v963 = vadd.f32 %v961, %v962
  %v964 = vsel %vm83, %v805, 0.0
  %v965 = vadd.f32 %v963, %v964
  %v966 = vsel %vm83, %v813, 0.0
  %v967 = vadd.f32 %v965, %v966
  %v968 = vsel %vm83, %v821, 0.0
  %v969 = vadd.f32 %v967, %v968
  %v970 = vsel %vm83, %v829, 0.0
  %v971 = vadd.f32 %v969, %v970
  %v972 = vsel %vm83, %v837, 0.0
  %v973 = vadd.f32 %v971, %v972
  %974 = vst.msk [vmem:[%s2] sm:$0xff] %vm83, %v854
  %975 = vst.msk [vmem:[%s2 + $0x8] sm:$0xff] %vm83, %v871
  %976 = vst.msk [vmem:[%s2 + $0x10] sm:$0xff] %vm83, %v888
  %977 = vst.msk [vmem:[%s2 + $0x18] sm:$0xff] %vm83, %v905
  %978 = vst.msk [vmem:[%s2 + $0x20] sm:$0xff] %vm83, %v922
  %979 = vst.msk [vmem:[%s2 + $0x28] sm:$0xff] %vm83, %v939
  %980 = vst.msk [vmem:[%s2 + $0x30] sm:$0xff] %vm83, %v956
  %981 = vst.msk [vmem:[%s2 + $0x38] sm:$0xff] %vm83, %v973
  %v984 = vcombine.high %v654, %v654
  %v986 = vunpack.c.l.s4 1966171168
  %v987 = vunpack.c.0.s8 %v986
  %v988 = vlaneseq
  %v989 = vshrl.u32 %v988, 7
  %v990 = vsub.s32 %v987, %v989
  %v991 = vrot.slane %v654, %v990
  %v993 = vunpack.c.l.s4 1966171168
  %v994 = vunpack.c.0.s8 %v993
  %v995 = vlaneseq
  %v996 = vshrl.u32 %v995, 7
  %v997 = vsub.s32 %v994, %v996
  %v998 = vrot.slane %v984, %v997
  %v999 = vcombine.high %v991, %v991
  %v1000 = vcombine.high %v998, %v998
  %v1002 = vunpack.c.l.s4 1966171168
  %v1003 = vunpack.c.0.s8 %v1002
  %v1004 = vlaneseq
  %v1005 = vshrl.u32 %v1004, 7
  %v1006 = vsub.s32 %v1003, %v1005
  %v1007 = vrot.slane %v991, %v1006
  %v1009 = vunpack.c.l.s4 1966171168
  %v1010 = vunpack.c.0.s8 %v1009
  %v1011 = vlaneseq
  %v1012 = vshrl.u32 %v1011, 7
  %v1013 = vsub.s32 %v1010, %v1012
  %v1014 = vrot.slane %v998, %v1013
  %v1016 = vunpack.c.l.s4 1966171168
  %v1017 = vunpack.c.0.s8 %v1016
  %v1018 = vlaneseq
  %v1019 = vshrl.u32 %v1018, 7
  %v1020 = vsub.s32 %v1017, %v1019
  %v1021 = vrot.slane %v999, %v1020
  %v1023 = vunpack.c.l.s4 1966171168
  %v1024 = vunpack.c.0.s8 %v1023
  %v1025 = vlaneseq
  %v1026 = vshrl.u32 %v1025, 7
  %v1027 = vsub.s32 %v1024, %v1026
  %v1028 = vrot.slane %v1000, %v1027
  %v1029 = vcombine.high %v1007, %v1007
  %v1030 = vcombine.high %v1014, %v1014
  %v1031 = vcombine.high %v1021, %v1021
  %v1032 = vcombine.high %v1028, %v1028
  %v1034 = vunpack.c.l.s4 1966171168
  %v1035 = vunpack.c.0.s8 %v1034
  %v1036 = vlaneseq
  %v1037 = vshrl.u32 %v1036, 7
  %v1038 = vsub.s32 %v1035, %v1037
  %v1039 = vrot.slane %v655, %v1038
  %v1041 = vunpack.c.l.s4 1966171168
  %v1042 = vunpack.c.0.s8 %v1041
  %v1043 = vlaneseq
  %v1044 = vshrl.u32 %v1043, 7
  %v1045 = vsub.s32 %v1042, %v1044
  %v1046 = vrot.slane %v1039, %v1045
  %v1047 = vlaneseq
  %v1048 = vshrl.u32 %v1047, 7
  %v1049 = vsub.s32 0, %v1048
  %v1050 = vrot.slane %v1007, %v1049
  %v1051 = vlaneseq
  %v1052 = vshrl.u32 %v1051, 7
  %v1053 = vsub.s32 0, %v1052
  %v1054 = vrot.slane %v1021, %v1053
  %v1055 = vlaneseq
  %v1056 = vshrl.u32 %v1055, 7
  %v1057 = vsub.s32 0, %v1056
  %v1058 = vrot.slane %v1029, %v1057
  %v1059 = vlaneseq
  %v1060 = vshrl.u32 %v1059, 7
  %v1061 = vsub.s32 0, %v1060
  %v1062 = vrot.slane %v1031, %v1061
  %v1063 = vlaneseq
  %v1064 = vshrl.u32 %v1063, 7
  %v1065 = vsub.s32 0, %v1064
  %v1066 = vrot.slane %v1014, %v1065
  %v1067 = vlaneseq
  %v1068 = vshrl.u32 %v1067, 7
  %v1069 = vsub.s32 0, %v1068
  %v1070 = vrot.slane %v1028, %v1069
  %v1071 = vlaneseq
  %v1072 = vshrl.u32 %v1071, 7
  %v1073 = vsub.s32 0, %v1072
  %v1074 = vrot.slane %v1030, %v1073
  %v1075 = vlaneseq
  %v1076 = vshrl.u32 %v1075, 7
  %v1077 = vsub.s32 0, %v1076
  %v1078 = vrot.slane %v1032, %v1077
  %v1079 = vlaneseq
  %v1080 = vshrl.u32 %v1079, 7
  %v1081 = vsub.s32 0, %v1080
  %v1082 = vrot.slane %v1046, %v1081
  %v1092 = vmul.f32 %v580, %v1050
  %v1093 = vmul.f32 %v581, %v1050
  %v1094 = vmul.f32 %v582, %v1050
  %v1095 = vmul.f32 %v583, %v1050
  %v1096 = vmul.f32 %v584, %v1050
  %v1097 = vmul.f32 %v585, %v1050
  %v1098 = vmul.f32 %v586, %v1050
  %v1099 = vmul.f32 %v587, %v1050
  %v1100 = vmul.f32 %v588, %v1054
  %v1101 = vmul.f32 %v589, %v1054
  %v1102 = vmul.f32 %v590, %v1054
  %v1103 = vmul.f32 %v591, %v1054
  %v1104 = vmul.f32 %v592, %v1054
  %v1105 = vmul.f32 %v593, %v1054
  %v1106 = vmul.f32 %v594, %v1054
  %v1107 = vmul.f32 %v595, %v1054
  %v1108 = vmul.f32 %v596, %v1058
  %v1109 = vmul.f32 %v597, %v1058
  %v1110 = vmul.f32 %v598, %v1058
  %v1111 = vmul.f32 %v599, %v1058
  %v1112 = vmul.f32 %v600, %v1058
  %v1113 = vmul.f32 %v601, %v1058
  %v1114 = vmul.f32 %v602, %v1058
  %v1115 = vmul.f32 %v603, %v1058
  %v1116 = vmul.f32 %v604, %v1062
  %v1117 = vmul.f32 %v605, %v1062
  %v1118 = vmul.f32 %v606, %v1062
  %v1119 = vmul.f32 %v607, %v1062
  %v1120 = vmul.f32 %v608, %v1062
  %v1121 = vmul.f32 %v609, %v1062
  %v1122 = vmul.f32 %v610, %v1062
  %v1123 = vmul.f32 %v611, %v1062
  %v1124 = vmul.f32 %v612, %v1066
  %v1125 = vmul.f32 %v613, %v1066
  %v1126 = vmul.f32 %v614, %v1066
  %v1127 = vmul.f32 %v615, %v1066
  %v1128 = vmul.f32 %v616, %v1066
  %v1129 = vmul.f32 %v617, %v1066
  %v1130 = vmul.f32 %v618, %v1066
  %v1131 = vmul.f32 %v619, %v1066
  %v1132 = vmul.f32 %v620, %v1070
  %v1133 = vmul.f32 %v621, %v1070
  %v1134 = vmul.f32 %v622, %v1070
  %v1135 = vmul.f32 %v623, %v1070
  %v1136 = vmul.f32 %v624, %v1070
  %v1137 = vmul.f32 %v625, %v1070
  %v1138 = vmul.f32 %v626, %v1070
  %v1139 = vmul.f32 %v627, %v1070
  %v1140 = vmul.f32 %v628, %v1074
  %v1141 = vmul.f32 %v629, %v1074
  %v1142 = vmul.f32 %v630, %v1074
  %v1143 = vmul.f32 %v631, %v1074
  %v1144 = vmul.f32 %v632, %v1074
  %v1145 = vmul.f32 %v633, %v1074
  %v1146 = vmul.f32 %v634, %v1074
  %v1147 = vmul.f32 %v635, %v1074
  %v1148 = vmul.f32 %v636, %v1078
  %v1149 = vmul.f32 %v637, %v1078
  %v1150 = vmul.f32 %v638, %v1078
  %v1151 = vmul.f32 %v639, %v1078
  %v1152 = vmul.f32 %v640, %v1078
  %v1153 = vmul.f32 %v641, %v1078
  %v1154 = vmul.f32 %v642, %v1078
  %v1155 = vmul.f32 %v643, %v1078
  %v1156 = vmul.f32 %v644, %v1082
  %v1157 = vmul.f32 %v645, %v1082
  %v1158 = vmul.f32 %v646, %v1082
  %v1159 = vmul.f32 %v647, %v1082
  %v1160 = vmul.f32 %v648, %v1082
  %v1161 = vmul.f32 %v649, %v1082
  %v1162 = vmul.f32 %v650, %v1082
  %v1163 = vmul.f32 %v651, %v1082
  %v1164 = vsel %vm83, %v1092, 0.0
  %v1165 = vsel %vm83, %v1100, 0.0
  %v1166 = vadd.f32 %v1164, %v1165
  %v1167 = vsel %vm83, %v1108, 0.0
  %v1168 = vadd.f32 %v1166, %v1167
  %v1169 = vsel %vm83, %v1116, 0.0
  %v1170 = vadd.f32 %v1168, %v1169
  %v1171 = vsel %vm83, %v1124, 0.0
  %v1172 = vadd.f32 %v1170, %v1171
  %v1173 = vsel %vm83, %v1132, 0.0
  %v1174 = vadd.f32 %v1172, %v1173
  %v1175 = vsel %vm83, %v1140, 0.0
  %v1176 = vadd.f32 %v1174, %v1175
  %v1177 = vsel %vm83, %v1148, 0.0
  %v1178 = vadd.f32 %v1176, %v1177
  %v1179 = vsel %vm83, %v1156, 0.0
  %v1180 = vadd.f32 %v1178, %v1179
  %v1181 = vsel %vm83, %v1093, 0.0
  %v1182 = vsel %vm83, %v1101, 0.0
  %v1183 = vadd.f32 %v1181, %v1182
  %v1184 = vsel %vm83, %v1109, 0.0
  %v1185 = vadd.f32 %v1183, %v1184
  %v1186 = vsel %vm83, %v1117, 0.0
  %v1187 = vadd.f32 %v1185, %v1186
  %v1188 = vsel %vm83, %v1125, 0.0
  %v1189 = vadd.f32 %v1187, %v1188
  %v1190 = vsel %vm83, %v1133, 0.0
  %v1191 = vadd.f32 %v1189, %v1190
  %v1192 = vsel %vm83, %v1141, 0.0
  %v1193 = vadd.f32 %v1191, %v1192
  %v1194 = vsel %vm83, %v1149, 0.0
  %v1195 = vadd.f32 %v1193, %v1194
  %v1196 = vsel %vm83, %v1157, 0.0
  %v1197 = vadd.f32 %v1195, %v1196
  %v1198 = vsel %vm83, %v1094, 0.0
  %v1199 = vsel %vm83, %v1102, 0.0
  %v1200 = vadd.f32 %v1198, %v1199
  %v1201 = vsel %vm83, %v1110, 0.0
  %v1202 = vadd.f32 %v1200, %v1201
  %v1203 = vsel %vm83, %v1118, 0.0
  %v1204 = vadd.f32 %v1202, %v1203
  %v1205 = vsel %vm83, %v1126, 0.0
  %v1206 = vadd.f32 %v1204, %v1205
  %v1207 = vsel %vm83, %v1134, 0.0
  %v1208 = vadd.f32 %v1206, %v1207
  %v1209 = vsel %vm83, %v1142, 0.0
  %v1210 = vadd.f32 %v1208, %v1209
  %v1211 = vsel %vm83, %v1150, 0.0
  %v1212 = vadd.f32 %v1210, %v1211
  %v1213 = vsel %vm83, %v1158, 0.0
  %v1214 = vadd.f32 %v1212, %v1213
  %v1215 = vsel %vm83, %v1095, 0.0
  %v1216 = vsel %vm83, %v1103, 0.0
  %v1217 = vadd.f32 %v1215, %v1216
  %v1218 = vsel %vm83, %v1111, 0.0
  %v1219 = vadd.f32 %v1217, %v1218
  %v1220 = vsel %vm83, %v1119, 0.0
  %v1221 = vadd.f32 %v1219, %v1220
  %v1222 = vsel %vm83, %v1127, 0.0
  %v1223 = vadd.f32 %v1221, %v1222
  %v1224 = vsel %vm83, %v1135, 0.0
  %v1225 = vadd.f32 %v1223, %v1224
  %v1226 = vsel %vm83, %v1143, 0.0
  %v1227 = vadd.f32 %v1225, %v1226
  %v1228 = vsel %vm83, %v1151, 0.0
  %v1229 = vadd.f32 %v1227, %v1228
  %v1230 = vsel %vm83, %v1159, 0.0
  %v1231 = vadd.f32 %v1229, %v1230
  %v1232 = vsel %vm83, %v1096, 0.0
  %v1233 = vsel %vm83, %v1104, 0.0
  %v1234 = vadd.f32 %v1232, %v1233
  %v1235 = vsel %vm83, %v1112, 0.0
  %v1236 = vadd.f32 %v1234, %v1235
  %v1237 = vsel %vm83, %v1120, 0.0
  %v1238 = vadd.f32 %v1236, %v1237
  %v1239 = vsel %vm83, %v1128, 0.0
  %v1240 = vadd.f32 %v1238, %v1239
  %v1241 = vsel %vm83, %v1136, 0.0
  %v1242 = vadd.f32 %v1240, %v1241
  %v1243 = vsel %vm83, %v1144, 0.0
  %v1244 = vadd.f32 %v1242, %v1243
  %v1245 = vsel %vm83, %v1152, 0.0
  %v1246 = vadd.f32 %v1244, %v1245
  %v1247 = vsel %vm83, %v1160, 0.0
  %v1248 = vadd.f32 %v1246, %v1247
  %v1249 = vsel %vm83, %v1097, 0.0
  %v1250 = vsel %vm83, %v1105, 0.0
  %v1251 = vadd.f32 %v1249, %v1250
  %v1252 = vsel %vm83, %v1113, 0.0
  %v1253 = vadd.f32 %v1251, %v1252
  %v1254 = vsel %vm83, %v1121, 0.0
  %v1255 = vadd.f32 %v1253, %v1254
  %v1256 = vsel %vm83, %v1129, 0.0
  %v1257 = vadd.f32 %v1255, %v1256
  %v1258 = vsel %vm83, %v1137, 0.0
  %v1259 = vadd.f32 %v1257, %v1258
  %v1260 = vsel %vm83, %v1145, 0.0
  %v1261 = vadd.f32 %v1259, %v1260
  %v1262 = vsel %vm83, %v1153, 0.0
  %v1263 = vadd.f32 %v1261, %v1262
  %v1264 = vsel %vm83, %v1161, 0.0
  %v1265 = vadd.f32 %v1263, %v1264
  %v1266 = vsel %vm83, %v1098, 0.0
  %v1267 = vsel %vm83, %v1106, 0.0
  %v1268 = vadd.f32 %v1266, %v1267
  %v1269 = vsel %vm83, %v1114, 0.0
  %v1270 = vadd.f32 %v1268, %v1269
  %v1271 = vsel %vm83, %v1122, 0.0
  %v1272 = vadd.f32 %v1270, %v1271
  %v1273 = vsel %vm83, %v1130, 0.0
  %v1274 = vadd.f32 %v1272, %v1273
  %v1275 = vsel %vm83, %v1138, 0.0
  %v1276 = vadd.f32 %v1274, %v1275
  %v1277 = vsel %vm83, %v1146, 0.0
  %v1278 = vadd.f32 %v1276, %v1277
  %v1279 = vsel %vm83, %v1154, 0.0
  %v1280 = vadd.f32 %v1278, %v1279
  %v1281 = vsel %vm83, %v1162, 0.0
  %v1282 = vadd.f32 %v1280, %v1281
  %v1283 = vsel %vm83, %v1099, 0.0
  %v1284 = vsel %vm83, %v1107, 0.0
  %v1285 = vadd.f32 %v1283, %v1284
  %v1286 = vsel %vm83, %v1115, 0.0
  %v1287 = vadd.f32 %v1285, %v1286
  %v1288 = vsel %vm83, %v1123, 0.0
  %v1289 = vadd.f32 %v1287, %v1288
  %v1290 = vsel %vm83, %v1131, 0.0
  %v1291 = vadd.f32 %v1289, %v1290
  %v1292 = vsel %vm83, %v1139, 0.0
  %v1293 = vadd.f32 %v1291, %v1292
  %v1294 = vsel %vm83, %v1147, 0.0
  %v1295 = vadd.f32 %v1293, %v1294
  %v1296 = vsel %vm83, %v1155, 0.0
  %v1297 = vadd.f32 %v1295, %v1296
  %v1298 = vsel %vm83, %v1163, 0.0
  %v1299 = vadd.f32 %v1297, %v1298
  %s1300 = scalar_lea.vmem %s2, 64
  %1301 = vst.msk [vmem:[%s1300] sm:$0xff] %vm83, %v1180
  %1302 = vst.msk [vmem:[%s1300 + $0x8] sm:$0xff] %vm83, %v1197
  %1303 = vst.msk [vmem:[%s1300 + $0x10] sm:$0xff] %vm83, %v1214
  %1304 = vst.msk [vmem:[%s1300 + $0x18] sm:$0xff] %vm83, %v1231
  %1305 = vst.msk [vmem:[%s1300 + $0x20] sm:$0xff] %vm83, %v1248
  %1306 = vst.msk [vmem:[%s1300 + $0x28] sm:$0xff] %vm83, %v1265
  %1307 = vst.msk [vmem:[%s1300 + $0x30] sm:$0xff] %vm83, %v1282
  %1308 = vst.msk [vmem:[%s1300 + $0x38] sm:$0xff] %vm83, %v1299
  // Predicated region
  $region10: #{mask_raft_forward.11} parent=0 // pred_check
    _
  $region11: #{mask_raft_forward.11} parent=0 // pred_check_branch
    %1310 = sbr.rel (0) target = $region13
  $region12: #{mask_raft_forward.11} parent=0 // pred_region
    _
  $region13: #{mask_raft_forward.11} parent=0 // pred_fallthru
    _
  // Predicated region
  $region14: #{mask_raft_forward.11} parent=0 // pred_check
    _
  $region15: #{mask_raft_forward.11} parent=0 // pred_check_branch
    %1312 = sbr.rel (0) target = $region17
  $region16: #{mask_raft_forward.11} parent=0 // pred_region
    _
  $region17: #{mask_raft_forward.11} parent=0 // pred_fallthru
    _

</llo_original>
